<compile_context>
chip_gen: v7x
topology: tpu7x:2x2x1
jax: 0.10.0
libtpu: 0.0.40
codegen_flags: <defaults>
</compile_context>

<pallas_src>
import math

import jax
import jax.numpy as jnp
from jax.experimental import pallas as pl
from jax.experimental.pallas import tpu as pltpu

# ----- small-scale config (analog of d_model=512, nhead=8, num_layers=4 ViT) -----
D_MODEL = 32
N_HEAD = 4
N_LAYERS = 2
NUM_CLASSES = 3
IMG = 16
PATCH = 8
CHANNELS = 3
BATCH = 2

N_PATCHES = (IMG // PATCH) ** 2          # 4
SEQ = N_PATCHES + 1                      # 5 (CLS + patches)
S_PAD = 8                                # sequence padded to one full sublane tile
D_HEAD = D_MODEL // N_HEAD               # 8
D_FF = 4 * D_MODEL                       # 128 (intermediate size)
CPP = CHANNELS * PATCH * PATCH           # 192
HEAD_PAD = 128                           # fused head output padded to a full lane width
LN_EPS = 1e-12                           # ViTConfig default layer_norm_eps

# TODO(synk): when scaling to the real config (d_model=512, 4 layers, big batch),
# re-derive VMEM residency (v7x scoped VMEM is 32 MiB) and switch weights to
# per-layer BlockSpecs instead of whole-array VMEM inputs.


def _layernorm(x, w, b):
    mu = jnp.mean(x, axis=-1, keepdims=True)
    var = jnp.mean((x - mu) ** 2, axis=-1, keepdims=True)
    return (x - mu) * jax.lax.rsqrt(var + LN_EPS) * w + b


def _gelu_exact(x):
    # exact (erf) GELU, matching HF "gelu" activation
    return 0.5 * x * (1.0 + jax.lax.erf(x * 0.7071067811865476))


def vit_kernel(x_ref, kmask_ref,
               ln1w_ref, ln1b_ref, qkvw_ref, qkvb_ref, aow_ref, aob_ref,
               ln2w_ref, ln2b_ref, w1_ref, b1_ref, w2_ref, b2_ref,
               flnw_ref, flnb_ref, headw_ref, headb_ref,
               out_ref):
    """One image per grid step: x_ref is the (S_PAD, D) token block of this sample."""
    S, D, H, Dh, L = S_PAD, D_MODEL, N_HEAD, D_HEAD, N_LAYERS
    scale = 1.0 / math.sqrt(Dh)

    x = x_ref[...]                       # (S, D) tokens (rows >= SEQ are padding)
    kbias = kmask_ref[...]               # (1, S): 0 for valid keys, -1e30 for padding

    dn_qkT = (((1,), (1,)), ((), ()))    # contract last dims => q . k^T, no transpose

    for l in range(L):
        # hoist per-layer parameter loads once (JAX does not CSE re-slices across unroll)
        ln1w = ln1w_ref[l:l + 1, :]; ln1b = ln1b_ref[l:l + 1, :]
        qkvw = qkvw_ref[l];          qkvb = qkvb_ref[l:l + 1, :]
        aow  = aow_ref[l];           aob  = aob_ref[l:l + 1, :]
        ln2w = ln2w_ref[l:l + 1, :]; ln2b = ln2b_ref[l:l + 1, :]
        w1   = w1_ref[l];            b1   = b1_ref[l:l + 1, :]
        w2   = w2_ref[l];            b2   = b2_ref[l:l + 1, :]

        # ---------- multi-head self-attention (pre-LayerNorm) ----------
        h_in = _layernorm(x, ln1w, ln1b)
        qkv = jnp.dot(h_in, qkvw, preferred_element_type=jnp.float32) + qkvb  # (S, 3D)
        q = qkv[:, 0 * D:1 * D]
        k = qkv[:, 1 * D:2 * D]
        v = qkv[:, 2 * D:3 * D]

        attn = None
        for hh in range(H):
            qh = q[:, hh * Dh:(hh + 1) * Dh]
            kh = k[:, hh * Dh:(hh + 1) * Dh]
            vh = v[:, hh * Dh:(hh + 1) * Dh]
            sc = jax.lax.dot_general(qh, kh, dn_qkT,
                                     preferred_element_type=jnp.float32) * scale
            sc = sc + kbias                      # mask padded key positions
            sc = sc - jnp.max(sc, axis=-1, keepdims=True)
            p = jnp.exp(sc)
            p = p * pl.reciprocal(jnp.sum(p, axis=-1, keepdims=True), approx=True)
            ctx = jnp.dot(p, vh, preferred_element_type=jnp.float32)          # (S, Dh)
            # fold the output projection per head (aligned 8-row weight slab),
            # accumulating instead of lane-concatenating head outputs
            part = jnp.dot(ctx, aow[hh * Dh:(hh + 1) * Dh, :],
                           preferred_element_type=jnp.float32)                # (S, D)
            attn = part if attn is None else attn + part
        x = x + attn + aob

        # ---------- MLP block (pre-LayerNorm) ----------
        h2 = _layernorm(x, ln2w, ln2b)
        m = jnp.dot(h2, w1, preferred_element_type=jnp.float32) + b1
        m = _gelu_exact(m)
        m = jnp.dot(m, w2, preferred_element_type=jnp.float32) + b2
        x = x + m

    # --- CLS token (row 0 of this sample), final LayerNorm, fused lane-dense heads ---
    cls_tok = _layernorm(x[0:1, :], flnw_ref[...], flnb_ref[...])             # (1, D)
    heads = jnp.dot(cls_tok, headw_ref[...],
                    preferred_element_type=jnp.float32) + headb_ref[...]      # (1, 128)
    out_ref[...] = jnp.broadcast_to(heads, (S_PAD, HEAD_PAD))


def init_params():
    """Deterministic synthetic parameters (shapes implied by ViTModel + 3 heads)."""
    keys = iter(jax.random.split(jax.random.PRNGKey(42), 16))

    def w(shape):
        return (0.02 * jax.random.normal(next(keys), shape)).astype(jnp.float32)

    D, L = D_MODEL, N_LAYERS
    params = (
        w((CPP, D)),                     # patch projection weight (conv reshaped)
        jnp.zeros((1, D), jnp.float32),  # patch projection bias
        w((1, D)),                       # CLS token
        w((SEQ, D)),                     # position embeddings
        jnp.ones((L, D), jnp.float32),   # LN-before weight
        jnp.zeros((L, D), jnp.float32),  # LN-before bias
        w((L, D, 3 * D)),                # fused QKV weights
        jnp.zeros((L, 3 * D), jnp.float32),
        w((L, D, D)),                    # attention output proj
        jnp.zeros((L, D), jnp.float32),
        jnp.ones((L, D), jnp.float32),   # LN-after weight
        jnp.zeros((L, D), jnp.float32),  # LN-after bias
        w((L, D, D_FF)),                 # MLP intermediate
        jnp.zeros((L, D_FF), jnp.float32),
        w((L, D_FF, D)),                 # MLP output
        jnp.zeros((L, D), jnp.float32),
        jnp.ones((1, D), jnp.float32),   # final LN weight
        jnp.zeros((1, D), jnp.float32),  # final LN bias
        w((D, 1)),                       # fc_heat_flux
        jnp.zeros((1, 1), jnp.float32),
        w((D, 1)),                       # fc_heat_transfer_coefficient
        jnp.zeros((1, 1), jnp.float32),
        w((D, NUM_CLASSES)),             # fc_boiling_regime
        jnp.zeros((1, NUM_CLASSES), jnp.float32),
    )
    return params


@jax.jit
def transformer_forward(x, params):
    (pw, pb, cls, pos, ln1w, ln1b, qkvw, qkvb, aow, aob, ln2w, ln2b,
     w1, b1, w2, b2, flnw, flnb, hfw, hfb, htcw, htcb, brw, brb) = params

    B, C, Himg, Wimg = x.shape
    hp, wp = Himg // PATCH, Wimg // PATCH

    # --- glue (outside the kernel): patchify + patch-embed + CLS + pos, pad SEQ->8 ---
    patches = x.reshape(B, C, hp, PATCH, wp, PATCH)
    patches = patches.transpose(0, 2, 4, 1, 3, 5).reshape(B, hp * wp, CPP)
    emb = jnp.einsum('bnc,cd->bnd', patches, pw) + pb                    # (B, N, D)
    cls_b = jnp.broadcast_to(cls[None], (B, 1, D_MODEL))
    tokens = jnp.concatenate([cls_b, emb], axis=1) + pos[None]           # (B, SEQ, D)
    tokens = jnp.pad(tokens, ((0, 0), (0, S_PAD - SEQ), (0, 0)))         # (B, 8, D)
    x0 = tokens.reshape(B * S_PAD, D_MODEL)

    # additive key mask: 0 for real tokens, -1e30 for the padded positions
    kmask = jnp.where(jnp.arange(S_PAD) < SEQ, 0.0, -1e30)
    kmask = kmask.astype(jnp.float32).reshape(1, S_PAD)

    # fuse the 3 heads into one lane-dense (D, 128) projection
    headw = jnp.zeros((D_MODEL, HEAD_PAD), jnp.float32)
    headw = headw.at[:, 0:1].set(hfw).at[:, 1:2].set(htcw)
    headw = headw.at[:, 2:2 + NUM_CLASSES].set(brw)
    headb = jnp.zeros((1, HEAD_PAD), jnp.float32)
    headb = headb.at[:, 0:1].set(hfb).at[:, 1:2].set(htcb)
    headb = headb.at[:, 2:2 + NUM_CLASSES].set(brb)

    vmem = pl.BlockSpec(memory_space=pltpu.MemorySpace.VMEM)
    fused = pl.pallas_call(
        vit_kernel,
        out_shape=jax.ShapeDtypeStruct((B * S_PAD, HEAD_PAD), jnp.float32),
        grid=(B,),
        in_specs=[
            pl.BlockSpec((S_PAD, D_MODEL), lambda i: (i, 0)),   # per-sample token block
            vmem,                                               # key mask
            vmem, vmem, vmem, vmem, vmem, vmem,                 # ln1w ln1b qkvw qkvb aow aob
            vmem, vmem, vmem, vmem, vmem, vmem,                 # ln2w ln2b w1 b1 w2 b2
            vmem, vmem,                                         # final LN
            vmem, vmem,                                         # fused head weight/bias
        ],
        out_specs=pl.BlockSpec((S_PAD, HEAD_PAD), lambda i: (i, 0)),
        compiler_params=pltpu.CompilerParams(
            dimension_semantics=("parallel",)),
    )(x0, kmask, ln1w, ln1b, qkvw, qkvb, aow, aob, ln2w, ln2b,
      w1, b1, w2, b2, flnw, flnb, headw, headb)

    heads = fused.reshape(B, S_PAD, HEAD_PAD)[:, 0, :]                   # (B, 128)
    heat_flux = heads[:, 0]
    heat_transfer_coefficient = heads[:, 1]
    boiling_regime = heads[:, 2:2 + NUM_CLASSES]
    # PyTorch .squeeze() on (B,1) -> (B,) (B>1 here)
    return heat_flux, heat_transfer_coefficient, boiling_regime


if __name__ == "__main__":
    params = init_params()
    x = jax.random.normal(jax.random.PRNGKey(0),
                          (BATCH, CHANNELS, IMG, IMG), dtype=jnp.float32)
    heat_flux, heat_transfer_coefficient, boiling_regime = transformer_forward(x, params)
    jax.block_until_ready((heat_flux, heat_transfer_coefficient, boiling_regime))
    assert heat_flux.shape == (BATCH,)
    assert heat_transfer_coefficient.shape == (BATCH,)
    assert boiling_regime.shape == (BATCH, NUM_CLASSES)
    print("KERNEL_OK")
</pallas_src>

<mosaic_0001>
module attributes {stable_mosaic.version = 11 : i64} {
  func.func @vit_kernel(%arg0: i32, %arg1: memref<8x32xf32, #tpu.memory_space<vmem>>, %arg2: memref<1x8xf32, #tpu.memory_space<vmem>>, %arg3: memref<2x32xf32, #tpu.memory_space<vmem>>, %arg4: memref<2x32xf32, #tpu.memory_space<vmem>>, %arg5: memref<2x32x96xf32, #tpu.memory_space<vmem>>, %arg6: memref<2x96xf32, #tpu.memory_space<vmem>>, %arg7: memref<2x32x32xf32, #tpu.memory_space<vmem>>, %arg8: memref<2x32xf32, #tpu.memory_space<vmem>>, %arg9: memref<2x32xf32, #tpu.memory_space<vmem>>, %arg10: memref<2x32xf32, #tpu.memory_space<vmem>>, %arg11: memref<2x32x128xf32, #tpu.memory_space<vmem>>, %arg12: memref<2x128xf32, #tpu.memory_space<vmem>>, %arg13: memref<2x128x32xf32, #tpu.memory_space<vmem>>, %arg14: memref<2x32xf32, #tpu.memory_space<vmem>>, %arg15: memref<1x32xf32, #tpu.memory_space<vmem>>, %arg16: memref<1x32xf32, #tpu.memory_space<vmem>>, %arg17: memref<32x128xf32, #tpu.memory_space<vmem>>, %arg18: memref<1x128xf32, #tpu.memory_space<vmem>>, %arg19: memref<8x128xf32, #tpu.memory_space<vmem>>) attributes {dimension_semantics = [#tpu.dimension_semantics<parallel>], iteration_bounds = array<i64: 2>, scalar_prefetch = 0 : i64, scratch_operands = 0 : i64, tpu.core_type = #tpu.core_type<tc>, window_params = [{transform_indices = @transform_0, window_bounds = array<i64: 8, 32>}, {pipeline_mode = #tpu.pipeline_mode<synchronous>, transform_indices = @transform_1, window_bounds = array<i64: 1, 8>}, {pipeline_mode = #tpu.pipeline_mode<synchronous>, transform_indices = @transform_2, window_bounds = array<i64: 2, 32>}, {pipeline_mode = #tpu.pipeline_mode<synchronous>, transform_indices = @transform_3, window_bounds = array<i64: 2, 32>}, {pipeline_mode = #tpu.pipeline_mode<synchronous>, transform_indices = @transform_4, window_bounds = array<i64: 2, 32, 96>}, {pipeline_mode = #tpu.pipeline_mode<synchronous>, transform_indices = @transform_5, window_bounds = array<i64: 2, 96>}, {pipeline_mode = #tpu.pipeline_mode<synchronous>, transform_indices = @transform_6, window_bounds = array<i64: 2, 32, 32>}, {pipeline_mode = #tpu.pipeline_mode<synchronous>, transform_indices = @transform_7, window_bounds = array<i64: 2, 32>}, {pipeline_mode = #tpu.pipeline_mode<synchronous>, transform_indices = @transform_8, window_bounds = array<i64: 2, 32>}, {pipeline_mode = #tpu.pipeline_mode<synchronous>, transform_indices = @transform_9, window_bounds = array<i64: 2, 32>}, {pipeline_mode = #tpu.pipeline_mode<synchronous>, transform_indices = @transform_10, window_bounds = array<i64: 2, 32, 128>}, {pipeline_mode = #tpu.pipeline_mode<synchronous>, transform_indices = @transform_11, window_bounds = array<i64: 2, 128>}, {pipeline_mode = #tpu.pipeline_mode<synchronous>, transform_indices = @transform_12, window_bounds = array<i64: 2, 128, 32>}, {pipeline_mode = #tpu.pipeline_mode<synchronous>, transform_indices = @transform_13, window_bounds = array<i64: 2, 32>}, {pipeline_mode = #tpu.pipeline_mode<synchronous>, transform_indices = @transform_14, window_bounds = array<i64: 1, 32>}, {pipeline_mode = #tpu.pipeline_mode<synchronous>, transform_indices = @transform_15, window_bounds = array<i64: 1, 32>}, {pipeline_mode = #tpu.pipeline_mode<synchronous>, transform_indices = @transform_16, window_bounds = array<i64: 32, 128>}, {pipeline_mode = #tpu.pipeline_mode<synchronous>, transform_indices = @transform_17, window_bounds = array<i64: 1, 128>}, {transform_indices = @transform_18, window_bounds = array<i64: 8, 128>}]} {
    %c0 = arith.constant 0 : index
    %c0_0 = arith.constant 0 : index
    %0 = vector.load %arg1[%c0, %c0_0] : memref<8x32xf32, #tpu.memory_space<vmem>>, vector<8x32xf32>
    %c0_1 = arith.constant 0 : index
    %c0_2 = arith.constant 0 : index
    %1 = vector.load %arg2[%c0_1, %c0_2] : memref<1x8xf32, #tpu.memory_space<vmem>>, vector<1x8xf32>
    %c0_3 = arith.constant 0 : index
    %c0_4 = arith.constant 0 : index
    %2 = vector.load %arg3[%c0_3, %c0_4] : memref<2x32xf32, #tpu.memory_space<vmem>>, vector<1x32xf32>
    %c0_5 = arith.constant 0 : index
    %c0_6 = arith.constant 0 : index
    %3 = vector.load %arg4[%c0_5, %c0_6] : memref<2x32xf32, #tpu.memory_space<vmem>>, vector<1x32xf32>
    %c0_7 = arith.constant 0 : index
    %c0_8 = arith.constant 0 : index
    %c0_9 = arith.constant 0 : index
    %4 = vector.load %arg5[%c0_7, %c0_8, %c0_9] : memref<2x32x96xf32, #tpu.memory_space<vmem>>, vector<1x32x96xf32>
    %5 = vector.shape_cast %4 : vector<1x32x96xf32> to vector<32x96xf32>
    %c0_10 = arith.constant 0 : index
    %c0_11 = arith.constant 0 : index
    %6 = vector.load %arg6[%c0_10, %c0_11] : memref<2x96xf32, #tpu.memory_space<vmem>>, vector<1x96xf32>
    %c0_12 = arith.constant 0 : index
    %c0_13 = arith.constant 0 : index
    %c0_14 = arith.constant 0 : index
    %7 = vector.load %arg7[%c0_12, %c0_13, %c0_14] : memref<2x32x32xf32, #tpu.memory_space<vmem>>, vector<1x32x32xf32>
    %8 = vector.shape_cast %7 : vector<1x32x32xf32> to vector<32x32xf32>
    %c0_15 = arith.constant 0 : index
    %c0_16 = arith.constant 0 : index
    %9 = vector.load %arg8[%c0_15, %c0_16] : memref<2x32xf32, #tpu.memory_space<vmem>>, vector<1x32xf32>
    %c0_17 = arith.constant 0 : index
    %c0_18 = arith.constant 0 : index
    %10 = vector.load %arg9[%c0_17, %c0_18] : memref<2x32xf32, #tpu.memory_space<vmem>>, vector<1x32xf32>
    %c0_19 = arith.constant 0 : index
    %c0_20 = arith.constant 0 : index
    %11 = vector.load %arg10[%c0_19, %c0_20] : memref<2x32xf32, #tpu.memory_space<vmem>>, vector<1x32xf32>
    %c0_21 = arith.constant 0 : index
    %c0_22 = arith.constant 0 : index
    %c0_23 = arith.constant 0 : index
    %12 = vector.load %arg11[%c0_21, %c0_22, %c0_23] : memref<2x32x128xf32, #tpu.memory_space<vmem>>, vector<1x32x128xf32>
    %13 = vector.shape_cast %12 : vector<1x32x128xf32> to vector<32x128xf32>
    %c0_24 = arith.constant 0 : index
    %c0_25 = arith.constant 0 : index
    %14 = vector.load %arg12[%c0_24, %c0_25] : memref<2x128xf32, #tpu.memory_space<vmem>>, vector<1x128xf32>
    %c0_26 = arith.constant 0 : index
    %c0_27 = arith.constant 0 : index
    %c0_28 = arith.constant 0 : index
    %15 = vector.load %arg13[%c0_26, %c0_27, %c0_28] : memref<2x128x32xf32, #tpu.memory_space<vmem>>, vector<1x128x32xf32>
    %16 = vector.shape_cast %15 : vector<1x128x32xf32> to vector<128x32xf32>
    %c0_29 = arith.constant 0 : index
    %c0_30 = arith.constant 0 : index
    %17 = vector.load %arg14[%c0_29, %c0_30] : memref<2x32xf32, #tpu.memory_space<vmem>>, vector<1x32xf32>
    %cst = arith.constant dense<0.000000e+00> : vector<8xf32>
    %18 = vector.multi_reduction <add>, %0, %cst [1] : vector<8x32xf32> to vector<8xf32>
    %19 = vector.shape_cast %18 : vector<8xf32> to vector<8x1xf32>
    %cst_31 = arith.constant 3.200000e+01 : f32
    %20 = vector.broadcast %cst_31 : f32 to vector<8x1xf32>
    %21 = arith.divf %19, %20 : vector<8x1xf32>
    %22 = vector.broadcast %21 : vector<8x1xf32> to vector<8x32xf32>
    %23 = arith.subf %0, %22 : vector<8x32xf32>
    %24 = arith.mulf %23, %23 : vector<8x32xf32>
    %cst_32 = arith.constant dense<0.000000e+00> : vector<8xf32>
    %25 = vector.multi_reduction <add>, %24, %cst_32 [1] : vector<8x32xf32> to vector<8xf32>
    %26 = vector.shape_cast %25 : vector<8xf32> to vector<8x1xf32>
    %cst_33 = arith.constant 3.200000e+01 : f32
    %27 = vector.broadcast %cst_33 : f32 to vector<8x1xf32>
    %28 = arith.divf %26, %27 : vector<8x1xf32>
    %29 = vector.broadcast %21 : vector<8x1xf32> to vector<8x32xf32>
    %30 = arith.subf %0, %29 : vector<8x32xf32>
    %cst_34 = arith.constant 9.99999996E-13 : f32
    %31 = vector.broadcast %cst_34 : f32 to vector<8x1xf32>
    %32 = arith.addf %28, %31 : vector<8x1xf32>
    %33 = math.rsqrt %32 : vector<8x1xf32>
    %34 = vector.broadcast %33 : vector<8x1xf32> to vector<8x32xf32>
    %35 = arith.mulf %30, %34 : vector<8x32xf32>
    %36 = vector.broadcast %2 : vector<1x32xf32> to vector<8x32xf32>
    %37 = arith.mulf %35, %36 : vector<8x32xf32>
    %38 = vector.broadcast %3 : vector<1x32xf32> to vector<8x32xf32>
    %39 = arith.addf %37, %38 : vector<8x32xf32>
    %cst_35 = arith.constant dense<0.000000e+00> : vector<8x96xf32>
    %40 = tpu.matmul %39, %5, %cst_35 {dimension_numbers = #tpu.dot_dimension_numbers<[1], [0], [0], [1], [0, 0, 1, 1], [], []>} : vector<8x32xf32>, vector<32x96xf32>, vector<8x96xf32> -> vector<8x96xf32>
    %41 = vector.broadcast %6 : vector<1x96xf32> to vector<8x96xf32>
    %42 = arith.addf %40, %41 : vector<8x96xf32>
    %43 = vector.extract_strided_slice %42 {offsets = [0, 0], sizes = [8, 32], strides = [1, 1]} : vector<8x96xf32> to vector<8x32xf32>
    %44 = vector.extract_strided_slice %42 {offsets = [0, 32], sizes = [8, 32], strides = [1, 1]} : vector<8x96xf32> to vector<8x32xf32>
    %45 = vector.extract_strided_slice %42 {offsets = [0, 64], sizes = [8, 32], strides = [1, 1]} : vector<8x96xf32> to vector<8x32xf32>
    %46 = vector.extract_strided_slice %43 {offsets = [0, 0], sizes = [8, 8], strides = [1, 1]} : vector<8x32xf32> to vector<8x8xf32>
    %47 = vector.extract_strided_slice %44 {offsets = [0, 0], sizes = [8, 8], strides = [1, 1]} : vector<8x32xf32> to vector<8x8xf32>
    %48 = vector.extract_strided_slice %45 {offsets = [0, 0], sizes = [8, 8], strides = [1, 1]} : vector<8x32xf32> to vector<8x8xf32>
    %cst_36 = arith.constant dense<0.000000e+00> : vector<8x8xf32>
    %49 = tpu.matmul %46, %47, %cst_36 {dimension_numbers = #tpu.dot_dimension_numbers<[1], [1], [0], [0], [0, 0, 1, 0], [], []>} : vector<8x8xf32>, vector<8x8xf32>, vector<8x8xf32> -> vector<8x8xf32>
    %cst_37 = arith.constant 0.353553385 : f32
    %50 = vector.broadcast %cst_37 : f32 to vector<8x8xf32>
    %51 = arith.mulf %49, %50 : vector<8x8xf32>
    %52 = vector.broadcast %1 : vector<1x8xf32> to vector<8x8xf32>
    %53 = arith.addf %51, %52 : vector<8x8xf32>
    %cst_38 = arith.constant dense<0xFF800000> : vector<8xf32>
    %54 = vector.multi_reduction <maximumf>, %53, %cst_38 [1] : vector<8x8xf32> to vector<8xf32>
    %55 = vector.shape_cast %54 : vector<8xf32> to vector<8x1xf32>
    %56 = vector.broadcast %55 : vector<8x1xf32> to vector<8x8xf32>
    %57 = arith.subf %53, %56 : vector<8x8xf32>
    %58 = math.exp %57 : vector<8x8xf32>
    %cst_39 = arith.constant dense<0.000000e+00> : vector<8xf32>
    %59 = vector.multi_reduction <add>, %58, %cst_39 [1] : vector<8x8xf32> to vector<8xf32>
    %60 = vector.shape_cast %59 : vector<8xf32> to vector<8x1xf32>
    %61 = tpu.reciprocal %60 {approx = true} : vector<8x1xf32> -> vector<8x1xf32>
    %62 = vector.broadcast %61 : vector<8x1xf32> to vector<8x8xf32>
    %63 = arith.mulf %58, %62 : vector<8x8xf32>
    %cst_40 = arith.constant dense<0.000000e+00> : vector<8x8xf32>
    %64 = tpu.matmul %63, %48, %cst_40 {dimension_numbers = #tpu.dot_dimension_numbers<[1], [0], [0], [1], [0, 0, 1, 1], [], []>} : vector<8x8xf32>, vector<8x8xf32>, vector<8x8xf32> -> vector<8x8xf32>
    %65 = vector.extract_strided_slice %8 {offsets = [0, 0], sizes = [8, 32], strides = [1, 1]} : vector<32x32xf32> to vector<8x32xf32>
    %cst_41 = arith.constant dense<0.000000e+00> : vector<8x32xf32>
    %66 = tpu.matmul %64, %65, %cst_41 {dimension_numbers = #tpu.dot_dimension_numbers<[1], [0], [0], [1], [0, 0, 1, 1], [], []>} : vector<8x8xf32>, vector<8x32xf32>, vector<8x32xf32> -> vector<8x32xf32>
    %67 = vector.extract_strided_slice %43 {offsets = [0, 8], sizes = [8, 8], strides = [1, 1]} : vector<8x32xf32> to vector<8x8xf32>
    %68 = vector.extract_strided_slice %44 {offsets = [0, 8], sizes = [8, 8], strides = [1, 1]} : vector<8x32xf32> to vector<8x8xf32>
    %69 = vector.extract_strided_slice %45 {offsets = [0, 8], sizes = [8, 8], strides = [1, 1]} : vector<8x32xf32> to vector<8x8xf32>
    %cst_42 = arith.constant dense<0.000000e+00> : vector<8x8xf32>
    %70 = tpu.matmul %67, %68, %cst_42 {dimension_numbers = #tpu.dot_dimension_numbers<[1], [1], [0], [0], [0, 0, 1, 0], [], []>} : vector<8x8xf32>, vector<8x8xf32>, vector<8x8xf32> -> vector<8x8xf32>
    %cst_43 = arith.constant 0.353553385 : f32
    %71 = vector.broadcast %cst_43 : f32 to vector<8x8xf32>
    %72 = arith.mulf %70, %71 : vector<8x8xf32>
    %73 = vector.broadcast %1 : vector<1x8xf32> to vector<8x8xf32>
    %74 = arith.addf %72, %73 : vector<8x8xf32>
    %cst_44 = arith.constant dense<0xFF800000> : vector<8xf32>
    %75 = vector.multi_reduction <maximumf>, %74, %cst_44 [1] : vector<8x8xf32> to vector<8xf32>
    %76 = vector.shape_cast %75 : vector<8xf32> to vector<8x1xf32>
    %77 = vector.broadcast %76 : vector<8x1xf32> to vector<8x8xf32>
    %78 = arith.subf %74, %77 : vector<8x8xf32>
    %79 = math.exp %78 : vector<8x8xf32>
    %cst_45 = arith.constant dense<0.000000e+00> : vector<8xf32>
    %80 = vector.multi_reduction <add>, %79, %cst_45 [1] : vector<8x8xf32> to vector<8xf32>
    %81 = vector.shape_cast %80 : vector<8xf32> to vector<8x1xf32>
    %82 = tpu.reciprocal %81 {approx = true} : vector<8x1xf32> -> vector<8x1xf32>
    %83 = vector.broadcast %82 : vector<8x1xf32> to vector<8x8xf32>
    %84 = arith.mulf %79, %83 : vector<8x8xf32>
    %cst_46 = arith.constant dense<0.000000e+00> : vector<8x8xf32>
    %85 = tpu.matmul %84, %69, %cst_46 {dimension_numbers = #tpu.dot_dimension_numbers<[1], [0], [0], [1], [0, 0, 1, 1], [], []>} : vector<8x8xf32>, vector<8x8xf32>, vector<8x8xf32> -> vector<8x8xf32>
    %86 = vector.extract_strided_slice %8 {offsets = [8, 0], sizes = [8, 32], strides = [1, 1]} : vector<32x32xf32> to vector<8x32xf32>
    %cst_47 = arith.constant dense<0.000000e+00> : vector<8x32xf32>
    %87 = tpu.matmul %85, %86, %cst_47 {dimension_numbers = #tpu.dot_dimension_numbers<[1], [0], [0], [1], [0, 0, 1, 1], [], []>} : vector<8x8xf32>, vector<8x32xf32>, vector<8x32xf32> -> vector<8x32xf32>
    %88 = arith.addf %66, %87 : vector<8x32xf32>
    %89 = vector.extract_strided_slice %43 {offsets = [0, 16], sizes = [8, 8], strides = [1, 1]} : vector<8x32xf32> to vector<8x8xf32>
    %90 = vector.extract_strided_slice %44 {offsets = [0, 16], sizes = [8, 8], strides = [1, 1]} : vector<8x32xf32> to vector<8x8xf32>
    %91 = vector.extract_strided_slice %45 {offsets = [0, 16], sizes = [8, 8], strides = [1, 1]} : vector<8x32xf32> to vector<8x8xf32>
    %cst_48 = arith.constant dense<0.000000e+00> : vector<8x8xf32>
    %92 = tpu.matmul %89, %90, %cst_48 {dimension_numbers = #tpu.dot_dimension_numbers<[1], [1], [0], [0], [0, 0, 1, 0], [], []>} : vector<8x8xf32>, vector<8x8xf32>, vector<8x8xf32> -> vector<8x8xf32>
    %cst_49 = arith.constant 0.353553385 : f32
    %93 = vector.broadcast %cst_49 : f32 to vector<8x8xf32>
    %94 = arith.mulf %92, %93 : vector<8x8xf32>
    %95 = vector.broadcast %1 : vector<1x8xf32> to vector<8x8xf32>
    %96 = arith.addf %94, %95 : vector<8x8xf32>
    %cst_50 = arith.constant dense<0xFF800000> : vector<8xf32>
    %97 = vector.multi_reduction <maximumf>, %96, %cst_50 [1] : vector<8x8xf32> to vector<8xf32>
    %98 = vector.shape_cast %97 : vector<8xf32> to vector<8x1xf32>
    %99 = vector.broadcast %98 : vector<8x1xf32> to vector<8x8xf32>
    %100 = arith.subf %96, %99 : vector<8x8xf32>
    %101 = math.exp %100 : vector<8x8xf32>
    %cst_51 = arith.constant dense<0.000000e+00> : vector<8xf32>
    %102 = vector.multi_reduction <add>, %101, %cst_51 [1] : vector<8x8xf32> to vector<8xf32>
    %103 = vector.shape_cast %102 : vector<8xf32> to vector<8x1xf32>
    %104 = tpu.reciprocal %103 {approx = true} : vector<8x1xf32> -> vector<8x1xf32>
    %105 = vector.broadcast %104 : vector<8x1xf32> to vector<8x8xf32>
    %106 = arith.mulf %101, %105 : vector<8x8xf32>
    %cst_52 = arith.constant dense<0.000000e+00> : vector<8x8xf32>
    %107 = tpu.matmul %106, %91, %cst_52 {dimension_numbers = #tpu.dot_dimension_numbers<[1], [0], [0], [1], [0, 0, 1, 1], [], []>} : vector<8x8xf32>, vector<8x8xf32>, vector<8x8xf32> -> vector<8x8xf32>
    %108 = vector.extract_strided_slice %8 {offsets = [16, 0], sizes = [8, 32], strides = [1, 1]} : vector<32x32xf32> to vector<8x32xf32>
    %cst_53 = arith.constant dense<0.000000e+00> : vector<8x32xf32>
    %109 = tpu.matmul %107, %108, %cst_53 {dimension_numbers = #tpu.dot_dimension_numbers<[1], [0], [0], [1], [0, 0, 1, 1], [], []>} : vector<8x8xf32>, vector<8x32xf32>, vector<8x32xf32> -> vector<8x32xf32>
    %110 = arith.addf %88, %109 : vector<8x32xf32>
    %111 = vector.extract_strided_slice %43 {offsets = [0, 24], sizes = [8, 8], strides = [1, 1]} : vector<8x32xf32> to vector<8x8xf32>
    %112 = vector.extract_strided_slice %44 {offsets = [0, 24], sizes = [8, 8], strides = [1, 1]} : vector<8x32xf32> to vector<8x8xf32>
    %113 = vector.extract_strided_slice %45 {offsets = [0, 24], sizes = [8, 8], strides = [1, 1]} : vector<8x32xf32> to vector<8x8xf32>
    %cst_54 = arith.constant dense<0.000000e+00> : vector<8x8xf32>
    %114 = tpu.matmul %111, %112, %cst_54 {dimension_numbers = #tpu.dot_dimension_numbers<[1], [1], [0], [0], [0, 0, 1, 0], [], []>} : vector<8x8xf32>, vector<8x8xf32>, vector<8x8xf32> -> vector<8x8xf32>
    %cst_55 = arith.constant 0.353553385 : f32
    %115 = vector.broadcast %cst_55 : f32 to vector<8x8xf32>
    %116 = arith.mulf %114, %115 : vector<8x8xf32>
    %117 = vector.broadcast %1 : vector<1x8xf32> to vector<8x8xf32>
    %118 = arith.addf %116, %117 : vector<8x8xf32>
    %cst_56 = arith.constant dense<0xFF800000> : vector<8xf32>
    %119 = vector.multi_reduction <maximumf>, %118, %cst_56 [1] : vector<8x8xf32> to vector<8xf32>
    %120 = vector.shape_cast %119 : vector<8xf32> to vector<8x1xf32>
    %121 = vector.broadcast %120 : vector<8x1xf32> to vector<8x8xf32>
    %122 = arith.subf %118, %121 : vector<8x8xf32>
    %123 = math.exp %122 : vector<8x8xf32>
    %cst_57 = arith.constant dense<0.000000e+00> : vector<8xf32>
    %124 = vector.multi_reduction <add>, %123, %cst_57 [1] : vector<8x8xf32> to vector<8xf32>
    %125 = vector.shape_cast %124 : vector<8xf32> to vector<8x1xf32>
    %126 = tpu.reciprocal %125 {approx = true} : vector<8x1xf32> -> vector<8x1xf32>
    %127 = vector.broadcast %126 : vector<8x1xf32> to vector<8x8xf32>
    %128 = arith.mulf %123, %127 : vector<8x8xf32>
    %cst_58 = arith.constant dense<0.000000e+00> : vector<8x8xf32>
    %129 = tpu.matmul %128, %113, %cst_58 {dimension_numbers = #tpu.dot_dimension_numbers<[1], [0], [0], [1], [0, 0, 1, 1], [], []>} : vector<8x8xf32>, vector<8x8xf32>, vector<8x8xf32> -> vector<8x8xf32>
    %130 = vector.extract_strided_slice %8 {offsets = [24, 0], sizes = [8, 32], strides = [1, 1]} : vector<32x32xf32> to vector<8x32xf32>
    %cst_59 = arith.constant dense<0.000000e+00> : vector<8x32xf32>
    %131 = tpu.matmul %129, %130, %cst_59 {dimension_numbers = #tpu.dot_dimension_numbers<[1], [0], [0], [1], [0, 0, 1, 1], [], []>} : vector<8x8xf32>, vector<8x32xf32>, vector<8x32xf32> -> vector<8x32xf32>
    %132 = arith.addf %110, %131 : vector<8x32xf32>
    %133 = arith.addf %0, %132 : vector<8x32xf32>
    %134 = vector.broadcast %9 : vector<1x32xf32> to vector<8x32xf32>
    %135 = arith.addf %133, %134 : vector<8x32xf32>
    %cst_60 = arith.constant dense<0.000000e+00> : vector<8xf32>
    %136 = vector.multi_reduction <add>, %135, %cst_60 [1] : vector<8x32xf32> to vector<8xf32>
    %137 = vector.shape_cast %136 : vector<8xf32> to vector<8x1xf32>
    %cst_61 = arith.constant 3.200000e+01 : f32
    %138 = vector.broadcast %cst_61 : f32 to vector<8x1xf32>
    %139 = arith.divf %137, %138 : vector<8x1xf32>
    %140 = vector.broadcast %139 : vector<8x1xf32> to vector<8x32xf32>
    %141 = arith.subf %135, %140 : vector<8x32xf32>
    %142 = arith.mulf %141, %141 : vector<8x32xf32>
    %cst_62 = arith.constant dense<0.000000e+00> : vector<8xf32>
    %143 = vector.multi_reduction <add>, %142, %cst_62 [1] : vector<8x32xf32> to vector<8xf32>
    %144 = vector.shape_cast %143 : vector<8xf32> to vector<8x1xf32>
    %cst_63 = arith.constant 3.200000e+01 : f32
    %145 = vector.broadcast %cst_63 : f32 to vector<8x1xf32>
    %146 = arith.divf %144, %145 : vector<8x1xf32>
    %147 = vector.broadcast %139 : vector<8x1xf32> to vector<8x32xf32>
    %148 = arith.subf %135, %147 : vector<8x32xf32>
    %cst_64 = arith.constant 9.99999996E-13 : f32
    %149 = vector.broadcast %cst_64 : f32 to vector<8x1xf32>
    %150 = arith.addf %146, %149 : vector<8x1xf32>
    %151 = math.rsqrt %150 : vector<8x1xf32>
    %152 = vector.broadcast %151 : vector<8x1xf32> to vector<8x32xf32>
    %153 = arith.mulf %148, %152 : vector<8x32xf32>
    %154 = vector.broadcast %10 : vector<1x32xf32> to vector<8x32xf32>
    %155 = arith.mulf %153, %154 : vector<8x32xf32>
    %156 = vector.broadcast %11 : vector<1x32xf32> to vector<8x32xf32>
    %157 = arith.addf %155, %156 : vector<8x32xf32>
    %cst_65 = arith.constant dense<0.000000e+00> : vector<8x128xf32>
    %158 = tpu.matmul %157, %13, %cst_65 {dimension_numbers = #tpu.dot_dimension_numbers<[1], [0], [0], [1], [0, 0, 1, 1], [], []>} : vector<8x32xf32>, vector<32x128xf32>, vector<8x128xf32> -> vector<8x128xf32>
    %159 = vector.broadcast %14 : vector<1x128xf32> to vector<8x128xf32>
    %160 = arith.addf %158, %159 : vector<8x128xf32>
    %cst_66 = arith.constant 5.000000e-01 : f32
    %161 = vector.broadcast %cst_66 : f32 to vector<8x128xf32>
    %162 = arith.mulf %161, %160 : vector<8x128xf32>
    %cst_67 = arith.constant 0.707106769 : f32
    %163 = vector.broadcast %cst_67 : f32 to vector<8x128xf32>
    %164 = arith.mulf %160, %163 : vector<8x128xf32>
    %165 = math.erf %164 : vector<8x128xf32>
    %cst_68 = arith.constant 1.000000e+00 : f32
    %166 = vector.broadcast %cst_68 : f32 to vector<8x128xf32>
    %167 = arith.addf %166, %165 : vector<8x128xf32>
    %168 = arith.mulf %162, %167 : vector<8x128xf32>
    %cst_69 = arith.constant dense<0.000000e+00> : vector<8x32xf32>
    %169 = tpu.matmul %168, %16, %cst_69 {dimension_numbers = #tpu.dot_dimension_numbers<[1], [0], [0], [1], [0, 0, 1, 1], [], []>} : vector<8x128xf32>, vector<128x32xf32>, vector<8x32xf32> -> vector<8x32xf32>
    %170 = vector.broadcast %17 : vector<1x32xf32> to vector<8x32xf32>
    %171 = arith.addf %169, %170 : vector<8x32xf32>
    %172 = arith.addf %135, %171 : vector<8x32xf32>
    %c1 = arith.constant 1 : index
    %c0_70 = arith.constant 0 : index
    %173 = vector.load %arg3[%c1, %c0_70] : memref<2x32xf32, #tpu.memory_space<vmem>>, vector<1x32xf32>
    %c1_71 = arith.constant 1 : index
    %c0_72 = arith.constant 0 : index
    %174 = vector.load %arg4[%c1_71, %c0_72] : memref<2x32xf32, #tpu.memory_space<vmem>>, vector<1x32xf32>
    %c1_73 = arith.constant 1 : index
    %c0_74 = arith.constant 0 : index
    %c0_75 = arith.constant 0 : index
    %175 = vector.load %arg5[%c1_73, %c0_74, %c0_75] : memref<2x32x96xf32, #tpu.memory_space<vmem>>, vector<1x32x96xf32>
    %176 = vector.shape_cast %175 : vector<1x32x96xf32> to vector<32x96xf32>
    %c1_76 = arith.constant 1 : index
    %c0_77 = arith.constant 0 : index
    %177 = vector.load %arg6[%c1_76, %c0_77] : memref<2x96xf32, #tpu.memory_space<vmem>>, vector<1x96xf32>
    %c1_78 = arith.constant 1 : index
    %c0_79 = arith.constant 0 : index
    %c0_80 = arith.constant 0 : index
    %178 = vector.load %arg7[%c1_78, %c0_79, %c0_80] : memref<2x32x32xf32, #tpu.memory_space<vmem>>, vector<1x32x32xf32>
    %179 = vector.shape_cast %178 : vector<1x32x32xf32> to vector<32x32xf32>
    %c1_81 = arith.constant 1 : index
    %c0_82 = arith.constant 0 : index
    %180 = vector.load %arg8[%c1_81, %c0_82] : memref<2x32xf32, #tpu.memory_space<vmem>>, vector<1x32xf32>
    %c1_83 = arith.constant 1 : index
    %c0_84 = arith.constant 0 : index
    %181 = vector.load %arg9[%c1_83, %c0_84] : memref<2x32xf32, #tpu.memory_space<vmem>>, vector<1x32xf32>
    %c1_85 = arith.constant 1 : index
    %c0_86 = arith.constant 0 : index
    %182 = vector.load %arg10[%c1_85, %c0_86] : memref<2x32xf32, #tpu.memory_space<vmem>>, vector<1x32xf32>
    %c1_87 = arith.constant 1 : index
    %c0_88 = arith.constant 0 : index
    %c0_89 = arith.constant 0 : index
    %183 = vector.load %arg11[%c1_87, %c0_88, %c0_89] : memref<2x32x128xf32, #tpu.memory_space<vmem>>, vector<1x32x128xf32>
    %184 = vector.shape_cast %183 : vector<1x32x128xf32> to vector<32x128xf32>
    %c1_90 = arith.constant 1 : index
    %c0_91 = arith.constant 0 : index
    %185 = vector.load %arg12[%c1_90, %c0_91] : memref<2x128xf32, #tpu.memory_space<vmem>>, vector<1x128xf32>
    %c1_92 = arith.constant 1 : index
    %c0_93 = arith.constant 0 : index
    %c0_94 = arith.constant 0 : index
    %186 = vector.load %arg13[%c1_92, %c0_93, %c0_94] : memref<2x128x32xf32, #tpu.memory_space<vmem>>, vector<1x128x32xf32>
    %187 = vector.shape_cast %186 : vector<1x128x32xf32> to vector<128x32xf32>
    %c1_95 = arith.constant 1 : index
    %c0_96 = arith.constant 0 : index
    %188 = vector.load %arg14[%c1_95, %c0_96] : memref<2x32xf32, #tpu.memory_space<vmem>>, vector<1x32xf32>
    %cst_97 = arith.constant dense<0.000000e+00> : vector<8xf32>
    %189 = vector.multi_reduction <add>, %172, %cst_97 [1] : vector<8x32xf32> to vector<8xf32>
    %190 = vector.shape_cast %189 : vector<8xf32> to vector<8x1xf32>
    %cst_98 = arith.constant 3.200000e+01 : f32
    %191 = vector.broadcast %cst_98 : f32 to vector<8x1xf32>
    %192 = arith.divf %190, %191 : vector<8x1xf32>
    %193 = vector.broadcast %192 : vector<8x1xf32> to vector<8x32xf32>
    %194 = arith.subf %172, %193 : vector<8x32xf32>
    %195 = arith.mulf %194, %194 : vector<8x32xf32>
    %cst_99 = arith.constant dense<0.000000e+00> : vector<8xf32>
    %196 = vector.multi_reduction <add>, %195, %cst_99 [1] : vector<8x32xf32> to vector<8xf32>
    %197 = vector.shape_cast %196 : vector<8xf32> to vector<8x1xf32>
    %cst_100 = arith.constant 3.200000e+01 : f32
    %198 = vector.broadcast %cst_100 : f32 to vector<8x1xf32>
    %199 = arith.divf %197, %198 : vector<8x1xf32>
    %200 = vector.broadcast %192 : vector<8x1xf32> to vector<8x32xf32>
    %201 = arith.subf %172, %200 : vector<8x32xf32>
    %cst_101 = arith.constant 9.99999996E-13 : f32
    %202 = vector.broadcast %cst_101 : f32 to vector<8x1xf32>
    %203 = arith.addf %199, %202 : vector<8x1xf32>
    %204 = math.rsqrt %203 : vector<8x1xf32>
    %205 = vector.broadcast %204 : vector<8x1xf32> to vector<8x32xf32>
    %206 = arith.mulf %201, %205 : vector<8x32xf32>
    %207 = vector.broadcast %173 : vector<1x32xf32> to vector<8x32xf32>
    %208 = arith.mulf %206, %207 : vector<8x32xf32>
    %209 = vector.broadcast %174 : vector<1x32xf32> to vector<8x32xf32>
    %210 = arith.addf %208, %209 : vector<8x32xf32>
    %cst_102 = arith.constant dense<0.000000e+00> : vector<8x96xf32>
    %211 = tpu.matmul %210, %176, %cst_102 {dimension_numbers = #tpu.dot_dimension_numbers<[1], [0], [0], [1], [0, 0, 1, 1], [], []>} : vector<8x32xf32>, vector<32x96xf32>, vector<8x96xf32> -> vector<8x96xf32>
    %212 = vector.broadcast %177 : vector<1x96xf32> to vector<8x96xf32>
    %213 = arith.addf %211, %212 : vector<8x96xf32>
    %214 = vector.extract_strided_slice %213 {offsets = [0, 0], sizes = [8, 32], strides = [1, 1]} : vector<8x96xf32> to vector<8x32xf32>
    %215 = vector.extract_strided_slice %213 {offsets = [0, 32], sizes = [8, 32], strides = [1, 1]} : vector<8x96xf32> to vector<8x32xf32>
    %216 = vector.extract_strided_slice %213 {offsets = [0, 64], sizes = [8, 32], strides = [1, 1]} : vector<8x96xf32> to vector<8x32xf32>
    %217 = vector.extract_strided_slice %214 {offsets = [0, 0], sizes = [8, 8], strides = [1, 1]} : vector<8x32xf32> to vector<8x8xf32>
    %218 = vector.extract_strided_slice %215 {offsets = [0, 0], sizes = [8, 8], strides = [1, 1]} : vector<8x32xf32> to vector<8x8xf32>
    %219 = vector.extract_strided_slice %216 {offsets = [0, 0], sizes = [8, 8], strides = [1, 1]} : vector<8x32xf32> to vector<8x8xf32>
    %cst_103 = arith.constant dense<0.000000e+00> : vector<8x8xf32>
    %220 = tpu.matmul %217, %218, %cst_103 {dimension_numbers = #tpu.dot_dimension_numbers<[1], [1], [0], [0], [0, 0, 1, 0], [], []>} : vector<8x8xf32>, vector<8x8xf32>, vector<8x8xf32> -> vector<8x8xf32>
    %cst_104 = arith.constant 0.353553385 : f32
    %221 = vector.broadcast %cst_104 : f32 to vector<8x8xf32>
    %222 = arith.mulf %220, %221 : vector<8x8xf32>
    %223 = vector.broadcast %1 : vector<1x8xf32> to vector<8x8xf32>
    %224 = arith.addf %222, %223 : vector<8x8xf32>
    %cst_105 = arith.constant dense<0xFF800000> : vector<8xf32>
    %225 = vector.multi_reduction <maximumf>, %224, %cst_105 [1] : vector<8x8xf32> to vector<8xf32>
    %226 = vector.shape_cast %225 : vector<8xf32> to vector<8x1xf32>
    %227 = vector.broadcast %226 : vector<8x1xf32> to vector<8x8xf32>
    %228 = arith.subf %224, %227 : vector<8x8xf32>
    %229 = math.exp %228 : vector<8x8xf32>
    %cst_106 = arith.constant dense<0.000000e+00> : vector<8xf32>
    %230 = vector.multi_reduction <add>, %229, %cst_106 [1] : vector<8x8xf32> to vector<8xf32>
    %231 = vector.shape_cast %230 : vector<8xf32> to vector<8x1xf32>
    %232 = tpu.reciprocal %231 {approx = true} : vector<8x1xf32> -> vector<8x1xf32>
    %233 = vector.broadcast %232 : vector<8x1xf32> to vector<8x8xf32>
    %234 = arith.mulf %229, %233 : vector<8x8xf32>
    %cst_107 = arith.constant dense<0.000000e+00> : vector<8x8xf32>
    %235 = tpu.matmul %234, %219, %cst_107 {dimension_numbers = #tpu.dot_dimension_numbers<[1], [0], [0], [1], [0, 0, 1, 1], [], []>} : vector<8x8xf32>, vector<8x8xf32>, vector<8x8xf32> -> vector<8x8xf32>
    %236 = vector.extract_strided_slice %179 {offsets = [0, 0], sizes = [8, 32], strides = [1, 1]} : vector<32x32xf32> to vector<8x32xf32>
    %cst_108 = arith.constant dense<0.000000e+00> : vector<8x32xf32>
    %237 = tpu.matmul %235, %236, %cst_108 {dimension_numbers = #tpu.dot_dimension_numbers<[1], [0], [0], [1], [0, 0, 1, 1], [], []>} : vector<8x8xf32>, vector<8x32xf32>, vector<8x32xf32> -> vector<8x32xf32>
    %238 = vector.extract_strided_slice %214 {offsets = [0, 8], sizes = [8, 8], strides = [1, 1]} : vector<8x32xf32> to vector<8x8xf32>
    %239 = vector.extract_strided_slice %215 {offsets = [0, 8], sizes = [8, 8], strides = [1, 1]} : vector<8x32xf32> to vector<8x8xf32>
    %240 = vector.extract_strided_slice %216 {offsets = [0, 8], sizes = [8, 8], strides = [1, 1]} : vector<8x32xf32> to vector<8x8xf32>
    %cst_109 = arith.constant dense<0.000000e+00> : vector<8x8xf32>
    %241 = tpu.matmul %238, %239, %cst_109 {dimension_numbers = #tpu.dot_dimension_numbers<[1], [1], [0], [0], [0, 0, 1, 0], [], []>} : vector<8x8xf32>, vector<8x8xf32>, vector<8x8xf32> -> vector<8x8xf32>
    %cst_110 = arith.constant 0.353553385 : f32
    %242 = vector.broadcast %cst_110 : f32 to vector<8x8xf32>
    %243 = arith.mulf %241, %242 : vector<8x8xf32>
    %244 = vector.broadcast %1 : vector<1x8xf32> to vector<8x8xf32>
    %245 = arith.addf %243, %244 : vector<8x8xf32>
    %cst_111 = arith.constant dense<0xFF800000> : vector<8xf32>
    %246 = vector.multi_reduction <maximumf>, %245, %cst_111 [1] : vector<8x8xf32> to vector<8xf32>
    %247 = vector.shape_cast %246 : vector<8xf32> to vector<8x1xf32>
    %248 = vector.broadcast %247 : vector<8x1xf32> to vector<8x8xf32>
    %249 = arith.subf %245, %248 : vector<8x8xf32>
    %250 = math.exp %249 : vector<8x8xf32>
    %cst_112 = arith.constant dense<0.000000e+00> : vector<8xf32>
    %251 = vector.multi_reduction <add>, %250, %cst_112 [1] : vector<8x8xf32> to vector<8xf32>
    %252 = vector.shape_cast %251 : vector<8xf32> to vector<8x1xf32>
    %253 = tpu.reciprocal %252 {approx = true} : vector<8x1xf32> -> vector<8x1xf32>
    %254 = vector.broadcast %253 : vector<8x1xf32> to vector<8x8xf32>
    %255 = arith.mulf %250, %254 : vector<8x8xf32>
    %cst_113 = arith.constant dense<0.000000e+00> : vector<8x8xf32>
    %256 = tpu.matmul %255, %240, %cst_113 {dimension_numbers = #tpu.dot_dimension_numbers<[1], [0], [0], [1], [0, 0, 1, 1], [], []>} : vector<8x8xf32>, vector<8x8xf32>, vector<8x8xf32> -> vector<8x8xf32>
    %257 = vector.extract_strided_slice %179 {offsets = [8, 0], sizes = [8, 32], strides = [1, 1]} : vector<32x32xf32> to vector<8x32xf32>
    %cst_114 = arith.constant dense<0.000000e+00> : vector<8x32xf32>
    %258 = tpu.matmul %256, %257, %cst_114 {dimension_numbers = #tpu.dot_dimension_numbers<[1], [0], [0], [1], [0, 0, 1, 1], [], []>} : vector<8x8xf32>, vector<8x32xf32>, vector<8x32xf32> -> vector<8x32xf32>
    %259 = arith.addf %237, %258 : vector<8x32xf32>
    %260 = vector.extract_strided_slice %214 {offsets = [0, 16], sizes = [8, 8], strides = [1, 1]} : vector<8x32xf32> to vector<8x8xf32>
    %261 = vector.extract_strided_slice %215 {offsets = [0, 16], sizes = [8, 8], strides = [1, 1]} : vector<8x32xf32> to vector<8x8xf32>
    %262 = vector.extract_strided_slice %216 {offsets = [0, 16], sizes = [8, 8], strides = [1, 1]} : vector<8x32xf32> to vector<8x8xf32>
    %cst_115 = arith.constant dense<0.000000e+00> : vector<8x8xf32>
    %263 = tpu.matmul %260, %261, %cst_115 {dimension_numbers = #tpu.dot_dimension_numbers<[1], [1], [0], [0], [0, 0, 1, 0], [], []>} : vector<8x8xf32>, vector<8x8xf32>, vector<8x8xf32> -> vector<8x8xf32>
    %cst_116 = arith.constant 0.353553385 : f32
    %264 = vector.broadcast %cst_116 : f32 to vector<8x8xf32>
    %265 = arith.mulf %263, %264 : vector<8x8xf32>
    %266 = vector.broadcast %1 : vector<1x8xf32> to vector<8x8xf32>
    %267 = arith.addf %265, %266 : vector<8x8xf32>
    %cst_117 = arith.constant dense<0xFF800000> : vector<8xf32>
    %268 = vector.multi_reduction <maximumf>, %267, %cst_117 [1] : vector<8x8xf32> to vector<8xf32>
    %269 = vector.shape_cast %268 : vector<8xf32> to vector<8x1xf32>
    %270 = vector.broadcast %269 : vector<8x1xf32> to vector<8x8xf32>
    %271 = arith.subf %267, %270 : vector<8x8xf32>
    %272 = math.exp %271 : vector<8x8xf32>
    %cst_118 = arith.constant dense<0.000000e+00> : vector<8xf32>
    %273 = vector.multi_reduction <add>, %272, %cst_118 [1] : vector<8x8xf32> to vector<8xf32>
    %274 = vector.shape_cast %273 : vector<8xf32> to vector<8x1xf32>
    %275 = tpu.reciprocal %274 {approx = true} : vector<8x1xf32> -> vector<8x1xf32>
    %276 = vector.broadcast %275 : vector<8x1xf32> to vector<8x8xf32>
    %277 = arith.mulf %272, %276 : vector<8x8xf32>
    %cst_119 = arith.constant dense<0.000000e+00> : vector<8x8xf32>
    %278 = tpu.matmul %277, %262, %cst_119 {dimension_numbers = #tpu.dot_dimension_numbers<[1], [0], [0], [1], [0, 0, 1, 1], [], []>} : vector<8x8xf32>, vector<8x8xf32>, vector<8x8xf32> -> vector<8x8xf32>
    %279 = vector.extract_strided_slice %179 {offsets = [16, 0], sizes = [8, 32], strides = [1, 1]} : vector<32x32xf32> to vector<8x32xf32>
    %cst_120 = arith.constant dense<0.000000e+00> : vector<8x32xf32>
    %280 = tpu.matmul %278, %279, %cst_120 {dimension_numbers = #tpu.dot_dimension_numbers<[1], [0], [0], [1], [0, 0, 1, 1], [], []>} : vector<8x8xf32>, vector<8x32xf32>, vector<8x32xf32> -> vector<8x32xf32>
    %281 = arith.addf %259, %280 : vector<8x32xf32>
    %282 = vector.extract_strided_slice %214 {offsets = [0, 24], sizes = [8, 8], strides = [1, 1]} : vector<8x32xf32> to vector<8x8xf32>
    %283 = vector.extract_strided_slice %215 {offsets = [0, 24], sizes = [8, 8], strides = [1, 1]} : vector<8x32xf32> to vector<8x8xf32>
    %284 = vector.extract_strided_slice %216 {offsets = [0, 24], sizes = [8, 8], strides = [1, 1]} : vector<8x32xf32> to vector<8x8xf32>
    %cst_121 = arith.constant dense<0.000000e+00> : vector<8x8xf32>
    %285 = tpu.matmul %282, %283, %cst_121 {dimension_numbers = #tpu.dot_dimension_numbers<[1], [1], [0], [0], [0, 0, 1, 0], [], []>} : vector<8x8xf32>, vector<8x8xf32>, vector<8x8xf32> -> vector<8x8xf32>
    %cst_122 = arith.constant 0.353553385 : f32
    %286 = vector.broadcast %cst_122 : f32 to vector<8x8xf32>
    %287 = arith.mulf %285, %286 : vector<8x8xf32>
    %288 = vector.broadcast %1 : vector<1x8xf32> to vector<8x8xf32>
    %289 = arith.addf %287, %288 : vector<8x8xf32>
    %cst_123 = arith.constant dense<0xFF800000> : vector<8xf32>
    %290 = vector.multi_reduction <maximumf>, %289, %cst_123 [1] : vector<8x8xf32> to vector<8xf32>
    %291 = vector.shape_cast %290 : vector<8xf32> to vector<8x1xf32>
    %292 = vector.broadcast %291 : vector<8x1xf32> to vector<8x8xf32>
    %293 = arith.subf %289, %292 : vector<8x8xf32>
    %294 = math.exp %293 : vector<8x8xf32>
    %cst_124 = arith.constant dense<0.000000e+00> : vector<8xf32>
    %295 = vector.multi_reduction <add>, %294, %cst_124 [1] : vector<8x8xf32> to vector<8xf32>
    %296 = vector.shape_cast %295 : vector<8xf32> to vector<8x1xf32>
    %297 = tpu.reciprocal %296 {approx = true} : vector<8x1xf32> -> vector<8x1xf32>
    %298 = vector.broadcast %297 : vector<8x1xf32> to vector<8x8xf32>
    %299 = arith.mulf %294, %298 : vector<8x8xf32>
    %cst_125 = arith.constant dense<0.000000e+00> : vector<8x8xf32>
    %300 = tpu.matmul %299, %284, %cst_125 {dimension_numbers = #tpu.dot_dimension_numbers<[1], [0], [0], [1], [0, 0, 1, 1], [], []>} : vector<8x8xf32>, vector<8x8xf32>, vector<8x8xf32> -> vector<8x8xf32>
    %301 = vector.extract_strided_slice %179 {offsets = [24, 0], sizes = [8, 32], strides = [1, 1]} : vector<32x32xf32> to vector<8x32xf32>
    %cst_126 = arith.constant dense<0.000000e+00> : vector<8x32xf32>
    %302 = tpu.matmul %300, %301, %cst_126 {dimension_numbers = #tpu.dot_dimension_numbers<[1], [0], [0], [1], [0, 0, 1, 1], [], []>} : vector<8x8xf32>, vector<8x32xf32>, vector<8x32xf32> -> vector<8x32xf32>
    %303 = arith.addf %281, %302 : vector<8x32xf32>
    %304 = arith.addf %172, %303 : vector<8x32xf32>
    %305 = vector.broadcast %180 : vector<1x32xf32> to vector<8x32xf32>
    %306 = arith.addf %304, %305 : vector<8x32xf32>
    %cst_127 = arith.constant dense<0.000000e+00> : vector<8xf32>
    %307 = vector.multi_reduction <add>, %306, %cst_127 [1] : vector<8x32xf32> to vector<8xf32>
    %308 = vector.shape_cast %307 : vector<8xf32> to vector<8x1xf32>
    %cst_128 = arith.constant 3.200000e+01 : f32
    %309 = vector.broadcast %cst_128 : f32 to vector<8x1xf32>
    %310 = arith.divf %308, %309 : vector<8x1xf32>
    %311 = vector.broadcast %310 : vector<8x1xf32> to vector<8x32xf32>
    %312 = arith.subf %306, %311 : vector<8x32xf32>
    %313 = arith.mulf %312, %312 : vector<8x32xf32>
    %cst_129 = arith.constant dense<0.000000e+00> : vector<8xf32>
    %314 = vector.multi_reduction <add>, %313, %cst_129 [1] : vector<8x32xf32> to vector<8xf32>
    %315 = vector.shape_cast %314 : vector<8xf32> to vector<8x1xf32>
    %cst_130 = arith.constant 3.200000e+01 : f32
    %316 = vector.broadcast %cst_130 : f32 to vector<8x1xf32>
    %317 = arith.divf %315, %316 : vector<8x1xf32>
    %318 = vector.broadcast %310 : vector<8x1xf32> to vector<8x32xf32>
    %319 = arith.subf %306, %318 : vector<8x32xf32>
    %cst_131 = arith.constant 9.99999996E-13 : f32
    %320 = vector.broadcast %cst_131 : f32 to vector<8x1xf32>
    %321 = arith.addf %317, %320 : vector<8x1xf32>
    %322 = math.rsqrt %321 : vector<8x1xf32>
    %323 = vector.broadcast %322 : vector<8x1xf32> to vector<8x32xf32>
    %324 = arith.mulf %319, %323 : vector<8x32xf32>
    %325 = vector.broadcast %181 : vector<1x32xf32> to vector<8x32xf32>
    %326 = arith.mulf %324, %325 : vector<8x32xf32>
    %327 = vector.broadcast %182 : vector<1x32xf32> to vector<8x32xf32>
    %328 = arith.addf %326, %327 : vector<8x32xf32>
    %cst_132 = arith.constant dense<0.000000e+00> : vector<8x128xf32>
    %329 = tpu.matmul %328, %184, %cst_132 {dimension_numbers = #tpu.dot_dimension_numbers<[1], [0], [0], [1], [0, 0, 1, 1], [], []>} : vector<8x32xf32>, vector<32x128xf32>, vector<8x128xf32> -> vector<8x128xf32>
    %330 = vector.broadcast %185 : vector<1x128xf32> to vector<8x128xf32>
    %331 = arith.addf %329, %330 : vector<8x128xf32>
    %cst_133 = arith.constant 5.000000e-01 : f32
    %332 = vector.broadcast %cst_133 : f32 to vector<8x128xf32>
    %333 = arith.mulf %332, %331 : vector<8x128xf32>
    %cst_134 = arith.constant 0.707106769 : f32
    %334 = vector.broadcast %cst_134 : f32 to vector<8x128xf32>
    %335 = arith.mulf %331, %334 : vector<8x128xf32>
    %336 = math.erf %335 : vector<8x128xf32>
    %cst_135 = arith.constant 1.000000e+00 : f32
    %337 = vector.broadcast %cst_135 : f32 to vector<8x128xf32>
    %338 = arith.addf %337, %336 : vector<8x128xf32>
    %339 = arith.mulf %333, %338 : vector<8x128xf32>
    %cst_136 = arith.constant dense<0.000000e+00> : vector<8x32xf32>
    %340 = tpu.matmul %339, %187, %cst_136 {dimension_numbers = #tpu.dot_dimension_numbers<[1], [0], [0], [1], [0, 0, 1, 1], [], []>} : vector<8x128xf32>, vector<128x32xf32>, vector<8x32xf32> -> vector<8x32xf32>
    %341 = vector.broadcast %188 : vector<1x32xf32> to vector<8x32xf32>
    %342 = arith.addf %340, %341 : vector<8x32xf32>
    %343 = arith.addf %306, %342 : vector<8x32xf32>
    %344 = vector.extract_strided_slice %343 {offsets = [0, 0], sizes = [1, 32], strides = [1, 1]} : vector<8x32xf32> to vector<1x32xf32>
    %c0_137 = arith.constant 0 : index
    %c0_138 = arith.constant 0 : index
    %345 = vector.load %arg15[%c0_137, %c0_138] : memref<1x32xf32, #tpu.memory_space<vmem>>, vector<1x32xf32>
    %c0_139 = arith.constant 0 : index
    %c0_140 = arith.constant 0 : index
    %346 = vector.load %arg16[%c0_139, %c0_140] : memref<1x32xf32, #tpu.memory_space<vmem>>, vector<1x32xf32>
    %cst_141 = arith.constant dense<0.000000e+00> : vector<1xf32>
    %347 = vector.multi_reduction <add>, %344, %cst_141 [1] : vector<1x32xf32> to vector<1xf32>
    %348 = vector.shape_cast %347 : vector<1xf32> to vector<1x1xf32>
    %cst_142 = arith.constant 3.200000e+01 : f32
    %349 = vector.broadcast %cst_142 : f32 to vector<1x1xf32>
    %350 = arith.divf %348, %349 : vector<1x1xf32>
    %351 = vector.broadcast %350 : vector<1x1xf32> to vector<1x32xf32>
    %352 = arith.subf %344, %351 : vector<1x32xf32>
    %353 = arith.mulf %352, %352 : vector<1x32xf32>
    %cst_143 = arith.constant dense<0.000000e+00> : vector<1xf32>
    %354 = vector.multi_reduction <add>, %353, %cst_143 [1] : vector<1x32xf32> to vector<1xf32>
    %355 = vector.shape_cast %354 : vector<1xf32> to vector<1x1xf32>
    %cst_144 = arith.constant 3.200000e+01 : f32
    %356 = vector.broadcast %cst_144 : f32 to vector<1x1xf32>
    %357 = arith.divf %355, %356 : vector<1x1xf32>
    %358 = vector.broadcast %350 : vector<1x1xf32> to vector<1x32xf32>
    %359 = arith.subf %344, %358 : vector<1x32xf32>
    %cst_145 = arith.constant 9.99999996E-13 : f32
    %360 = vector.broadcast %cst_145 : f32 to vector<1x1xf32>
    %361 = arith.addf %357, %360 : vector<1x1xf32>
    %362 = math.rsqrt %361 : vector<1x1xf32>
    %363 = vector.broadcast %362 : vector<1x1xf32> to vector<1x32xf32>
    %364 = arith.mulf %359, %363 : vector<1x32xf32>
    %365 = arith.mulf %364, %345 : vector<1x32xf32>
    %366 = arith.addf %365, %346 : vector<1x32xf32>
    %c0_146 = arith.constant 0 : index
    %c0_147 = arith.constant 0 : index
    %367 = vector.load %arg17[%c0_146, %c0_147] : memref<32x128xf32, #tpu.memory_space<vmem>>, vector<32x128xf32>
    %cst_148 = arith.constant dense<0.000000e+00> : vector<1x128xf32>
    %368 = tpu.matmul %366, %367, %cst_148 {dimension_numbers = #tpu.dot_dimension_numbers<[1], [0], [0], [1], [0, 0, 1, 1], [], []>} : vector<1x32xf32>, vector<32x128xf32>, vector<1x128xf32> -> vector<1x128xf32>
    %c0_149 = arith.constant 0 : index
    %c0_150 = arith.constant 0 : index
    %369 = vector.load %arg18[%c0_149, %c0_150] : memref<1x128xf32, #tpu.memory_space<vmem>>, vector<1x128xf32>
    %370 = arith.addf %368, %369 : vector<1x128xf32>
    %371 = vector.shape_cast %370 : vector<1x128xf32> to vector<1x128xf32>
    %372 = vector.broadcast %371 : vector<1x128xf32> to vector<8x128xf32>
    %c0_151 = arith.constant 0 : index
    %c0_152 = arith.constant 0 : index
    %373 = vector.load %arg19[%c0_151, %c0_152] : memref<8x128xf32, #tpu.memory_space<vmem>>, vector<8x128xf32>
    tpu.vector_store %arg19[%c0_151, %c0_152], %372 {strides = array<i32>} : memref<8x128xf32, #tpu.memory_space<vmem>>, vector<8x128xf32>,
    return
  }
  func.func @transform_0(%arg0: i32) -> (i32, i32) {
    %c0_i32 = arith.constant 0 : i32
    %c0_i32_0 = arith.constant 0 : i32
    return %arg0, %c0_i32 : i32, i32
  }
  func.func @transform_1(%arg0: i32) -> (i32, i32) {
    %c0_i32 = arith.constant 0 : i32
    %c0_i32_0 = arith.constant 0 : i32
    %c0_i32_1 = arith.constant 0 : i32
    return %c0_i32, %c0_i32_0 : i32, i32
  }
  func.func @transform_2(%arg0: i32) -> (i32, i32) {
    %c0_i32 = arith.constant 0 : i32
    %c0_i32_0 = arith.constant 0 : i32
    %c0_i32_1 = arith.constant 0 : i32
    return %c0_i32, %c0_i32_0 : i32, i32
  }
  func.func @transform_3(%arg0: i32) -> (i32, i32) {
    %c0_i32 = arith.constant 0 : i32
    %c0_i32_0 = arith.constant 0 : i32
    %c0_i32_1 = arith.constant 0 : i32
    return %c0_i32, %c0_i32_0 : i32, i32
  }
  func.func @transform_4(%arg0: i32) -> (i32, i32, i32) {
    %c0_i32 = arith.constant 0 : i32
    %c0_i32_0 = arith.constant 0 : i32
    %c0_i32_1 = arith.constant 0 : i32
    %c0_i32_2 = arith.constant 0 : i32
    return %c0_i32, %c0_i32_0, %c0_i32_1 : i32, i32, i32
  }
  func.func @transform_5(%arg0: i32) -> (i32, i32) {
    %c0_i32 = arith.constant 0 : i32
    %c0_i32_0 = arith.constant 0 : i32
    %c0_i32_1 = arith.constant 0 : i32
    return %c0_i32, %c0_i32_0 : i32, i32
  }
  func.func @transform_6(%arg0: i32) -> (i32, i32, i32) {
    %c0_i32 = arith.constant 0 : i32
    %c0_i32_0 = arith.constant 0 : i32
    %c0_i32_1 = arith.constant 0 : i32
    %c0_i32_2 = arith.constant 0 : i32
    return %c0_i32, %c0_i32_0, %c0_i32_1 : i32, i32, i32
  }
  func.func @transform_7(%arg0: i32) -> (i32, i32) {
    %c0_i32 = arith.constant 0 : i32
    %c0_i32_0 = arith.constant 0 : i32
    %c0_i32_1 = arith.constant 0 : i32
    return %c0_i32, %c0_i32_0 : i32, i32
  }
  func.func @transform_8(%arg0: i32) -> (i32, i32) {
    %c0_i32 = arith.constant 0 : i32
    %c0_i32_0 = arith.constant 0 : i32
    %c0_i32_1 = arith.constant 0 : i32
    return %c0_i32, %c0_i32_0 : i32, i32
  }
  func.func @transform_9(%arg0: i32) -> (i32, i32) {
    %c0_i32 = arith.constant 0 : i32
    %c0_i32_0 = arith.constant 0 : i32
    %c0_i32_1 = arith.constant 0 : i32
    return %c0_i32, %c0_i32_0 : i32, i32
  }
  func.func @transform_10(%arg0: i32) -> (i32, i32, i32) {
    %c0_i32 = arith.constant 0 : i32
    %c0_i32_0 = arith.constant 0 : i32
    %c0_i32_1 = arith.constant 0 : i32
    %c0_i32_2 = arith.constant 0 : i32
    return %c0_i32, %c0_i32_0, %c0_i32_1 : i32, i32, i32
  }
  func.func @transform_11(%arg0: i32) -> (i32, i32) {
    %c0_i32 = arith.constant 0 : i32
    %c0_i32_0 = arith.constant 0 : i32
    %c0_i32_1 = arith.constant 0 : i32
    return %c0_i32, %c0_i32_0 : i32, i32
  }
  func.func @transform_12(%arg0: i32) -> (i32, i32, i32) {
    %c0_i32 = arith.constant 0 : i32
    %c0_i32_0 = arith.constant 0 : i32
    %c0_i32_1 = arith.constant 0 : i32
    %c0_i32_2 = arith.constant 0 : i32
    return %c0_i32, %c0_i32_0, %c0_i32_1 : i32, i32, i32
  }
  func.func @transform_13(%arg0: i32) -> (i32, i32) {
    %c0_i32 = arith.constant 0 : i32
    %c0_i32_0 = arith.constant 0 : i32
    %c0_i32_1 = arith.constant 0 : i32
    return %c0_i32, %c0_i32_0 : i32, i32
  }
  func.func @transform_14(%arg0: i32) -> (i32, i32) {
    %c0_i32 = arith.constant 0 : i32
    %c0_i32_0 = arith.constant 0 : i32
    %c0_i32_1 = arith.constant 0 : i32
    return %c0_i32, %c0_i32_0 : i32, i32
  }
  func.func @transform_15(%arg0: i32) -> (i32, i32) {
    %c0_i32 = arith.constant 0 : i32
    %c0_i32_0 = arith.constant 0 : i32
    %c0_i32_1 = arith.constant 0 : i32
    return %c0_i32, %c0_i32_0 : i32, i32
  }
  func.func @transform_16(%arg0: i32) -> (i32, i32) {
    %c0_i32 = arith.constant 0 : i32
    %c0_i32_0 = arith.constant 0 : i32
    %c0_i32_1 = arith.constant 0 : i32
    return %c0_i32, %c0_i32_0 : i32, i32
  }
  func.func @transform_17(%arg0: i32) -> (i32, i32) {
    %c0_i32 = arith.constant 0 : i32
    %c0_i32_0 = arith.constant 0 : i32
    %c0_i32_1 = arith.constant 0 : i32
    return %c0_i32, %c0_i32_0 : i32, i32
  }
  func.func @transform_18(%arg0: i32) -> (i32, i32) {
    %c0_i32 = arith.constant 0 : i32
    %c0_i32_0 = arith.constant 0 : i32
    return %arg0, %c0_i32 : i32, i32
  }
}

</mosaic_0001>

<llo_original>
// kernel: transformer_forward.1
$region0: #{transformer_forward.1}
  #allocation0 [shape = 'u32[]', space=smem, size = 0x4, offset = 0x4, fixed_abs, tag = 'smem constant byte address 0x4 - core index']
  #allocation1 [shape = 'u32[144,128]{1,0:T(1,128)}', space=vmem, size = 0x12000, scoped, tag = 'internal scratch']
  %s0 = inlined_call_operand.vmem [shape: f32[16,32], index: 0, kind: input, shape index: {}]
  %s1 = inlined_call_operand.vmem [shape: f32[1,8], index: 1, kind: input, shape index: {}]
  %s2 = inlined_call_operand.vmem [shape: f32[2,32], index: 2, kind: input, shape index: {}]
  %s3 = inlined_call_operand.vmem [shape: f32[2,32], index: 3, kind: input, shape index: {}]
  %s4 = inlined_call_operand.vmem [shape: f32[2,32,96], index: 4, kind: input, shape index: {}]
  %s5 = inlined_call_operand.vmem [shape: f32[2,96], index: 5, kind: input, shape index: {}]
  %s6 = inlined_call_operand.vmem [shape: f32[2,32,32], index: 6, kind: input, shape index: {}]
  %s7 = inlined_call_operand.vmem [shape: f32[2,32], index: 7, kind: input, shape index: {}]
  %s8 = inlined_call_operand.vmem [shape: f32[2,32], index: 8, kind: input, shape index: {}]
  %s9 = inlined_call_operand.vmem [shape: f32[2,32], index: 9, kind: input, shape index: {}]
  %s10 = inlined_call_operand.vmem [shape: f32[2,32,128], index: 10, kind: input, shape index: {}]
  %s11 = inlined_call_operand.vmem [shape: f32[2,128], index: 11, kind: input, shape index: {}]
  %s12 = inlined_call_operand.vmem [shape: f32[2,128,32], index: 12, kind: input, shape index: {}]
  %s13 = inlined_call_operand.vmem [shape: f32[2,32], index: 13, kind: input, shape index: {}]
  %s14 = inlined_call_operand.vmem [shape: f32[1,32], index: 14, kind: input, shape index: {}]
  %s15 = inlined_call_operand.vmem [shape: f32[1,32], index: 15, kind: input, shape index: {}]
  %s16 = inlined_call_operand.vmem [shape: f32[32,128], index: 16, kind: input, shape index: {}]
  %s17 = inlined_call_operand.vmem [shape: f32[1,128], index: 17, kind: input, shape index: {}]
  %s18 = inlined_call_operand.vmem [shape: f32[16,128], index: 18, kind: output, shape index: {}]
  %s19 = sld [smem:[#allocation0]]
  $region105: #{transformer_forward.1} parent=0
    _
  %s21 = ssub.s32 1, %s19
  %s22 = scalar_select 0, %s21, %s19
  loop: start=0, step=1, limit=4
  $region2: #{transformer_forward.1} parent=0 // loop_pre_header
    _
  $region3: #{transformer_forward.1} parent=0 // loop_header
    %s24 = sphi 0, %s28
    %p25 = scmp.ge.s32.totalorder %s24, 4
    %s34 = sphi 0, %s36
    %s37 = sphi 0, %s34
    %s38 = sphi 0, %s37
    %s54 = sphi 0, %s38
    %s58 = sphi 0, %s58
    %s60 = sphi 0, %s58
    %s61 = sphi 0, %s60
    %s75 = sphi 0, %s61
    %s79 = sphi 0, %s79
    %s81 = sphi 0, %s79
    %s82 = sphi 0, %s81
    %s96 = sphi 0, %s82
    %s100 = sphi 0, %s100
    %s102 = sphi 0, %s100
    %s103 = sphi 0, %s102
    %s117 = sphi 0, %s103
    %s121 = sphi 0, %s121
    %s123 = sphi 0, %s121
    %s124 = sphi 0, %s123
    %s138 = sphi 0, %s124
    %s142 = sphi 0, %s142
    %s144 = sphi 0, %s142
    %s145 = sphi 0, %s144
    %s159 = sphi 0, %s145
    %s163 = sphi 0, %s163
    %s165 = sphi 0, %s163
    %s166 = sphi 0, %s165
    %s180 = sphi 0, %s166
    %s184 = sphi 0, %s184
    %s186 = sphi 0, %s184
    %s187 = sphi 0, %s186
    %s201 = sphi 0, %s187
    %s205 = sphi 0, %s205
    %s207 = sphi 0, %s205
    %s208 = sphi 0, %s207
    %s222 = sphi 0, %s208
    %s226 = sphi 0, %s226
    %s228 = sphi 0, %s226
    %s229 = sphi 0, %s228
    %s243 = sphi 0, %s229
    %s247 = sphi 0, %s247
    %s249 = sphi 0, %s247
    %s250 = sphi 0, %s249
    %s264 = sphi 0, %s250
    %s268 = sphi 0, %s268
    %s270 = sphi 0, %s268
    %s271 = sphi 0, %s270
    %s285 = sphi 0, %s271
    %s289 = sphi 0, %s289
    %s291 = sphi 0, %s289
    %s292 = sphi 0, %s291
    %s306 = sphi 0, %s292
    %s310 = sphi 0, %s310
    %s312 = sphi 0, %s310
    %s313 = sphi 0, %s312
    %s327 = sphi 0, %s313
    %s331 = sphi 0, %s331
    %s333 = sphi 0, %s331
    %s334 = sphi 0, %s333
    %s348 = sphi 0, %s334
    %s352 = sphi 0, %s352
    %s354 = sphi 0, %s352
    %s355 = sphi 0, %s354
    %s369 = sphi 0, %s355
    %s373 = sphi 0, %s373
    %s375 = sphi 0, %s373
    %s376 = sphi 0, %s375
    %s390 = sphi 0, %s376
    %s394 = sphi 0, %s394
    %s396 = sphi 0, %s394
    %s397 = sphi 0, %s396
    %s411 = sphi 0, %s397
    %s417 = sphi 0, %s419
    %s420 = sphi 0, %s417
    %s421 = sphi 0, %s420
    %s437 = sphi 0, %s421
  $region4: #{transformer_forward.1} parent=0 // loop_header_branch
    %27 = sbr.rel (%p25) target = $region8
  $region5: #{transformer_forward.1} parent=0 // loop_body
    %s29 = ssub.s32 %s24, 1
    %s30 = ssub.s32 %s24, 2
    %s31 = sadd.s32 %s24, 1
    %s32 = ssub.s32 %s24, %s31
    %p33 = scmp.eq.s32.totalorder %s32, 0
    %s35 = sadd.s32 %s34, 1
    %s36 = scalar_select %p33, %s34, %s35
    %p39 = pneg %p33
    %p40 = scmp.eq.s32.totalorder %s24, 1
    %p41 = por %p39, %p40
    %p42 = scmp.ne.s32.totalorder %s34, %s37
    %p43 = scmp.eq.s32.totalorder %s24, 0
    %p44 = por %p42, %p43
    %p45 = scmp.ne.s32.totalorder %s34, %s37
    %p46 = scmp.eq.s32.totalorder %s29, 1
    %p47 = por %p45, %p46
    %p48 = scmp.ne.s32.totalorder %s37, %s38
    %p49 = scmp.eq.s32.totalorder %s29, 0
    %p50 = por %p48, %p49
    %p51 = scmp.ne.s32.totalorder %s37, %s38
    %p52 = scmp.eq.s32.totalorder %s30, 1
    %p53 = por %p51, %p52
    %p55 = scmp.ne.s32.totalorder %s38, %s54
    %p56 = scmp.eq.s32.totalorder %s30, 0
    %p57 = por %p55, %p56
    %s59 = sadd.s32 %s58, 1
    %p62 = scmp.eq.s32.totalorder %s24, 1
    %p63 = scmp.ne.s32.totalorder %s58, %s60
    %p64 = scmp.eq.s32.totalorder %s24, 0
    %p65 = por %p63, %p64
    %p66 = scmp.ne.s32.totalorder %s58, %s60
    %p67 = scmp.eq.s32.totalorder %s29, 1
    %p68 = por %p66, %p67
    %p69 = scmp.ne.s32.totalorder %s60, %s61
    %p70 = scmp.eq.s32.totalorder %s29, 0
    %p71 = por %p69, %p70
    %p72 = scmp.ne.s32.totalorder %s60, %s61
    %p73 = scmp.eq.s32.totalorder %s30, 1
    %p74 = por %p72, %p73
    %p76 = scmp.ne.s32.totalorder %s61, %s75
    %p77 = scmp.eq.s32.totalorder %s30, 0
    %p78 = por %p76, %p77
    %s80 = sadd.s32 %s79, 1
    %p83 = scmp.eq.s32.totalorder %s24, 1
    %p84 = scmp.ne.s32.totalorder %s79, %s81
    %p85 = scmp.eq.s32.totalorder %s24, 0
    %p86 = por %p84, %p85
    %p87 = scmp.ne.s32.totalorder %s79, %s81
    %p88 = scmp.eq.s32.totalorder %s29, 1
    %p89 = por %p87, %p88
    %p90 = scmp.ne.s32.totalorder %s81, %s82
    %p91 = scmp.eq.s32.totalorder %s29, 0
    %p92 = por %p90, %p91
    %p93 = scmp.ne.s32.totalorder %s81, %s82
    %p94 = scmp.eq.s32.totalorder %s30, 1
    %p95 = por %p93, %p94
    %p97 = scmp.ne.s32.totalorder %s82, %s96
    %p98 = scmp.eq.s32.totalorder %s30, 0
    %p99 = por %p97, %p98
    %s101 = sadd.s32 %s100, 1
    %p104 = scmp.eq.s32.totalorder %s24, 1
    %p105 = scmp.ne.s32.totalorder %s100, %s102
    %p106 = scmp.eq.s32.totalorder %s24, 0
    %p107 = por %p105, %p106
    %p108 = scmp.ne.s32.totalorder %s100, %s102
    %p109 = scmp.eq.s32.totalorder %s29, 1
    %p110 = por %p108, %p109
    %p111 = scmp.ne.s32.totalorder %s102, %s103
    %p112 = scmp.eq.s32.totalorder %s29, 0
    %p113 = por %p111, %p112
    %p114 = scmp.ne.s32.totalorder %s102, %s103
    %p115 = scmp.eq.s32.totalorder %s30, 1
    %p116 = por %p114, %p115
    %p118 = scmp.ne.s32.totalorder %s103, %s117
    %p119 = scmp.eq.s32.totalorder %s30, 0
    %p120 = por %p118, %p119
    %s122 = sadd.s32 %s121, 1
    %p125 = scmp.eq.s32.totalorder %s24, 1
    %p126 = scmp.ne.s32.totalorder %s121, %s123
    %p127 = scmp.eq.s32.totalorder %s24, 0
    %p128 = por %p126, %p127
    %p129 = scmp.ne.s32.totalorder %s121, %s123
    %p130 = scmp.eq.s32.totalorder %s29, 1
    %p131 = por %p129, %p130
    %p132 = scmp.ne.s32.totalorder %s123, %s124
    %p133 = scmp.eq.s32.totalorder %s29, 0
    %p134 = por %p132, %p133
    %p135 = scmp.ne.s32.totalorder %s123, %s124
    %p136 = scmp.eq.s32.totalorder %s30, 1
    %p137 = por %p135, %p136
    %p139 = scmp.ne.s32.totalorder %s124, %s138
    %p140 = scmp.eq.s32.totalorder %s30, 0
    %p141 = por %p139, %p140
    %s143 = sadd.s32 %s142, 1
    %p146 = scmp.eq.s32.totalorder %s24, 1
    %p147 = scmp.ne.s32.totalorder %s142, %s144
    %p148 = scmp.eq.s32.totalorder %s24, 0
    %p149 = por %p147, %p148
    %p150 = scmp.ne.s32.totalorder %s142, %s144
    %p151 = scmp.eq.s32.totalorder %s29, 1
    %p152 = por %p150, %p151
    %p153 = scmp.ne.s32.totalorder %s144, %s145
    %p154 = scmp.eq.s32.totalorder %s29, 0
    %p155 = por %p153, %p154
    %p156 = scmp.ne.s32.totalorder %s144, %s145
    %p157 = scmp.eq.s32.totalorder %s30, 1
    %p158 = por %p156, %p157
    %p160 = scmp.ne.s32.totalorder %s145, %s159
    %p161 = scmp.eq.s32.totalorder %s30, 0
    %p162 = por %p160, %p161
    %s164 = sadd.s32 %s163, 1
    %p167 = scmp.eq.s32.totalorder %s24, 1
    %p168 = scmp.ne.s32.totalorder %s163, %s165
    %p169 = scmp.eq.s32.totalorder %s24, 0
    %p170 = por %p168, %p169
    %p171 = scmp.ne.s32.totalorder %s163, %s165
    %p172 = scmp.eq.s32.totalorder %s29, 1
    %p173 = por %p171, %p172
    %p174 = scmp.ne.s32.totalorder %s165, %s166
    %p175 = scmp.eq.s32.totalorder %s29, 0
    %p176 = por %p174, %p175
    %p177 = scmp.ne.s32.totalorder %s165, %s166
    %p178 = scmp.eq.s32.totalorder %s30, 1
    %p179 = por %p177, %p178
    %p181 = scmp.ne.s32.totalorder %s166, %s180
    %p182 = scmp.eq.s32.totalorder %s30, 0
    %p183 = por %p181, %p182
    %s185 = sadd.s32 %s184, 1
    %p188 = scmp.eq.s32.totalorder %s24, 1
    %p189 = scmp.ne.s32.totalorder %s184, %s186
    %p190 = scmp.eq.s32.totalorder %s24, 0
    %p191 = por %p189, %p190
    %p192 = scmp.ne.s32.totalorder %s184, %s186
    %p193 = scmp.eq.s32.totalorder %s29, 1
    %p194 = por %p192, %p193
    %p195 = scmp.ne.s32.totalorder %s186, %s187
    %p196 = scmp.eq.s32.totalorder %s29, 0
    %p197 = por %p195, %p196
    %p198 = scmp.ne.s32.totalorder %s186, %s187
    %p199 = scmp.eq.s32.totalorder %s30, 1
    %p200 = por %p198, %p199
    %p202 = scmp.ne.s32.totalorder %s187, %s201
    %p203 = scmp.eq.s32.totalorder %s30, 0
    %p204 = por %p202, %p203
    %s206 = sadd.s32 %s205, 1
    %p209 = scmp.eq.s32.totalorder %s24, 1
    %p210 = scmp.ne.s32.totalorder %s205, %s207
    %p211 = scmp.eq.s32.totalorder %s24, 0
    %p212 = por %p210, %p211
    %p213 = scmp.ne.s32.totalorder %s205, %s207
    %p214 = scmp.eq.s32.totalorder %s29, 1
    %p215 = por %p213, %p214
    %p216 = scmp.ne.s32.totalorder %s207, %s208
    %p217 = scmp.eq.s32.totalorder %s29, 0
    %p218 = por %p216, %p217
    %p219 = scmp.ne.s32.totalorder %s207, %s208
    %p220 = scmp.eq.s32.totalorder %s30, 1
    %p221 = por %p219, %p220
    %p223 = scmp.ne.s32.totalorder %s208, %s222
    %p224 = scmp.eq.s32.totalorder %s30, 0
    %p225 = por %p223, %p224
    %s227 = sadd.s32 %s226, 1
    %p230 = scmp.eq.s32.totalorder %s24, 1
    %p231 = scmp.ne.s32.totalorder %s226, %s228
    %p232 = scmp.eq.s32.totalorder %s24, 0
    %p233 = por %p231, %p232
    %p234 = scmp.ne.s32.totalorder %s226, %s228
    %p235 = scmp.eq.s32.totalorder %s29, 1
    %p236 = por %p234, %p235
    %p237 = scmp.ne.s32.totalorder %s228, %s229
    %p238 = scmp.eq.s32.totalorder %s29, 0
    %p239 = por %p237, %p238
    %p240 = scmp.ne.s32.totalorder %s228, %s229
    %p241 = scmp.eq.s32.totalorder %s30, 1
    %p242 = por %p240, %p241
    %p244 = scmp.ne.s32.totalorder %s229, %s243
    %p245 = scmp.eq.s32.totalorder %s30, 0
    %p246 = por %p244, %p245
    %s248 = sadd.s32 %s247, 1
    %p251 = scmp.eq.s32.totalorder %s24, 1
    %p252 = scmp.ne.s32.totalorder %s247, %s249
    %p253 = scmp.eq.s32.totalorder %s24, 0
    %p254 = por %p252, %p253
    %p255 = scmp.ne.s32.totalorder %s247, %s249
    %p256 = scmp.eq.s32.totalorder %s29, 1
    %p257 = por %p255, %p256
    %p258 = scmp.ne.s32.totalorder %s249, %s250
    %p259 = scmp.eq.s32.totalorder %s29, 0
    %p260 = por %p258, %p259
    %p261 = scmp.ne.s32.totalorder %s249, %s250
    %p262 = scmp.eq.s32.totalorder %s30, 1
    %p263 = por %p261, %p262
    %p265 = scmp.ne.s32.totalorder %s250, %s264
    %p266 = scmp.eq.s32.totalorder %s30, 0
    %p267 = por %p265, %p266
    %s269 = sadd.s32 %s268, 1
    %p272 = scmp.eq.s32.totalorder %s24, 1
    %p273 = scmp.ne.s32.totalorder %s268, %s270
    %p274 = scmp.eq.s32.totalorder %s24, 0
    %p275 = por %p273, %p274
    %p276 = scmp.ne.s32.totalorder %s268, %s270
    %p277 = scmp.eq.s32.totalorder %s29, 1
    %p278 = por %p276, %p277
    %p279 = scmp.ne.s32.totalorder %s270, %s271
    %p280 = scmp.eq.s32.totalorder %s29, 0
    %p281 = por %p279, %p280
    %p282 = scmp.ne.s32.totalorder %s270, %s271
    %p283 = scmp.eq.s32.totalorder %s30, 1
    %p284 = por %p282, %p283
    %p286 = scmp.ne.s32.totalorder %s271, %s285
    %p287 = scmp.eq.s32.totalorder %s30, 0
    %p288 = por %p286, %p287
    %s290 = sadd.s32 %s289, 1
    %p293 = scmp.eq.s32.totalorder %s24, 1
    %p294 = scmp.ne.s32.totalorder %s289, %s291
    %p295 = scmp.eq.s32.totalorder %s24, 0
    %p296 = por %p294, %p295
    %p297 = scmp.ne.s32.totalorder %s289, %s291
    %p298 = scmp.eq.s32.totalorder %s29, 1
    %p299 = por %p297, %p298
    %p300 = scmp.ne.s32.totalorder %s291, %s292
    %p301 = scmp.eq.s32.totalorder %s29, 0
    %p302 = por %p300, %p301
    %p303 = scmp.ne.s32.totalorder %s291, %s292
    %p304 = scmp.eq.s32.totalorder %s30, 1
    %p305 = por %p303, %p304
    %p307 = scmp.ne.s32.totalorder %s292, %s306
    %p308 = scmp.eq.s32.totalorder %s30, 0
    %p309 = por %p307, %p308
    %s311 = sadd.s32 %s310, 1
    %p314 = scmp.eq.s32.totalorder %s24, 1
    %p315 = scmp.ne.s32.totalorder %s310, %s312
    %p316 = scmp.eq.s32.totalorder %s24, 0
    %p317 = por %p315, %p316
    %p318 = scmp.ne.s32.totalorder %s310, %s312
    %p319 = scmp.eq.s32.totalorder %s29, 1
    %p320 = por %p318, %p319
    %p321 = scmp.ne.s32.totalorder %s312, %s313
    %p322 = scmp.eq.s32.totalorder %s29, 0
    %p323 = por %p321, %p322
    %p324 = scmp.ne.s32.totalorder %s312, %s313
    %p325 = scmp.eq.s32.totalorder %s30, 1
    %p326 = por %p324, %p325
    %p328 = scmp.ne.s32.totalorder %s313, %s327
    %p329 = scmp.eq.s32.totalorder %s30, 0
    %p330 = por %p328, %p329
    %s332 = sadd.s32 %s331, 1
    %p335 = scmp.eq.s32.totalorder %s24, 1
    %p336 = scmp.ne.s32.totalorder %s331, %s333
    %p337 = scmp.eq.s32.totalorder %s24, 0
    %p338 = por %p336, %p337
    %p339 = scmp.ne.s32.totalorder %s331, %s333
    %p340 = scmp.eq.s32.totalorder %s29, 1
    %p341 = por %p339, %p340
    %p342 = scmp.ne.s32.totalorder %s333, %s334
    %p343 = scmp.eq.s32.totalorder %s29, 0
    %p344 = por %p342, %p343
    %p345 = scmp.ne.s32.totalorder %s333, %s334
    %p346 = scmp.eq.s32.totalorder %s30, 1
    %p347 = por %p345, %p346
    %p349 = scmp.ne.s32.totalorder %s334, %s348
    %p350 = scmp.eq.s32.totalorder %s30, 0
    %p351 = por %p349, %p350
    %s353 = sadd.s32 %s352, 1
    %p356 = scmp.eq.s32.totalorder %s24, 1
    %p357 = scmp.ne.s32.totalorder %s352, %s354
    %p358 = scmp.eq.s32.totalorder %s24, 0
    %p359 = por %p357, %p358
    %p360 = scmp.ne.s32.totalorder %s352, %s354
    %p361 = scmp.eq.s32.totalorder %s29, 1
    %p362 = por %p360, %p361
    %p363 = scmp.ne.s32.totalorder %s354, %s355
    %p364 = scmp.eq.s32.totalorder %s29, 0
    %p365 = por %p363, %p364
    %p366 = scmp.ne.s32.totalorder %s354, %s355
    %p367 = scmp.eq.s32.totalorder %s30, 1
    %p368 = por %p366, %p367
    %p370 = scmp.ne.s32.totalorder %s355, %s369
    %p371 = scmp.eq.s32.totalorder %s30, 0
    %p372 = por %p370, %p371
    %s374 = sadd.s32 %s373, 1
    %p377 = scmp.eq.s32.totalorder %s24, 1
    %p378 = scmp.ne.s32.totalorder %s373, %s375
    %p379 = scmp.eq.s32.totalorder %s24, 0
    %p380 = por %p378, %p379
    %p381 = scmp.ne.s32.totalorder %s373, %s375
    %p382 = scmp.eq.s32.totalorder %s29, 1
    %p383 = por %p381, %p382
    %p384 = scmp.ne.s32.totalorder %s375, %s376
    %p385 = scmp.eq.s32.totalorder %s29, 0
    %p386 = por %p384, %p385
    %p387 = scmp.ne.s32.totalorder %s375, %s376
    %p388 = scmp.eq.s32.totalorder %s30, 1
    %p389 = por %p387, %p388
    %p391 = scmp.ne.s32.totalorder %s376, %s390
    %p392 = scmp.eq.s32.totalorder %s30, 0
    %p393 = por %p391, %p392
    %s395 = sadd.s32 %s394, 1
    %p398 = scmp.eq.s32.totalorder %s24, 1
    %p399 = scmp.ne.s32.totalorder %s394, %s396
    %p400 = scmp.eq.s32.totalorder %s24, 0
    %p401 = por %p399, %p400
    %p402 = scmp.ne.s32.totalorder %s394, %s396
    %p403 = scmp.eq.s32.totalorder %s29, 1
    %p404 = por %p402, %p403
    %p405 = scmp.ne.s32.totalorder %s396, %s397
    %p406 = scmp.eq.s32.totalorder %s29, 0
    %p407 = por %p405, %p406
    %p408 = scmp.ne.s32.totalorder %s396, %s397
    %p409 = scmp.eq.s32.totalorder %s30, 1
    %p410 = por %p408, %p409
    %p412 = scmp.ne.s32.totalorder %s397, %s411
    %p413 = scmp.eq.s32.totalorder %s30, 0
    %p414 = por %p412, %p413
    %s415 = ssub.s32 %s24, %s31
    %p416 = scmp.eq.s32.totalorder %s415, 0
    %s418 = sadd.s32 %s417, 1
    %s419 = scalar_select %p416, %s417, %s418
    %p422 = pneg %p416
    %p423 = scmp.eq.s32.totalorder %s24, 1
    %p424 = por %p422, %p423
    %p425 = scmp.ne.s32.totalorder %s417, %s420
    %p426 = scmp.eq.s32.totalorder %s24, 0
    %p427 = por %p425, %p426
    %p428 = scmp.ne.s32.totalorder %s417, %s420
    %p429 = scmp.eq.s32.totalorder %s29, 1
    %p430 = por %p428, %p429
    %p431 = scmp.ne.s32.totalorder %s420, %s421
    %p432 = scmp.eq.s32.totalorder %s29, 0
    %p433 = por %p431, %p432
    %p434 = scmp.ne.s32.totalorder %s420, %s421
    %p435 = scmp.eq.s32.totalorder %s30, 1
    %p436 = por %p434, %p435
    %p438 = scmp.ne.s32.totalorder %s421, %s437
    %p439 = scmp.eq.s32.totalorder %s30, 0
    %p440 = por %p438, %p439
    %p441 = scmp.le.s32.totalorder 1, %s24
    %p442 = scmp.lt.s32.totalorder %s24, 3
    %p443 = pnand %p441, %p442
    %p444 = pneg %p443
    // Predicated region
    $region9: #{transformer_forward.1} parent=5 // pred_check
      _
    $region10: #{transformer_forward.1} parent=5 // pred_check_branch
      %446 = sbr.rel (%p443) target = $region12
    $region11: #{transformer_forward.1} parent=5 // pred_region
      %s447 = ssub.s32 %s24, 1
      // Predicated region
      $region13: #{transformer_forward.1} parent=11 // pred_check
        %p448 = pneg %p71
      $region14: #{transformer_forward.1} parent=11 // pred_check_branch
        %450 = sbr.rel (%p448) target = $region16
      $region15: #{transformer_forward.1} parent=11 // pred_region
        _
      $region16: #{transformer_forward.1} parent=11 // pred_fallthru
        _
      // Predicated region
      $region17: #{transformer_forward.1} parent=11 // pred_check
        %p451 = pneg %p92
      $region18: #{transformer_forward.1} parent=11 // pred_check_branch
        %453 = sbr.rel (%p451) target = $region20
      $region19: #{transformer_forward.1} parent=11 // pred_region
        _
      $region20: #{transformer_forward.1} parent=11 // pred_fallthru
        _
      // Predicated region
      $region21: #{transformer_forward.1} parent=11 // pred_check
        %p454 = pneg %p113
      $region22: #{transformer_forward.1} parent=11 // pred_check_branch
        %456 = sbr.rel (%p454) target = $region24
      $region23: #{transformer_forward.1} parent=11 // pred_region
        _
      $region24: #{transformer_forward.1} parent=11 // pred_fallthru
        _
      // Predicated region
      $region25: #{transformer_forward.1} parent=11 // pred_check
        %p457 = pneg %p134
      $region26: #{transformer_forward.1} parent=11 // pred_check_branch
        %459 = sbr.rel (%p457) target = $region28
      $region27: #{transformer_forward.1} parent=11 // pred_region
        _
      $region28: #{transformer_forward.1} parent=11 // pred_fallthru
        _
      // Predicated region
      $region29: #{transformer_forward.1} parent=11 // pred_check
        %p460 = pneg %p155
      $region30: #{transformer_forward.1} parent=11 // pred_check_branch
        %462 = sbr.rel (%p460) target = $region32
      $region31: #{transformer_forward.1} parent=11 // pred_region
        _
      $region32: #{transformer_forward.1} parent=11 // pred_fallthru
        _
      // Predicated region
      $region33: #{transformer_forward.1} parent=11 // pred_check
        %p463 = pneg %p176
      $region34: #{transformer_forward.1} parent=11 // pred_check_branch
        %465 = sbr.rel (%p463) target = $region36
      $region35: #{transformer_forward.1} parent=11 // pred_region
        _
      $region36: #{transformer_forward.1} parent=11 // pred_fallthru
        _
      // Predicated region
      $region37: #{transformer_forward.1} parent=11 // pred_check
        %p466 = pneg %p197
      $region38: #{transformer_forward.1} parent=11 // pred_check_branch
        %468 = sbr.rel (%p466) target = $region40
      $region39: #{transformer_forward.1} parent=11 // pred_region
        _
      $region40: #{transformer_forward.1} parent=11 // pred_fallthru
        _
      // Predicated region
      $region41: #{transformer_forward.1} parent=11 // pred_check
        %p469 = pneg %p218
      $region42: #{transformer_forward.1} parent=11 // pred_check_branch
        %471 = sbr.rel (%p469) target = $region44
      $region43: #{transformer_forward.1} parent=11 // pred_region
        _
      $region44: #{transformer_forward.1} parent=11 // pred_fallthru
        _
      // Predicated region
      $region45: #{transformer_forward.1} parent=11 // pred_check
        %p472 = pneg %p239
      $region46: #{transformer_forward.1} parent=11 // pred_check_branch
        %474 = sbr.rel (%p472) target = $region48
      $region47: #{transformer_forward.1} parent=11 // pred_region
        _
      $region48: #{transformer_forward.1} parent=11 // pred_fallthru
        _
      // Predicated region
      $region49: #{transformer_forward.1} parent=11 // pred_check
        %p475 = pneg %p260
      $region50: #{transformer_forward.1} parent=11 // pred_check_branch
        %477 = sbr.rel (%p475) target = $region52
      $region51: #{transformer_forward.1} parent=11 // pred_region
        _
      $region52: #{transformer_forward.1} parent=11 // pred_fallthru
        _
      // Predicated region
      $region53: #{transformer_forward.1} parent=11 // pred_check
        %p478 = pneg %p281
      $region54: #{transformer_forward.1} parent=11 // pred_check_branch
        %480 = sbr.rel (%p478) target = $region56
      $region55: #{transformer_forward.1} parent=11 // pred_region
        _
      $region56: #{transformer_forward.1} parent=11 // pred_fallthru
        _
      // Predicated region
      $region57: #{transformer_forward.1} parent=11 // pred_check
        %p481 = pneg %p302
      $region58: #{transformer_forward.1} parent=11 // pred_check_branch
        %483 = sbr.rel (%p481) target = $region60
      $region59: #{transformer_forward.1} parent=11 // pred_region
        _
      $region60: #{transformer_forward.1} parent=11 // pred_fallthru
        _
      // Predicated region
      $region61: #{transformer_forward.1} parent=11 // pred_check
        %p484 = pneg %p323
      $region62: #{transformer_forward.1} parent=11 // pred_check_branch
        %486 = sbr.rel (%p484) target = $region64
      $region63: #{transformer_forward.1} parent=11 // pred_region
        _
      $region64: #{transformer_forward.1} parent=11 // pred_fallthru
        _
      // Predicated region
      $region65: #{transformer_forward.1} parent=11 // pred_check
        %p487 = pneg %p344
      $region66: #{transformer_forward.1} parent=11 // pred_check_branch
        %489 = sbr.rel (%p487) target = $region68
      $region67: #{transformer_forward.1} parent=11 // pred_region
        _
      $region68: #{transformer_forward.1} parent=11 // pred_fallthru
        _
      // Predicated region
      $region69: #{transformer_forward.1} parent=11 // pred_check
        %p490 = pneg %p365
      $region70: #{transformer_forward.1} parent=11 // pred_check_branch
        %492 = sbr.rel (%p490) target = $region72
      $region71: #{transformer_forward.1} parent=11 // pred_region
        _
      $region72: #{transformer_forward.1} parent=11 // pred_fallthru
        _
      // Predicated region
      $region73: #{transformer_forward.1} parent=11 // pred_check
        %p493 = pneg %p386
      $region74: #{transformer_forward.1} parent=11 // pred_check_branch
        %495 = sbr.rel (%p493) target = $region76
      $region75: #{transformer_forward.1} parent=11 // pred_region
        _
      $region76: #{transformer_forward.1} parent=11 // pred_fallthru
        _
      // Predicated region
      $region77: #{transformer_forward.1} parent=11 // pred_check
        %p496 = pneg %p407
      $region78: #{transformer_forward.1} parent=11 // pred_check_branch
        %498 = sbr.rel (%p496) target = $region80
      $region79: #{transformer_forward.1} parent=11 // pred_region
        _
      $region80: #{transformer_forward.1} parent=11 // pred_fallthru
        _
    $region12: #{transformer_forward.1} parent=5 // pred_fallthru
      _
    %p499 = scmp.lt.s32.totalorder %s24, 2
    // Predicated region
    $region81: #{transformer_forward.1} parent=5 // pred_check
      %p500 = pneg %p499
    $region82: #{transformer_forward.1} parent=5 // pred_check_branch
      %502 = sbr.rel (%p500) target = $region84
    $region83: #{transformer_forward.1} parent=5 // pred_region
      // Predicated region
      $region85: #{transformer_forward.1} parent=83 // pred_check
        %p503 = pneg %p44
      $region86: #{transformer_forward.1} parent=83 // pred_check_branch
        %505 = sbr.rel (%p503) target = $region88
      $region87: #{transformer_forward.1} parent=83 // pred_region
        %p506 = scmp.lt.s32.totalorder %s24, 1
        %s507 = scalar_select %p506, %s24, 1
        %s508 = smul.addr %s507, 8
        %s509 = scalar_lea.vmem %s0, %s508
      $region88: #{transformer_forward.1} parent=83 // pred_fallthru
        _
    $region84: #{transformer_forward.1} parent=5 // pred_fallthru
      _
    %p510 = scmp.le.s32.totalorder 1, %s24
    %p511 = scmp.lt.s32.totalorder %s24, 3
    %p512 = pnand %p510, %p511
    %p513 = pneg %p512
    // Predicated region
    $region89: #{transformer_forward.1} parent=5 // pred_check
      _
    $region90: #{transformer_forward.1} parent=5 // pred_check_branch
      %515 = sbr.rel (%p512) target = $region92
    $region91: #{transformer_forward.1} parent=5 // pred_region
      %s516 = ssub.s32 %s24, 1
      %p517 = scmp.lt.s32.totalorder %s29, 1
      %s518 = scalar_select %p517, %s29, 1
      %s519 = smul.addr %s518, 8
      %s520 = scalar_lea.vmem %s0, %s519
      %p521 = pneg %p50
      %p522 = pneg %p47
      %p523 = pneg %p71
      %p524 = pneg %p68
      %p525 = pneg %p92
      %p526 = pneg %p89
      %p527 = pneg %p113
      %p528 = pneg %p110
      %p529 = pneg %p134
      %p530 = pneg %p131
      %p531 = pneg %p155
      %p532 = pneg %p152
      %p533 = pneg %p176
      %p534 = pneg %p173
      %p535 = pneg %p197
      %p536 = pneg %p194
      %p537 = pneg %p218
      %p538 = pneg %p215
      %p539 = pneg %p239
      %p540 = pneg %p236
      %p541 = pneg %p260
      %p542 = pneg %p257
      %p543 = pneg %p281
      %p544 = pneg %p278
      %p545 = pneg %p302
      %p546 = pneg %p299
      %p547 = pneg %p323
      %p548 = pneg %p320
      %p549 = pneg %p344
      %p550 = pneg %p341
      %p551 = pneg %p365
      %p552 = pneg %p362
      %p553 = pneg %p386
      %p554 = pneg %p383
      %p555 = pneg %p407
      %p556 = pneg %p404
      %p557 = pneg %p433
      %p558 = pneg %p430
      %p559 = scmp.lt.s32.totalorder %s29, 1
      %s560 = scalar_select %p559, %s29, 1
      %s561 = smul.addr %s560, 8
      %s562 = scalar_lea.vmem %s18, %s561
      %p563 = scmp.lt.s32.totalorder %s29, 1
      %s564 = scalar_select %p563, %s29, 1
      %s565 = smul.addr %s564, 8
      %s566 = scalar_lea.vmem %s0, %s565
      %p567 = scmp.lt.s32.totalorder %s29, 1
      %s568 = scalar_select %p567, %s29, 1
      %s569 = smul.addr %s568, 8
      %s570 = scalar_lea.vmem %s18, %s569
      %v571 = vld [vmem:[%s566] sm:$0xff]
      %v572 = vld [vmem:[%s1] sm:$0x1]
      %v573 = vld [vmem:[%s2] sm:$0x1]
      %v574 = vld [vmem:[%s3] sm:$0x1]
      %v575 = vld [vmem:[%s4] sm:$0xff]
      %v576 = vld [vmem:[%s4 + $0x8] sm:$0xff]
      %v577 = vld [vmem:[%s4 + $0x10] sm:$0xff]
      %v578 = vld [vmem:[%s4 + $0x18] sm:$0xff]
      %v579 = vld [vmem:[%s5] sm:$0x1]
      %v580 = vld [vmem:[%s6] sm:$0xff]
      %v581 = vld [vmem:[%s6 + $0x8] sm:$0xff]
      %v582 = vld [vmem:[%s6 + $0x10] sm:$0xff]
      %v583 = vld [vmem:[%s6 + $0x18] sm:$0xff]
      %v584 = vld [vmem:[%s7] sm:$0x1]
      %v585 = vld [vmem:[%s8] sm:$0x1]
      %v586 = vld [vmem:[%s9] sm:$0x1]
      %v587 = vld [vmem:[%s10] sm:$0xff]
      %v588 = vld [vmem:[%s10 + $0x8] sm:$0xff]
      %v589 = vld [vmem:[%s10 + $0x10] sm:$0xff]
      %v590 = vld [vmem:[%s10 + $0x18] sm:$0xff]
      %v591 = vld [vmem:[%s11] sm:$0x1]
      %v592 = vld [vmem:[%s12] sm:$0xff]
      %v593 = vld [vmem:[%s12 + $0x8] sm:$0xff]
      %v594 = vld [vmem:[%s12 + $0x10] sm:$0xff]
      %v595 = vld [vmem:[%s12 + $0x18] sm:$0xff]
      %v596 = vld [vmem:[%s12 + $0x20] sm:$0xff]
      %v597 = vld [vmem:[%s12 + $0x28] sm:$0xff]
      %v598 = vld [vmem:[%s12 + $0x30] sm:$0xff]
      %v599 = vld [vmem:[%s12 + $0x38] sm:$0xff]
      %v600 = vld [vmem:[%s12 + $0x40] sm:$0xff]
      %v601 = vld [vmem:[%s12 + $0x48] sm:$0xff]
      %v602 = vld [vmem:[%s12 + $0x50] sm:$0xff]
      %v603 = vld [vmem:[%s12 + $0x58] sm:$0xff]
      %v604 = vld [vmem:[%s12 + $0x60] sm:$0xff]
      %v605 = vld [vmem:[%s12 + $0x68] sm:$0xff]
      %v606 = vld [vmem:[%s12 + $0x70] sm:$0xff]
      %v607 = vld [vmem:[%s12 + $0x78] sm:$0xff]
      %v608 = vld [vmem:[%s13] sm:$0x1]
      %vm609 = vcmask 261120
      %v610 = vsel %vm609, %v571, 0.0
      %611 = vadd.xlane.f32.xlu0 %v610
      %v612 = vpop.xlane.xlu0 %611
      %v613 = vrcp.pop 32.0
      %v614 = vmul.f32 %v612, %v613
      %v615 = vsub.f32 %v571, %v614
      %v616 = vmul.f32 %v615, %v615
      %v617 = vsel %vm609, %v616, 0.0
      %618 = vadd.xlane.f32.xlu0 %v617
      %v619 = vpop.xlane.xlu0 %618
      %v620 = vmul.f32 %v619, %v613
      %v621 = vadd.f32 %v620, 1e-12
      %v622 = vrsqrt.pop %v621
      %v623 = vmul.f32 %v615, %v622
      %v624 = vlaneseq
      %v625 = vshrl.u32 %v624, 7
      %v626 = vsub.s32 0, %v625
      %v627 = vrot.slane %v573, %v626
      %v628 = vmul.f32 %v623, %v627
      %v629 = vlaneseq
      %v630 = vshrl.u32 %v629, 7
      %v631 = vsub.s32 0, %v630
      %v632 = vrot.slane %v574, %v631
      %v633 = vadd.f32 %v628, %v632
      %v634 = vlaneseq
      %v635 = vshrl.u32 %v634, 7
      %v636 = vsub.s32 0, %v635
      %v637 = vrot.slane %v579, %v636
      %v639 = vsel %vm609, %v633, 0
      %641 = vmatprep.subr.mxu0 0.0
      %642 = vmatpush1.msra.mxu0 %v575
      %643 = vmatprep.subr.mxu0 0.0
      %644 = vmatpush1.msra.mxu0 %v576
      %645 = vmatprep.subr.mxu0 0.0
      %646 = vmatpush1.msra.mxu0 %v577
      %647 = vmatprep.subr.mxu0 0.0
      %648 = vmatpush1.msra.mxu0 %v578
      %649 = vmatprep.subr.mxu0 0.0
      %650 = vmatpush1.msra.mxu0 0.0
      %651 = vmatprep.subr.mxu0 0.0
      %652 = vmatpush1.msra.mxu0 0.0
      %653 = vmatprep.subr.mxu0 0.0
      %654 = vmatpush1.msra.mxu0 0.0
      %655 = vmatprep.subr.mxu0 0.0
      %656 = vmatpush1.msra.mxu0 0.0
      %657 = vmatprep.subr.mxu0 0.0
      %658 = vmatpush1.msra.mxu0 0.0
      %659 = vmatprep.subr.mxu0 0.0
      %660 = vmatpush1.msra.mxu0 0.0
      %661 = vmatprep.subr.mxu0 0.0
      %662 = vmatpush1.msra.mxu0 0.0
      %663 = vmatprep.subr.mxu0 0.0
      %664 = vmatpush1.msra.mxu0 0.0
      %665 = vmatprep.subr.mxu0 0.0
      %666 = vmatpush1.msra.mxu0 0.0
      %667 = vmatprep.subr.mxu0 0.0
      %668 = vmatpush1.msra.mxu0 0.0
      %669 = vmatprep.subr.mxu0 0.0
      %670 = vmatpush1.msra.mxu0 0.0
      %671 = vmatprep.subr.mxu0 0.0
      %672 = vmatpush1.msra.mxu0 0.0
      %673 = vmatprep.subr.mxu0 0.0
      %674 = vmatpush1.msra.mxu0 0.0
      %675 = vmatprep.subr.mxu0 0.0
      %676 = vmatpush1.msra.mxu0 0.0
      %677 = vmatprep.subr.mxu0 0.0
      %678 = vmatpush1.msra.mxu0 0.0
      %679 = vmatprep.subr.mxu0 0.0
      %680 = vmatpush1.msra.mxu0 0.0
      %681 = vmatprep.subr.mxu0 0.0
      %682 = vmatpush1.msra.mxu0 0.0
      %683 = vmatprep.subr.mxu0 0.0
      %684 = vmatpush1.msra.mxu0 0.0
      %685 = vmatprep.subr.mxu0 0.0
      %686 = vmatpush1.msra.mxu0 0.0
      %687 = vmatprep.subr.mxu0 0.0
      %688 = vmatpush1.msra.mxu0 0.0
      %689 = vmatprep.subr.mxu0 0.0
      %690 = vmatpush1.msra.mxu0 0.0
      %691 = vmatprep.subr.mxu0 0.0
      %692 = vmatpush1.msra.mxu0 0.0
      %693 = vmatprep.subr.mxu0 0.0
      %694 = vmatpush1.msra.mxu0 0.0
      %695 = vmatprep.subr.mxu0 0.0
      %696 = vmatpush1.msra.mxu0 0.0
      %697 = vmatprep.subr.mxu0 0.0
      %698 = vmatpush1.msra.mxu0 0.0
      %699 = vmatprep.subr.mxu0 0.0
      %700 = vmatpush1.msra.mxu0 0.0
      %701 = vmatprep.subr.mxu0 0.0
      %702 = vmatpush1.msra.mxu0 0.0
      %703 = vmatprep.subr.mxu0 0.0
      %704 = vmatpush1.msra.mxu0 0.0
      %705 = vmatprep.mubr.f32.mxu0 0.0
      %706 = vmatmul.mubr.f32.gmra.mrb[0].mxu0 %v639
      %v707 = vpop.f32.mrb[0].mxu0
      %v708 = vadd.f32 %v637, %v707
      %v709 = vpop.f32.mrb[0].mxu0
      %710 = vdwg.mxu0
      %712 = vrot.lane.b32.xlu0 %v708, 96
      %v713 = vpop.permute.xlu0 %712
      %vm714 = vcmask 64512
      %v715 = vsel %vm714, %v708, 0
      %v717 = vsel %vm714, %v713, 0
      %719 = vmatprep.subr.mxu0 0.0
      %720 = vmatpush1.xpose.msra.mxu0 %v717
      %721 = vmatprep.subr.mxu0 0.0
      %722 = vmatpush1.xpose.msra.mxu0 0.0
      %723 = vmatprep.subr.mxu0 0.0
      %724 = vmatpush1.xpose.msra.mxu0 0.0
      %725 = vmatprep.subr.mxu0 0.0
      %726 = vmatpush1.xpose.msra.mxu0 0.0
      %727 = vmatprep.subr.mxu0 0.0
      %728 = vmatpush1.xpose.msra.mxu0 0.0
      %729 = vmatprep.subr.mxu0 0.0
      %730 = vmatpush1.xpose.msra.mxu0 0.0
      %731 = vmatprep.subr.mxu0 0.0
      %732 = vmatpush1.xpose.msra.mxu0 0.0
      %733 = vmatprep.subr.mxu0 0.0
      %734 = vmatpush1.xpose.msra.mxu0 0.0
      %735 = vmatprep.subr.mxu0 0.0
      %736 = vmatpush1.xpose.msra.mxu0 0.0
      %737 = vmatprep.subr.mxu0 0.0
      %738 = vmatpush1.xpose.msra.mxu0 0.0
      %739 = vmatprep.subr.mxu0 0.0
      %740 = vmatpush1.xpose.msra.mxu0 0.0
      %741 = vmatprep.subr.mxu0 0.0
      %742 = vmatpush1.xpose.msra.mxu0 0.0
      %743 = vmatprep.subr.mxu0 0.0
      %744 = vmatpush1.xpose.msra.mxu0 0.0
      %745 = vmatprep.subr.mxu0 0.0
      %746 = vmatpush1.xpose.msra.mxu0 0.0
      %747 = vmatprep.subr.mxu0 0.0
      %748 = vmatpush1.xpose.msra.mxu0 0.0
      %749 = vmatprep.subr.mxu0 0.0
      %750 = vmatpush1.xpose.msra.mxu0 0.0
      %751 = vmatprep.subr.mxu0 0.0
      %752 = vmatpush1.xpose.msra.mxu0 0.0
      %753 = vmatprep.subr.mxu0 0.0
      %754 = vmatpush1.xpose.msra.mxu0 0.0
      %755 = vmatprep.subr.mxu0 0.0
      %756 = vmatpush1.xpose.msra.mxu0 0.0
      %757 = vmatprep.subr.mxu0 0.0
      %758 = vmatpush1.xpose.msra.mxu0 0.0
      %759 = vmatprep.subr.mxu0 0.0
      %760 = vmatpush1.xpose.msra.mxu0 0.0
      %761 = vmatprep.subr.mxu0 0.0
      %762 = vmatpush1.xpose.msra.mxu0 0.0
      %763 = vmatprep.subr.mxu0 0.0
      %764 = vmatpush1.xpose.msra.mxu0 0.0
      %765 = vmatprep.subr.mxu0 0.0
      %766 = vmatpush1.xpose.msra.mxu0 0.0
      %767 = vmatprep.subr.mxu0 0.0
      %768 = vmatpush1.xpose.msra.mxu0 0.0
      %769 = vmatprep.subr.mxu0 0.0
      %770 = vmatpush1.xpose.msra.mxu0 0.0
      %771 = vmatprep.subr.mxu0 0.0
      %772 = vmatpush1.xpose.msra.mxu0 0.0
      %773 = vmatprep.subr.mxu0 0.0
      %774 = vmatpush1.xpose.msra.mxu0 0.0
      %775 = vmatprep.subr.mxu0 0.0
      %776 = vmatpush1.xpose.msra.mxu0 0.0
      %777 = vmatprep.subr.mxu0 0.0
      %778 = vmatpush1.xpose.msra.mxu0 0.0
      %779 = vmatprep.subr.mxu0 0.0
      %780 = vmatpush1.xpose.msra.mxu0 0.0
      %781 = vmatprep.subr.mxu0 0.0
      %782 = vmatpush1.xpose.msra.mxu0 0.0
      %783 = vmatprep.mubr.f32.mxu0 0.0
      %784 = vmatmul.mubr.f32.gmra.mrb[0].mxu0 %v715
      %v785 = vpop.f32.mrb[0].mxu0
      %v786 = vadd.f32 0.0, %v785
      %v787 = vpop.f32.mrb[0].mxu0
      %788 = vdwg.mxu0
      %v789 = vmul.f32 %v786, 0.35355338
      %v791 = vlaneseq
      %v792 = vshrl.u32 %v791, 7
      %v793 = vsub.s32 0, %v792
      %v794 = vrot.slane %v572, %v793
      %v796 = vadd.f32 %v789, %v794
      %v797 = vsel %vm714, %v796, -inf
      %798 = vmax.xlane.f32.xlu0 %v797
      %v799 = vpop.xlane.xlu0 %798
      %v800 = vsub.f32 %v796, %v799
      %v801 = vmul.f32 %v800, 1.442695
      %v802 = vpow.pop %v801
      %v803 = vsel %vm714, %v802, 0.0
      %804 = vadd.xlane.f32.xlu0 %v803
      %v805 = vpop.xlane.xlu0 %804
      %v806 = vrcp.pop %v805
      %v807 = vmul.f32 %v802, %v806
      %808 = vrot.lane.b32.xlu0 %v708, 64
      %v809 = vpop.permute.xlu0 %808
      %v812 = vsel %vm714, %v807, 0
      %814 = vmatprep.subr.mxu0 0.0
      %815 = vmatpush1.msra.mxu0 %v809
      %816 = vmatprep.subr.mxu0 0.0
      %817 = vmatpush1.msra.mxu0 0.0
      %818 = vmatprep.subr.mxu0 0.0
      %819 = vmatpush1.msra.mxu0 0.0
      %820 = vmatprep.subr.mxu0 0.0
      %821 = vmatpush1.msra.mxu0 0.0
      %822 = vmatprep.subr.mxu0 0.0
      %823 = vmatpush1.msra.mxu0 0.0
      %824 = vmatprep.subr.mxu0 0.0
      %825 = vmatpush1.msra.mxu0 0.0
      %826 = vmatprep.subr.mxu0 0.0
      %827 = vmatpush1.msra.mxu0 0.0
      %828 = vmatprep.subr.mxu0 0.0
      %829 = vmatpush1.msra.mxu0 0.0
      %830 = vmatprep.subr.mxu0 0.0
      %831 = vmatpush1.msra.mxu0 0.0
      %832 = vmatprep.subr.mxu0 0.0
      %833 = vmatpush1.msra.mxu0 0.0
      %834 = vmatprep.subr.mxu0 0.0
      %835 = vmatpush1.msra.mxu0 0.0
      %836 = vmatprep.subr.mxu0 0.0
      %837 = vmatpush1.msra.mxu0 0.0
      %838 = vmatprep.subr.mxu0 0.0
      %839 = vmatpush1.msra.mxu0 0.0
      %840 = vmatprep.subr.mxu0 0.0
      %841 = vmatpush1.msra.mxu0 0.0
      %842 = vmatprep.subr.mxu0 0.0
      %843 = vmatpush1.msra.mxu0 0.0
      %844 = vmatprep.subr.mxu0 0.0
      %845 = vmatpush1.msra.mxu0 0.0
      %846 = vmatprep.subr.mxu0 0.0
      %847 = vmatpush1.msra.mxu0 0.0
      %848 = vmatprep.subr.mxu0 0.0
      %849 = vmatpush1.msra.mxu0 0.0
      %850 = vmatprep.subr.mxu0 0.0
      %851 = vmatpush1.msra.mxu0 0.0
      %852 = vmatprep.subr.mxu0 0.0
      %853 = vmatpush1.msra.mxu0 0.0
      %854 = vmatprep.subr.mxu0 0.0
      %855 = vmatpush1.msra.mxu0 0.0
      %856 = vmatprep.subr.mxu0 0.0
      %857 = vmatpush1.msra.mxu0 0.0
      %858 = vmatprep.subr.mxu0 0.0
      %859 = vmatpush1.msra.mxu0 0.0
      %860 = vmatprep.subr.mxu0 0.0
      %861 = vmatpush1.msra.mxu0 0.0
      %862 = vmatprep.subr.mxu0 0.0
      %863 = vmatpush1.msra.mxu0 0.0
      %864 = vmatprep.subr.mxu0 0.0
      %865 = vmatpush1.msra.mxu0 0.0
      %866 = vmatprep.subr.mxu0 0.0
      %867 = vmatpush1.msra.mxu0 0.0
      %868 = vmatprep.subr.mxu0 0.0
      %869 = vmatpush1.msra.mxu0 0.0
      %870 = vmatprep.subr.mxu0 0.0
      %871 = vmatpush1.msra.mxu0 0.0
      %872 = vmatprep.subr.mxu0 0.0
      %873 = vmatpush1.msra.mxu0 0.0
      %874 = vmatprep.subr.mxu0 0.0
      %875 = vmatpush1.msra.mxu0 0.0
      %876 = vmatprep.subr.mxu0 0.0
      %877 = vmatpush1.msra.mxu0 0.0
      %878 = vmatprep.mubr.f32.mxu0 0.0
      %879 = vmatmul.mubr.f32.gmra.mrb[0].mxu0 %v812
      %v880 = vpop.f32.mrb[0].mxu0
      %v881 = vadd.f32 0.0, %v880
      %v882 = vpop.f32.mrb[0].mxu0
      %883 = vdwg.mxu0
      %884 = vrot.lane.b32.xlu0 %v708, 120
      %v885 = vpop.permute.xlu0 %884
      %886 = vrot.lane.b32.xlu0 %v708, 88
      %v887 = vpop.permute.xlu0 %886
      %v888 = vsel %vm714, %v885, 0
      %v890 = vsel %vm714, %v887, 0
      %892 = vmatprep.subr.mxu0 0.0
      %893 = vmatpush1.xpose.msra.mxu0 %v890
      %894 = vmatprep.subr.mxu0 0.0
      %895 = vmatpush1.xpose.msra.mxu0 0.0
      %896 = vmatprep.subr.mxu0 0.0
      %897 = vmatpush1.xpose.msra.mxu0 0.0
      %898 = vmatprep.subr.mxu0 0.0
      %899 = vmatpush1.xpose.msra.mxu0 0.0
      %900 = vmatprep.subr.mxu0 0.0
      %901 = vmatpush1.xpose.msra.mxu0 0.0
      %902 = vmatprep.subr.mxu0 0.0
      %903 = vmatpush1.xpose.msra.mxu0 0.0
      %904 = vmatprep.subr.mxu0 0.0
      %905 = vmatpush1.xpose.msra.mxu0 0.0
      %906 = vmatprep.subr.mxu0 0.0
      %907 = vmatpush1.xpose.msra.mxu0 0.0
      %908 = vmatprep.subr.mxu0 0.0
      %909 = vmatpush1.xpose.msra.mxu0 0.0
      %910 = vmatprep.subr.mxu0 0.0
      %911 = vmatpush1.xpose.msra.mxu0 0.0
      %912 = vmatprep.subr.mxu0 0.0
      %913 = vmatpush1.xpose.msra.mxu0 0.0
      %914 = vmatprep.subr.mxu0 0.0
      %915 = vmatpush1.xpose.msra.mxu0 0.0
      %916 = vmatprep.subr.mxu0 0.0
      %917 = vmatpush1.xpose.msra.mxu0 0.0
      %918 = vmatprep.subr.mxu0 0.0
      %919 = vmatpush1.xpose.msra.mxu0 0.0
      %920 = vmatprep.subr.mxu0 0.0
      %921 = vmatpush1.xpose.msra.mxu0 0.0
      %922 = vmatprep.subr.mxu0 0.0
      %923 = vmatpush1.xpose.msra.mxu0 0.0
      %924 = vmatprep.subr.mxu0 0.0
      %925 = vmatpush1.xpose.msra.mxu0 0.0
      %926 = vmatprep.subr.mxu0 0.0
      %927 = vmatpush1.xpose.msra.mxu0 0.0
      %928 = vmatprep.subr.mxu0 0.0
      %929 = vmatpush1.xpose.msra.mxu0 0.0
      %930 = vmatprep.subr.mxu0 0.0
      %931 = vmatpush1.xpose.msra.mxu0 0.0
      %932 = vmatprep.subr.mxu0 0.0
      %933 = vmatpush1.xpose.msra.mxu0 0.0
      %934 = vmatprep.subr.mxu0 0.0
      %935 = vmatpush1.xpose.msra.mxu0 0.0
      %936 = vmatprep.subr.mxu0 0.0
      %937 = vmatpush1.xpose.msra.mxu0 0.0
      %938 = vmatprep.subr.mxu0 0.0
      %939 = vmatpush1.xpose.msra.mxu0 0.0
      %940 = vmatprep.subr.mxu0 0.0
      %941 = vmatpush1.xpose.msra.mxu0 0.0
      %942 = vmatprep.subr.mxu0 0.0
      %943 = vmatpush1.xpose.msra.mxu0 0.0
      %944 = vmatprep.subr.mxu0 0.0
      %945 = vmatpush1.xpose.msra.mxu0 0.0
      %946 = vmatprep.subr.mxu0 0.0
      %947 = vmatpush1.xpose.msra.mxu0 0.0
      %948 = vmatprep.subr.mxu0 0.0
      %949 = vmatpush1.xpose.msra.mxu0 0.0
      %950 = vmatprep.subr.mxu0 0.0
      %951 = vmatpush1.xpose.msra.mxu0 0.0
      %952 = vmatprep.subr.mxu0 0.0
      %953 = vmatpush1.xpose.msra.mxu0 0.0
      %954 = vmatprep.subr.mxu0 0.0
      %955 = vmatpush1.xpose.msra.mxu0 0.0
      %956 = vmatprep.mubr.f32.mxu0 0.0
      %957 = vmatmul.mubr.f32.gmra.mrb[0].mxu0 %v888
      %v958 = vpop.f32.mrb[0].mxu0
      %v959 = vadd.f32 0.0, %v958
      %v960 = vpop.f32.mrb[0].mxu0
      %961 = vdwg.mxu0
      %v962 = vmul.f32 %v959, 0.35355338
      %v963 = vadd.f32 %v962, %v794
      %v964 = vsel %vm714, %v963, -inf
      %965 = vmax.xlane.f32.xlu0 %v964
      %v966 = vpop.xlane.xlu0 %965
      %v967 = vsub.f32 %v963, %v966
      %v968 = vmul.f32 %v967, 1.442695
      %v969 = vpow.pop %v968
      %v970 = vsel %vm714, %v969, 0.0
      %971 = vadd.xlane.f32.xlu0 %v970
      %v972 = vpop.xlane.xlu0 %971
      %v973 = vrcp.pop %v972
      %v974 = vmul.f32 %v969, %v973
      %975 = vrot.lane.b32.xlu0 %v708, 56
      %v976 = vpop.permute.xlu0 %975
      %v979 = vsel %vm714, %v974, 0
      %981 = vmatprep.subr.mxu0 0.0
      %982 = vmatpush1.msra.mxu0 %v976
      %983 = vmatprep.subr.mxu0 0.0
      %984 = vmatpush1.msra.mxu0 0.0
      %985 = vmatprep.subr.mxu0 0.0
      %986 = vmatpush1.msra.mxu0 0.0
      %987 = vmatprep.subr.mxu0 0.0
      %988 = vmatpush1.msra.mxu0 0.0
      %989 = vmatprep.subr.mxu0 0.0
      %990 = vmatpush1.msra.mxu0 0.0
      %991 = vmatprep.subr.mxu0 0.0
      %992 = vmatpush1.msra.mxu0 0.0
      %993 = vmatprep.subr.mxu0 0.0
      %994 = vmatpush1.msra.mxu0 0.0
      %995 = vmatprep.subr.mxu0 0.0
      %996 = vmatpush1.msra.mxu0 0.0
      %997 = vmatprep.subr.mxu0 0.0
      %998 = vmatpush1.msra.mxu0 0.0
      %999 = vmatprep.subr.mxu0 0.0
      %1000 = vmatpush1.msra.mxu0 0.0
      %1001 = vmatprep.subr.mxu0 0.0
      %1002 = vmatpush1.msra.mxu0 0.0
      %1003 = vmatprep.subr.mxu0 0.0
      %1004 = vmatpush1.msra.mxu0 0.0
      %1005 = vmatprep.subr.mxu0 0.0
      %1006 = vmatpush1.msra.mxu0 0.0
      %1007 = vmatprep.subr.mxu0 0.0
      %1008 = vmatpush1.msra.mxu0 0.0
      %1009 = vmatprep.subr.mxu0 0.0
      %1010 = vmatpush1.msra.mxu0 0.0
      %1011 = vmatprep.subr.mxu0 0.0
      %1012 = vmatpush1.msra.mxu0 0.0
      %1013 = vmatprep.subr.mxu0 0.0
      %1014 = vmatpush1.msra.mxu0 0.0
      %1015 = vmatprep.subr.mxu0 0.0
      %1016 = vmatpush1.msra.mxu0 0.0
      %1017 = vmatprep.subr.mxu0 0.0
      %1018 = vmatpush1.msra.mxu0 0.0
      %1019 = vmatprep.subr.mxu0 0.0
      %1020 = vmatpush1.msra.mxu0 0.0
      %1021 = vmatprep.subr.mxu0 0.0
      %1022 = vmatpush1.msra.mxu0 0.0
      %1023 = vmatprep.subr.mxu0 0.0
      %1024 = vmatpush1.msra.mxu0 0.0
      %1025 = vmatprep.subr.mxu0 0.0
      %1026 = vmatpush1.msra.mxu0 0.0
      %1027 = vmatprep.subr.mxu0 0.0
      %1028 = vmatpush1.msra.mxu0 0.0
      %1029 = vmatprep.subr.mxu0 0.0
      %1030 = vmatpush1.msra.mxu0 0.0
      %1031 = vmatprep.subr.mxu0 0.0
      %1032 = vmatpush1.msra.mxu0 0.0
      %1033 = vmatprep.subr.mxu0 0.0
      %1034 = vmatpush1.msra.mxu0 0.0
      %1035 = vmatprep.subr.mxu0 0.0
      %1036 = vmatpush1.msra.mxu0 0.0
      %1037 = vmatprep.subr.mxu0 0.0
      %1038 = vmatpush1.msra.mxu0 0.0
      %1039 = vmatprep.subr.mxu0 0.0
      %1040 = vmatpush1.msra.mxu0 0.0
      %1041 = vmatprep.subr.mxu0 0.0
      %1042 = vmatpush1.msra.mxu0 0.0
      %1043 = vmatprep.subr.mxu0 0.0
      %1044 = vmatpush1.msra.mxu0 0.0
      %1045 = vmatprep.mubr.f32.mxu0 0.0
      %1046 = vmatmul.mubr.f32.gmra.mrb[0].mxu0 %v979
      %v1047 = vpop.f32.mrb[0].mxu0
      %v1048 = vadd.f32 0.0, %v1047
      %v1049 = vpop.f32.mrb[0].mxu0
      %1050 = vdwg.mxu0
      %v1052 = vsel %vm714, %v1048, 0
      %1054 = vmatprep.subr.mxu0 0.0
      %1055 = vmatpush1.msra.mxu0 %v581
      %1056 = vmatprep.subr.mxu0 0.0
      %1057 = vmatpush1.msra.mxu0 0.0
      %1058 = vmatprep.subr.mxu0 0.0
      %1059 = vmatpush1.msra.mxu0 0.0
      %1060 = vmatprep.subr.mxu0 0.0
      %1061 = vmatpush1.msra.mxu0 0.0
      %1062 = vmatprep.subr.mxu0 0.0
      %1063 = vmatpush1.msra.mxu0 0.0
      %1064 = vmatprep.subr.mxu0 0.0
      %1065 = vmatpush1.msra.mxu0 0.0
      %1066 = vmatprep.subr.mxu0 0.0
      %1067 = vmatpush1.msra.mxu0 0.0
      %1068 = vmatprep.subr.mxu0 0.0
      %1069 = vmatpush1.msra.mxu0 0.0
      %1070 = vmatprep.subr.mxu0 0.0
      %1071 = vmatpush1.msra.mxu0 0.0
      %1072 = vmatprep.subr.mxu0 0.0
      %1073 = vmatpush1.msra.mxu0 0.0
      %1074 = vmatprep.subr.mxu0 0.0
      %1075 = vmatpush1.msra.mxu0 0.0
      %1076 = vmatprep.subr.mxu0 0.0
      %1077 = vmatpush1.msra.mxu0 0.0
      %1078 = vmatprep.subr.mxu0 0.0
      %1079 = vmatpush1.msra.mxu0 0.0
      %1080 = vmatprep.subr.mxu0 0.0
      %1081 = vmatpush1.msra.mxu0 0.0
      %1082 = vmatprep.subr.mxu0 0.0
      %1083 = vmatpush1.msra.mxu0 0.0
      %1084 = vmatprep.subr.mxu0 0.0
      %1085 = vmatpush1.msra.mxu0 0.0
      %1086 = vmatprep.subr.mxu0 0.0
      %1087 = vmatpush1.msra.mxu0 0.0
      %1088 = vmatprep.subr.mxu0 0.0
      %1089 = vmatpush1.msra.mxu0 0.0
      %1090 = vmatprep.subr.mxu0 0.0
      %1091 = vmatpush1.msra.mxu0 0.0
      %1092 = vmatprep.subr.mxu0 0.0
      %1093 = vmatpush1.msra.mxu0 0.0
      %1094 = vmatprep.subr.mxu0 0.0
      %1095 = vmatpush1.msra.mxu0 0.0
      %1096 = vmatprep.subr.mxu0 0.0
      %1097 = vmatpush1.msra.mxu0 0.0
      %1098 = vmatprep.subr.mxu0 0.0
      %1099 = vmatpush1.msra.mxu0 0.0
      %1100 = vmatprep.subr.mxu0 0.0
      %1101 = vmatpush1.msra.mxu0 0.0
      %1102 = vmatprep.subr.mxu0 0.0
      %1103 = vmatpush1.msra.mxu0 0.0
      %1104 = vmatprep.subr.mxu0 0.0
      %1105 = vmatpush1.msra.mxu0 0.0
      %1106 = vmatprep.subr.mxu0 0.0
      %1107 = vmatpush1.msra.mxu0 0.0
      %1108 = vmatprep.subr.mxu0 0.0
      %1109 = vmatpush1.msra.mxu0 0.0
      %1110 = vmatprep.subr.mxu0 0.0
      %1111 = vmatpush1.msra.mxu0 0.0
      %1112 = vmatprep.subr.mxu0 0.0
      %1113 = vmatpush1.msra.mxu0 0.0
      %1114 = vmatprep.subr.mxu0 0.0
      %1115 = vmatpush1.msra.mxu0 0.0
      %1116 = vmatprep.subr.mxu0 0.0
      %1117 = vmatpush1.msra.mxu0 0.0
      %1118 = vmatprep.mubr.f32.mxu0 0.0
      %1119 = vmatmul.mubr.f32.gmra.mrb[0].mxu0 %v1052
      %v1120 = vpop.f32.mrb[0].mxu0
      %v1121 = vadd.f32 0.0, %v1120
      %v1122 = vpop.f32.mrb[0].mxu0
      %1123 = vdwg.mxu0
      %v1125 = vsel %vm714, %v881, 0
      %1127 = vmatprep.subr.mxu0 0.0
      %1128 = vmatpush1.msra.mxu0 %v580
      %1129 = vmatprep.subr.mxu0 0.0
      %1130 = vmatpush1.msra.mxu0 0.0
      %1131 = vmatprep.subr.mxu0 0.0
      %1132 = vmatpush1.msra.mxu0 0.0
      %1133 = vmatprep.subr.mxu0 0.0
      %1134 = vmatpush1.msra.mxu0 0.0
      %1135 = vmatprep.subr.mxu0 0.0
      %1136 = vmatpush1.msra.mxu0 0.0
      %1137 = vmatprep.subr.mxu0 0.0
      %1138 = vmatpush1.msra.mxu0 0.0
      %1139 = vmatprep.subr.mxu0 0.0
      %1140 = vmatpush1.msra.mxu0 0.0
      %1141 = vmatprep.subr.mxu0 0.0
      %1142 = vmatpush1.msra.mxu0 0.0
      %1143 = vmatprep.subr.mxu0 0.0
      %1144 = vmatpush1.msra.mxu0 0.0
      %1145 = vmatprep.subr.mxu0 0.0
      %1146 = vmatpush1.msra.mxu0 0.0
      %1147 = vmatprep.subr.mxu0 0.0
      %1148 = vmatpush1.msra.mxu0 0.0
      %1149 = vmatprep.subr.mxu0 0.0
      %1150 = vmatpush1.msra.mxu0 0.0
      %1151 = vmatprep.subr.mxu0 0.0
      %1152 = vmatpush1.msra.mxu0 0.0
      %1153 = vmatprep.subr.mxu0 0.0
      %1154 = vmatpush1.msra.mxu0 0.0
      %1155 = vmatprep.subr.mxu0 0.0
      %1156 = vmatpush1.msra.mxu0 0.0
      %1157 = vmatprep.subr.mxu0 0.0
      %1158 = vmatpush1.msra.mxu0 0.0
      %1159 = vmatprep.subr.mxu0 0.0
      %1160 = vmatpush1.msra.mxu0 0.0
      %1161 = vmatprep.subr.mxu0 0.0
      %1162 = vmatpush1.msra.mxu0 0.0
      %1163 = vmatprep.subr.mxu0 0.0
      %1164 = vmatpush1.msra.mxu0 0.0
      %1165 = vmatprep.subr.mxu0 0.0
      %1166 = vmatpush1.msra.mxu0 0.0
      %1167 = vmatprep.subr.mxu0 0.0
      %1168 = vmatpush1.msra.mxu0 0.0
      %1169 = vmatprep.subr.mxu0 0.0
      %1170 = vmatpush1.msra.mxu0 0.0
      %1171 = vmatprep.subr.mxu0 0.0
      %1172 = vmatpush1.msra.mxu0 0.0
      %1173 = vmatprep.subr.mxu0 0.0
      %1174 = vmatpush1.msra.mxu0 0.0
      %1175 = vmatprep.subr.mxu0 0.0
      %1176 = vmatpush1.msra.mxu0 0.0
      %1177 = vmatprep.subr.mxu0 0.0
      %1178 = vmatpush1.msra.mxu0 0.0
      %1179 = vmatprep.subr.mxu0 0.0
      %1180 = vmatpush1.msra.mxu0 0.0
      %1181 = vmatprep.subr.mxu0 0.0
      %1182 = vmatpush1.msra.mxu0 0.0
      %1183 = vmatprep.subr.mxu0 0.0
      %1184 = vmatpush1.msra.mxu0 0.0
      %1185 = vmatprep.subr.mxu0 0.0
      %1186 = vmatpush1.msra.mxu0 0.0
      %1187 = vmatprep.subr.mxu0 0.0
      %1188 = vmatpush1.msra.mxu0 0.0
      %1189 = vmatprep.subr.mxu0 0.0
      %1190 = vmatpush1.msra.mxu0 0.0
      %1191 = vmatprep.mubr.f32.mxu0 0.0
      %1192 = vmatmul.mubr.f32.gmra.mrb[0].mxu0 %v1125
      %v1193 = vpop.f32.mrb[0].mxu0
      %v1194 = vadd.f32 %v1121, %v1193
      %v1195 = vpop.f32.mrb[0].mxu0
      %1196 = vdwg.mxu0
      %1197 = vrot.lane.b32.xlu0 %v708, 112
      %v1198 = vpop.permute.xlu0 %1197
      %1199 = vrot.lane.b32.xlu0 %v708, 80
      %v1200 = vpop.permute.xlu0 %1199
      %v1201 = vsel %vm714, %v1198, 0
      %v1203 = vsel %vm714, %v1200, 0
      %1205 = vmatprep.subr.mxu0 0.0
      %1206 = vmatpush1.xpose.msra.mxu0 %v1203
      %1207 = vmatprep.subr.mxu0 0.0
      %1208 = vmatpush1.xpose.msra.mxu0 0.0
      %1209 = vmatprep.subr.mxu0 0.0
      %1210 = vmatpush1.xpose.msra.mxu0 0.0
      %1211 = vmatprep.subr.mxu0 0.0
      %1212 = vmatpush1.xpose.msra.mxu0 0.0
      %1213 = vmatprep.subr.mxu0 0.0
      %1214 = vmatpush1.xpose.msra.mxu0 0.0
      %1215 = vmatprep.subr.mxu0 0.0
      %1216 = vmatpush1.xpose.msra.mxu0 0.0
      %1217 = vmatprep.subr.mxu0 0.0
      %1218 = vmatpush1.xpose.msra.mxu0 0.0
      %1219 = vmatprep.subr.mxu0 0.0
      %1220 = vmatpush1.xpose.msra.mxu0 0.0
      %1221 = vmatprep.subr.mxu0 0.0
      %1222 = vmatpush1.xpose.msra.mxu0 0.0
      %1223 = vmatprep.subr.mxu0 0.0
      %1224 = vmatpush1.xpose.msra.mxu0 0.0
      %1225 = vmatprep.subr.mxu0 0.0
      %1226 = vmatpush1.xpose.msra.mxu0 0.0
      %1227 = vmatprep.subr.mxu0 0.0
      %1228 = vmatpush1.xpose.msra.mxu0 0.0
      %1229 = vmatprep.subr.mxu0 0.0
      %1230 = vmatpush1.xpose.msra.mxu0 0.0
      %1231 = vmatprep.subr.mxu0 0.0
      %1232 = vmatpush1.xpose.msra.mxu0 0.0
      %1233 = vmatprep.subr.mxu0 0.0
      %1234 = vmatpush1.xpose.msra.mxu0 0.0
      %1235 = vmatprep.subr.mxu0 0.0
      %1236 = vmatpush1.xpose.msra.mxu0 0.0
      %1237 = vmatprep.subr.mxu0 0.0
      %1238 = vmatpush1.xpose.msra.mxu0 0.0
      %1239 = vmatprep.subr.mxu0 0.0
      %1240 = vmatpush1.xpose.msra.mxu0 0.0
      %1241 = vmatprep.subr.mxu0 0.0
      %1242 = vmatpush1.xpose.msra.mxu0 0.0
      %1243 = vmatprep.subr.mxu0 0.0
      %1244 = vmatpush1.xpose.msra.mxu0 0.0
      %1245 = vmatprep.subr.mxu0 0.0
      %1246 = vmatpush1.xpose.msra.mxu0 0.0
      %1247 = vmatprep.subr.mxu0 0.0
      %1248 = vmatpush1.xpose.msra.mxu0 0.0
      %1249 = vmatprep.subr.mxu0 0.0
      %1250 = vmatpush1.xpose.msra.mxu0 0.0
      %1251 = vmatprep.subr.mxu0 0.0
      %1252 = vmatpush1.xpose.msra.mxu0 0.0
      %1253 = vmatprep.subr.mxu0 0.0
      %1254 = vmatpush1.xpose.msra.mxu0 0.0
      %1255 = vmatprep.subr.mxu0 0.0
      %1256 = vmatpush1.xpose.msra.mxu0 0.0
      %1257 = vmatprep.subr.mxu0 0.0
      %1258 = vmatpush1.xpose.msra.mxu0 0.0
      %1259 = vmatprep.subr.mxu0 0.0
      %1260 = vmatpush1.xpose.msra.mxu0 0.0
      %1261 = vmatprep.subr.mxu0 0.0
      %1262 = vmatpush1.xpose.msra.mxu0 0.0
      %1263 = vmatprep.subr.mxu0 0.0
      %1264 = vmatpush1.xpose.msra.mxu0 0.0
      %1265 = vmatprep.subr.mxu0 0.0
      %1266 = vmatpush1.xpose.msra.mxu0 0.0
      %1267 = vmatprep.subr.mxu0 0.0
      %1268 = vmatpush1.xpose.msra.mxu0 0.0
      %1269 = vmatprep.mubr.f32.mxu0 0.0
      %1270 = vmatmul.mubr.f32.gmra.mrb[0].mxu0 %v1201
      %v1271 = vpop.f32.mrb[0].mxu0
      %v1272 = vadd.f32 0.0, %v1271
      %v1273 = vpop.f32.mrb[0].mxu0
      %1274 = vdwg.mxu0
      %v1275 = vmul.f32 %v1272, 0.35355338
      %v1276 = vadd.f32 %v1275, %v794
      %v1277 = vsel %vm714, %v1276, -inf
      %1278 = vmax.xlane.f32.xlu0 %v1277
      %v1279 = vpop.xlane.xlu0 %1278
      %v1280 = vsub.f32 %v1276, %v1279
      %v1281 = vmul.f32 %v1280, 1.442695
      %v1282 = vpow.pop %v1281
      %v1283 = vsel %vm714, %v1282, 0.0
      %1284 = vadd.xlane.f32.xlu0 %v1283
      %v1285 = vpop.xlane.xlu0 %1284
      %v1286 = vrcp.pop %v1285
      %v1287 = vmul.f32 %v1282, %v1286
      %1288 = vrot.lane.b32.xlu0 %v708, 48
      %v1289 = vpop.permute.xlu0 %1288
      %v1292 = vsel %vm714, %v1287, 0
      %1294 = vmatprep.subr.mxu0 0.0
      %1295 = vmatpush1.msra.mxu0 %v1289
      %1296 = vmatprep.subr.mxu0 0.0
      %1297 = vmatpush1.msra.mxu0 0.0
      %1298 = vmatprep.subr.mxu0 0.0
      %1299 = vmatpush1.msra.mxu0 0.0
      %1300 = vmatprep.subr.mxu0 0.0
      %1301 = vmatpush1.msra.mxu0 0.0
      %1302 = vmatprep.subr.mxu0 0.0
      %1303 = vmatpush1.msra.mxu0 0.0
      %1304 = vmatprep.subr.mxu0 0.0
      %1305 = vmatpush1.msra.mxu0 0.0
      %1306 = vmatprep.subr.mxu0 0.0
      %1307 = vmatpush1.msra.mxu0 0.0
      %1308 = vmatprep.subr.mxu0 0.0
      %1309 = vmatpush1.msra.mxu0 0.0
      %1310 = vmatprep.subr.mxu0 0.0
      %1311 = vmatpush1.msra.mxu0 0.0
      %1312 = vmatprep.subr.mxu0 0.0
      %1313 = vmatpush1.msra.mxu0 0.0
      %1314 = vmatprep.subr.mxu0 0.0
      %1315 = vmatpush1.msra.mxu0 0.0
      %1316 = vmatprep.subr.mxu0 0.0
      %1317 = vmatpush1.msra.mxu0 0.0
      %1318 = vmatprep.subr.mxu0 0.0
      %1319 = vmatpush1.msra.mxu0 0.0
      %1320 = vmatprep.subr.mxu0 0.0
      %1321 = vmatpush1.msra.mxu0 0.0
      %1322 = vmatprep.subr.mxu0 0.0
      %1323 = vmatpush1.msra.mxu0 0.0
      %1324 = vmatprep.subr.mxu0 0.0
      %1325 = vmatpush1.msra.mxu0 0.0
      %1326 = vmatprep.subr.mxu0 0.0
      %1327 = vmatpush1.msra.mxu0 0.0
      %1328 = vmatprep.subr.mxu0 0.0
      %1329 = vmatpush1.msra.mxu0 0.0
      %1330 = vmatprep.subr.mxu0 0.0
      %1331 = vmatpush1.msra.mxu0 0.0
      %1332 = vmatprep.subr.mxu0 0.0
      %1333 = vmatpush1.msra.mxu0 0.0
      %1334 = vmatprep.subr.mxu0 0.0
      %1335 = vmatpush1.msra.mxu0 0.0
      %1336 = vmatprep.subr.mxu0 0.0
      %1337 = vmatpush1.msra.mxu0 0.0
      %1338 = vmatprep.subr.mxu0 0.0
      %1339 = vmatpush1.msra.mxu0 0.0
      %1340 = vmatprep.subr.mxu0 0.0
      %1341 = vmatpush1.msra.mxu0 0.0
      %1342 = vmatprep.subr.mxu0 0.0
      %1343 = vmatpush1.msra.mxu0 0.0
      %1344 = vmatprep.subr.mxu0 0.0
      %1345 = vmatpush1.msra.mxu0 0.0
      %1346 = vmatprep.subr.mxu0 0.0
      %1347 = vmatpush1.msra.mxu0 0.0
      %1348 = vmatprep.subr.mxu0 0.0
      %1349 = vmatpush1.msra.mxu0 0.0
      %1350 = vmatprep.subr.mxu0 0.0
      %1351 = vmatpush1.msra.mxu0 0.0
      %1352 = vmatprep.subr.mxu0 0.0
      %1353 = vmatpush1.msra.mxu0 0.0
      %1354 = vmatprep.subr.mxu0 0.0
      %1355 = vmatpush1.msra.mxu0 0.0
      %1356 = vmatprep.subr.mxu0 0.0
      %1357 = vmatpush1.msra.mxu0 0.0
      %1358 = vmatprep.mubr.f32.mxu0 0.0
      %1359 = vmatmul.mubr.f32.gmra.mrb[0].mxu0 %v1292
      %v1360 = vpop.f32.mrb[0].mxu0
      %v1361 = vadd.f32 0.0, %v1360
      %v1362 = vpop.f32.mrb[0].mxu0
      %1363 = vdwg.mxu0
      %v1365 = vsel %vm714, %v1361, 0
      %1367 = vmatprep.subr.mxu0 0.0
      %1368 = vmatpush1.msra.mxu0 %v582
      %1369 = vmatprep.subr.mxu0 0.0
      %1370 = vmatpush1.msra.mxu0 0.0
      %1371 = vmatprep.subr.mxu0 0.0
      %1372 = vmatpush1.msra.mxu0 0.0
      %1373 = vmatprep.subr.mxu0 0.0
      %1374 = vmatpush1.msra.mxu0 0.0
      %1375 = vmatprep.subr.mxu0 0.0
      %1376 = vmatpush1.msra.mxu0 0.0
      %1377 = vmatprep.subr.mxu0 0.0
      %1378 = vmatpush1.msra.mxu0 0.0
      %1379 = vmatprep.subr.mxu0 0.0
      %1380 = vmatpush1.msra.mxu0 0.0
      %1381 = vmatprep.subr.mxu0 0.0
      %1382 = vmatpush1.msra.mxu0 0.0
      %1383 = vmatprep.subr.mxu0 0.0
      %1384 = vmatpush1.msra.mxu0 0.0
      %1385 = vmatprep.subr.mxu0 0.0
      %1386 = vmatpush1.msra.mxu0 0.0
      %1387 = vmatprep.subr.mxu0 0.0
      %1388 = vmatpush1.msra.mxu0 0.0
      %1389 = vmatprep.subr.mxu0 0.0
      %1390 = vmatpush1.msra.mxu0 0.0
      %1391 = vmatprep.subr.mxu0 0.0
      %1392 = vmatpush1.msra.mxu0 0.0
      %1393 = vmatprep.subr.mxu0 0.0
      %1394 = vmatpush1.msra.mxu0 0.0
      %1395 = vmatprep.subr.mxu0 0.0
      %1396 = vmatpush1.msra.mxu0 0.0
      %1397 = vmatprep.subr.mxu0 0.0
      %1398 = vmatpush1.msra.mxu0 0.0
      %1399 = vmatprep.subr.mxu0 0.0
      %1400 = vmatpush1.msra.mxu0 0.0
      %1401 = vmatprep.subr.mxu0 0.0
      %1402 = vmatpush1.msra.mxu0 0.0
      %1403 = vmatprep.subr.mxu0 0.0
      %1404 = vmatpush1.msra.mxu0 0.0
      %1405 = vmatprep.subr.mxu0 0.0
      %1406 = vmatpush1.msra.mxu0 0.0
      %1407 = vmatprep.subr.mxu0 0.0
      %1408 = vmatpush1.msra.mxu0 0.0
      %1409 = vmatprep.subr.mxu0 0.0
      %1410 = vmatpush1.msra.mxu0 0.0
      %1411 = vmatprep.subr.mxu0 0.0
      %1412 = vmatpush1.msra.mxu0 0.0
      %1413 = vmatprep.subr.mxu0 0.0
      %1414 = vmatpush1.msra.mxu0 0.0
      %1415 = vmatprep.subr.mxu0 0.0
      %1416 = vmatpush1.msra.mxu0 0.0
      %1417 = vmatprep.subr.mxu0 0.0
      %1418 = vmatpush1.msra.mxu0 0.0
      %1419 = vmatprep.subr.mxu0 0.0
      %1420 = vmatpush1.msra.mxu0 0.0
      %1421 = vmatprep.subr.mxu0 0.0
      %1422 = vmatpush1.msra.mxu0 0.0
      %1423 = vmatprep.subr.mxu0 0.0
      %1424 = vmatpush1.msra.mxu0 0.0
      %1425 = vmatprep.subr.mxu0 0.0
      %1426 = vmatpush1.msra.mxu0 0.0
      %1427 = vmatprep.subr.mxu0 0.0
      %1428 = vmatpush1.msra.mxu0 0.0
      %1429 = vmatprep.subr.mxu0 0.0
      %1430 = vmatpush1.msra.mxu0 0.0
      %1431 = vmatprep.mubr.f32.mxu0 0.0
      %1432 = vmatmul.mubr.f32.gmra.mrb[0].mxu0 %v1365
      %v1433 = vpop.f32.mrb[0].mxu0
      %v1434 = vadd.f32 0.0, %v1433
      %v1435 = vpop.f32.mrb[0].mxu0
      %1436 = vdwg.mxu0
      %v1437 = vadd.f32 %v1194, %v1434
      %1438 = vrot.lane.b32.xlu0 %v708, 104
      %v1439 = vpop.permute.xlu0 %1438
      %1440 = vrot.lane.b32.xlu0 %v708, 72
      %v1441 = vpop.permute.xlu0 %1440
      %v1442 = vsel %vm714, %v1439, 0
      %v1444 = vsel %vm714, %v1441, 0
      %1446 = vmatprep.subr.mxu0 0.0
      %1447 = vmatpush1.xpose.msra.mxu0 %v1444
      %1448 = vmatprep.subr.mxu0 0.0
      %1449 = vmatpush1.xpose.msra.mxu0 0.0
      %1450 = vmatprep.subr.mxu0 0.0
      %1451 = vmatpush1.xpose.msra.mxu0 0.0
      %1452 = vmatprep.subr.mxu0 0.0
      %1453 = vmatpush1.xpose.msra.mxu0 0.0
      %1454 = vmatprep.subr.mxu0 0.0
      %1455 = vmatpush1.xpose.msra.mxu0 0.0
      %1456 = vmatprep.subr.mxu0 0.0
      %1457 = vmatpush1.xpose.msra.mxu0 0.0
      %1458 = vmatprep.subr.mxu0 0.0
      %1459 = vmatpush1.xpose.msra.mxu0 0.0
      %1460 = vmatprep.subr.mxu0 0.0
      %1461 = vmatpush1.xpose.msra.mxu0 0.0
      %1462 = vmatprep.subr.mxu0 0.0
      %1463 = vmatpush1.xpose.msra.mxu0 0.0
      %1464 = vmatprep.subr.mxu0 0.0
      %1465 = vmatpush1.xpose.msra.mxu0 0.0
      %1466 = vmatprep.subr.mxu0 0.0
      %1467 = vmatpush1.xpose.msra.mxu0 0.0
      %1468 = vmatprep.subr.mxu0 0.0
      %1469 = vmatpush1.xpose.msra.mxu0 0.0
      %1470 = vmatprep.subr.mxu0 0.0
      %1471 = vmatpush1.xpose.msra.mxu0 0.0
      %1472 = vmatprep.subr.mxu0 0.0
      %1473 = vmatpush1.xpose.msra.mxu0 0.0
      %1474 = vmatprep.subr.mxu0 0.0
      %1475 = vmatpush1.xpose.msra.mxu0 0.0
      %1476 = vmatprep.subr.mxu0 0.0
      %1477 = vmatpush1.xpose.msra.mxu0 0.0
      %1478 = vmatprep.subr.mxu0 0.0
      %1479 = vmatpush1.xpose.msra.mxu0 0.0
      %1480 = vmatprep.subr.mxu0 0.0
      %1481 = vmatpush1.xpose.msra.mxu0 0.0
      %1482 = vmatprep.subr.mxu0 0.0
      %1483 = vmatpush1.xpose.msra.mxu0 0.0
      %1484 = vmatprep.subr.mxu0 0.0
      %1485 = vmatpush1.xpose.msra.mxu0 0.0
      %1486 = vmatprep.subr.mxu0 0.0
      %1487 = vmatpush1.xpose.msra.mxu0 0.0
      %1488 = vmatprep.subr.mxu0 0.0
      %1489 = vmatpush1.xpose.msra.mxu0 0.0
      %1490 = vmatprep.subr.mxu0 0.0
      %1491 = vmatpush1.xpose.msra.mxu0 0.0
      %1492 = vmatprep.subr.mxu0 0.0
      %1493 = vmatpush1.xpose.msra.mxu0 0.0
      %1494 = vmatprep.subr.mxu0 0.0
      %1495 = vmatpush1.xpose.msra.mxu0 0.0
      %1496 = vmatprep.subr.mxu0 0.0
      %1497 = vmatpush1.xpose.msra.mxu0 0.0
      %1498 = vmatprep.subr.mxu0 0.0
      %1499 = vmatpush1.xpose.msra.mxu0 0.0
      %1500 = vmatprep.subr.mxu0 0.0
      %1501 = vmatpush1.xpose.msra.mxu0 0.0
      %1502 = vmatprep.subr.mxu0 0.0
      %1503 = vmatpush1.xpose.msra.mxu0 0.0
      %1504 = vmatprep.subr.mxu0 0.0
      %1505 = vmatpush1.xpose.msra.mxu0 0.0
      %1506 = vmatprep.subr.mxu0 0.0
      %1507 = vmatpush1.xpose.msra.mxu0 0.0
      %1508 = vmatprep.subr.mxu0 0.0
      %1509 = vmatpush1.xpose.msra.mxu0 0.0
      %1510 = vmatprep.mubr.f32.mxu0 0.0
      %1511 = vmatmul.mubr.f32.gmra.mrb[0].mxu0 %v1442
      %v1512 = vpop.f32.mrb[0].mxu0
      %v1513 = vadd.f32 0.0, %v1512
      %v1514 = vpop.f32.mrb[0].mxu0
      %1515 = vdwg.mxu0
      %v1516 = vmul.f32 %v1513, 0.35355338
      %v1517 = vadd.f32 %v1516, %v794
      %v1518 = vsel %vm714, %v1517, -inf
      %1519 = vmax.xlane.f32.xlu0 %v1518
      %v1520 = vpop.xlane.xlu0 %1519
      %v1521 = vsub.f32 %v1517, %v1520
      %v1522 = vmul.f32 %v1521, 1.442695
      %v1523 = vpow.pop %v1522
      %v1524 = vsel %vm714, %v1523, 0.0
      %1525 = vadd.xlane.f32.xlu0 %v1524
      %v1526 = vpop.xlane.xlu0 %1525
      %v1527 = vrcp.pop %v1526
      %v1528 = vmul.f32 %v1523, %v1527
      %1529 = vrot.lane.b32.xlu0 %v708, 40
      %v1530 = vpop.permute.xlu0 %1529
      %v1533 = vsel %vm714, %v1528, 0
      %1535 = vmatprep.subr.mxu0 0.0
      %1536 = vmatpush1.msra.mxu0 %v1530
      %1537 = vmatprep.subr.mxu0 0.0
      %1538 = vmatpush1.msra.mxu0 0.0
      %1539 = vmatprep.subr.mxu0 0.0
      %1540 = vmatpush1.msra.mxu0 0.0
      %1541 = vmatprep.subr.mxu0 0.0
      %1542 = vmatpush1.msra.mxu0 0.0
      %1543 = vmatprep.subr.mxu0 0.0
      %1544 = vmatpush1.msra.mxu0 0.0
      %1545 = vmatprep.subr.mxu0 0.0
      %1546 = vmatpush1.msra.mxu0 0.0
      %1547 = vmatprep.subr.mxu0 0.0
      %1548 = vmatpush1.msra.mxu0 0.0
      %1549 = vmatprep.subr.mxu0 0.0
      %1550 = vmatpush1.msra.mxu0 0.0
      %1551 = vmatprep.subr.mxu0 0.0
      %1552 = vmatpush1.msra.mxu0 0.0
      %1553 = vmatprep.subr.mxu0 0.0
      %1554 = vmatpush1.msra.mxu0 0.0
      %1555 = vmatprep.subr.mxu0 0.0
      %1556 = vmatpush1.msra.mxu0 0.0
      %1557 = vmatprep.subr.mxu0 0.0
      %1558 = vmatpush1.msra.mxu0 0.0
      %1559 = vmatprep.subr.mxu0 0.0
      %1560 = vmatpush1.msra.mxu0 0.0
      %1561 = vmatprep.subr.mxu0 0.0
      %1562 = vmatpush1.msra.mxu0 0.0
      %1563 = vmatprep.subr.mxu0 0.0
      %1564 = vmatpush1.msra.mxu0 0.0
      %1565 = vmatprep.subr.mxu0 0.0
      %1566 = vmatpush1.msra.mxu0 0.0
      %1567 = vmatprep.subr.mxu0 0.0
      %1568 = vmatpush1.msra.mxu0 0.0
      %1569 = vmatprep.subr.mxu0 0.0
      %1570 = vmatpush1.msra.mxu0 0.0
      %1571 = vmatprep.subr.mxu0 0.0
      %1572 = vmatpush1.msra.mxu0 0.0
      %1573 = vmatprep.subr.mxu0 0.0
      %1574 = vmatpush1.msra.mxu0 0.0
      %1575 = vmatprep.subr.mxu0 0.0
      %1576 = vmatpush1.msra.mxu0 0.0
      %1577 = vmatprep.subr.mxu0 0.0
      %1578 = vmatpush1.msra.mxu0 0.0
      %1579 = vmatprep.subr.mxu0 0.0
      %1580 = vmatpush1.msra.mxu0 0.0
      %1581 = vmatprep.subr.mxu0 0.0
      %1582 = vmatpush1.msra.mxu0 0.0
      %1583 = vmatprep.subr.mxu0 0.0
      %1584 = vmatpush1.msra.mxu0 0.0
      %1585 = vmatprep.subr.mxu0 0.0
      %1586 = vmatpush1.msra.mxu0 0.0
      %1587 = vmatprep.subr.mxu0 0.0
      %1588 = vmatpush1.msra.mxu0 0.0
      %1589 = vmatprep.subr.mxu0 0.0
      %1590 = vmatpush1.msra.mxu0 0.0
      %1591 = vmatprep.subr.mxu0 0.0
      %1592 = vmatpush1.msra.mxu0 0.0
      %1593 = vmatprep.subr.mxu0 0.0
      %1594 = vmatpush1.msra.mxu0 0.0
      %1595 = vmatprep.subr.mxu0 0.0
      %1596 = vmatpush1.msra.mxu0 0.0
      %1597 = vmatprep.subr.mxu0 0.0
      %1598 = vmatpush1.msra.mxu0 0.0
      %1599 = vmatprep.mubr.f32.mxu0 0.0
      %1600 = vmatmul.mubr.f32.gmra.mrb[0].mxu0 %v1533
      %v1601 = vpop.f32.mrb[0].mxu0
      %v1602 = vadd.f32 0.0, %v1601
      %v1603 = vpop.f32.mrb[0].mxu0
      %1604 = vdwg.mxu0
      %v1606 = vsel %vm714, %v1602, 0
      %1608 = vmatprep.subr.mxu0 0.0
      %1609 = vmatpush1.msra.mxu0 %v583
      %1610 = vmatprep.subr.mxu0 0.0
      %1611 = vmatpush1.msra.mxu0 0.0
      %1612 = vmatprep.subr.mxu0 0.0
      %1613 = vmatpush1.msra.mxu0 0.0
      %1614 = vmatprep.subr.mxu0 0.0
      %1615 = vmatpush1.msra.mxu0 0.0
      %1616 = vmatprep.subr.mxu0 0.0
      %1617 = vmatpush1.msra.mxu0 0.0
      %1618 = vmatprep.subr.mxu0 0.0
      %1619 = vmatpush1.msra.mxu0 0.0
      %1620 = vmatprep.subr.mxu0 0.0
      %1621 = vmatpush1.msra.mxu0 0.0
      %1622 = vmatprep.subr.mxu0 0.0
      %1623 = vmatpush1.msra.mxu0 0.0
      %1624 = vmatprep.subr.mxu0 0.0
      %1625 = vmatpush1.msra.mxu0 0.0
      %1626 = vmatprep.subr.mxu0 0.0
      %1627 = vmatpush1.msra.mxu0 0.0
      %1628 = vmatprep.subr.mxu0 0.0
      %1629 = vmatpush1.msra.mxu0 0.0
      %1630 = vmatprep.subr.mxu0 0.0
      %1631 = vmatpush1.msra.mxu0 0.0
      %1632 = vmatprep.subr.mxu0 0.0
      %1633 = vmatpush1.msra.mxu0 0.0
      %1634 = vmatprep.subr.mxu0 0.0
      %1635 = vmatpush1.msra.mxu0 0.0
      %1636 = vmatprep.subr.mxu0 0.0
      %1637 = vmatpush1.msra.mxu0 0.0
      %1638 = vmatprep.subr.mxu0 0.0
      %1639 = vmatpush1.msra.mxu0 0.0
      %1640 = vmatprep.subr.mxu0 0.0
      %1641 = vmatpush1.msra.mxu0 0.0
      %1642 = vmatprep.subr.mxu0 0.0
      %1643 = vmatpush1.msra.mxu0 0.0
      %1644 = vmatprep.subr.mxu0 0.0
      %1645 = vmatpush1.msra.mxu0 0.0
      %1646 = vmatprep.subr.mxu0 0.0
      %1647 = vmatpush1.msra.mxu0 0.0
      %1648 = vmatprep.subr.mxu0 0.0
      %1649 = vmatpush1.msra.mxu0 0.0
      %1650 = vmatprep.subr.mxu0 0.0
      %1651 = vmatpush1.msra.mxu0 0.0
      %1652 = vmatprep.subr.mxu0 0.0
      %1653 = vmatpush1.msra.mxu0 0.0
      %1654 = vmatprep.subr.mxu0 0.0
      %1655 = vmatpush1.msra.mxu0 0.0
      %1656 = vmatprep.subr.mxu0 0.0
      %1657 = vmatpush1.msra.mxu0 0.0
      %1658 = vmatprep.subr.mxu0 0.0
      %1659 = vmatpush1.msra.mxu0 0.0
      %1660 = vmatprep.subr.mxu0 0.0
      %1661 = vmatpush1.msra.mxu0 0.0
      %1662 = vmatprep.subr.mxu0 0.0
      %1663 = vmatpush1.msra.mxu0 0.0
      %1664 = vmatprep.subr.mxu0 0.0
      %1665 = vmatpush1.msra.mxu0 0.0
      %1666 = vmatprep.subr.mxu0 0.0
      %1667 = vmatpush1.msra.mxu0 0.0
      %1668 = vmatprep.subr.mxu0 0.0
      %1669 = vmatpush1.msra.mxu0 0.0
      %1670 = vmatprep.subr.mxu0 0.0
      %1671 = vmatpush1.msra.mxu0 0.0
      %1672 = vmatprep.mubr.f32.mxu0 0.0
      %1673 = vmatmul.mubr.f32.gmra.mrb[0].mxu0 %v1606
      %v1674 = vpop.f32.mrb[0].mxu0
      %v1675 = vadd.f32 0.0, %v1674
      %v1676 = vpop.f32.mrb[0].mxu0
      %1677 = vdwg.mxu0
      %v1678 = vadd.f32 %v1437, %v1675
      %v1679 = vadd.f32 %v571, %v1678
      %v1680 = vlaneseq
      %v1681 = vshrl.u32 %v1680, 7
      %v1682 = vsub.s32 0, %v1681
      %v1683 = vrot.slane %v584, %v1682
      %v1684 = vadd.f32 %v1679, %v1683
      %v1685 = vsel %vm609, %v1684, 0.0
      %1686 = vadd.xlane.f32.xlu0 %v1685
      %v1687 = vpop.xlane.xlu0 %1686
      %v1688 = vmul.f32 %v1687, %v613
      %v1689 = vsub.f32 %v1684, %v1688
      %v1690 = vmul.f32 %v1689, %v1689
      %v1691 = vsel %vm609, %v1690, 0.0
      %1692 = vadd.xlane.f32.xlu0 %v1691
      %v1693 = vpop.xlane.xlu0 %1692
      %v1694 = vmul.f32 %v1693, %v613
      %v1695 = vadd.f32 %v1694, 1e-12
      %v1696 = vrsqrt.pop %v1695
      %v1697 = vmul.f32 %v1689, %v1696
      %v1698 = vlaneseq
      %v1699 = vshrl.u32 %v1698, 7
      %v1700 = vsub.s32 0, %v1699
      %v1701 = vrot.slane %v585, %v1700
      %v1702 = vmul.f32 %v1697, %v1701
      %v1703 = vlaneseq
      %v1704 = vshrl.u32 %v1703, 7
      %v1705 = vsub.s32 0, %v1704
      %v1706 = vrot.slane %v586, %v1705
      %v1707 = vadd.f32 %v1702, %v1706
      %v1708 = vlaneseq
      %v1709 = vshrl.u32 %v1708, 7
      %v1710 = vsub.s32 0, %v1709
      %v1711 = vrot.slane %v591, %v1710
      %v1713 = vsel %vm609, %v1707, 0
      %1715 = vmatprep.subr.mxu0 0.0
      %1716 = vmatpush1.msra.mxu0 %v587
      %1717 = vmatprep.subr.mxu0 0.0
      %1718 = vmatpush1.msra.mxu0 %v588
      %1719 = vmatprep.subr.mxu0 0.0
      %1720 = vmatpush1.msra.mxu0 %v589
      %1721 = vmatprep.subr.mxu0 0.0
      %1722 = vmatpush1.msra.mxu0 %v590
      %1723 = vmatprep.subr.mxu0 0.0
      %1724 = vmatpush1.msra.mxu0 0.0
      %1725 = vmatprep.subr.mxu0 0.0
      %1726 = vmatpush1.msra.mxu0 0.0
      %1727 = vmatprep.subr.mxu0 0.0
      %1728 = vmatpush1.msra.mxu0 0.0
      %1729 = vmatprep.subr.mxu0 0.0
      %1730 = vmatpush1.msra.mxu0 0.0
      %1731 = vmatprep.subr.mxu0 0.0
      %1732 = vmatpush1.msra.mxu0 0.0
      %1733 = vmatprep.subr.mxu0 0.0
      %1734 = vmatpush1.msra.mxu0 0.0
      %1735 = vmatprep.subr.mxu0 0.0
      %1736 = vmatpush1.msra.mxu0 0.0
      %1737 = vmatprep.subr.mxu0 0.0
      %1738 = vmatpush1.msra.mxu0 0.0
      %1739 = vmatprep.subr.mxu0 0.0
      %1740 = vmatpush1.msra.mxu0 0.0
      %1741 = vmatprep.subr.mxu0 0.0
      %1742 = vmatpush1.msra.mxu0 0.0
      %1743 = vmatprep.subr.mxu0 0.0
      %1744 = vmatpush1.msra.mxu0 0.0
      %1745 = vmatprep.subr.mxu0 0.0
      %1746 = vmatpush1.msra.mxu0 0.0
      %1747 = vmatprep.subr.mxu0 0.0
      %1748 = vmatpush1.msra.mxu0 0.0
      %1749 = vmatprep.subr.mxu0 0.0
      %1750 = vmatpush1.msra.mxu0 0.0
      %1751 = vmatprep.subr.mxu0 0.0
      %1752 = vmatpush1.msra.mxu0 0.0
      %1753 = vmatprep.subr.mxu0 0.0
      %1754 = vmatpush1.msra.mxu0 0.0
      %1755 = vmatprep.subr.mxu0 0.0
      %1756 = vmatpush1.msra.mxu0 0.0
      %1757 = vmatprep.subr.mxu0 0.0
      %1758 = vmatpush1.msra.mxu0 0.0
      %1759 = vmatprep.subr.mxu0 0.0
      %1760 = vmatpush1.msra.mxu0 0.0
      %1761 = vmatprep.subr.mxu0 0.0
      %1762 = vmatpush1.msra.mxu0 0.0
      %1763 = vmatprep.subr.mxu0 0.0
      %1764 = vmatpush1.msra.mxu0 0.0
      %1765 = vmatprep.subr.mxu0 0.0
      %1766 = vmatpush1.msra.mxu0 0.0
      %1767 = vmatprep.subr.mxu0 0.0
      %1768 = vmatpush1.msra.mxu0 0.0
      %1769 = vmatprep.subr.mxu0 0.0
      %1770 = vmatpush1.msra.mxu0 0.0
      %1771 = vmatprep.subr.mxu0 0.0
      %1772 = vmatpush1.msra.mxu0 0.0
      %1773 = vmatprep.subr.mxu0 0.0
      %1774 = vmatpush1.msra.mxu0 0.0
      %1775 = vmatprep.subr.mxu0 0.0
      %1776 = vmatpush1.msra.mxu0 0.0
      %1777 = vmatprep.subr.mxu0 0.0
      %1778 = vmatpush1.msra.mxu0 0.0
      %1779 = vmatprep.mubr.f32.mxu0 0.0
      %1780 = vmatmul.mubr.f32.gmra.mrb[0].mxu0 %v1713
      %v1781 = vpop.f32.mrb[0].mxu0
      %v1782 = vadd.f32 %v1711, %v1781
      %v1783 = vpop.f32.mrb[0].mxu0
      %1784 = vdwg.mxu0
      %v1785 = vmul.f32 %v1782, 0.5
      %v1786 = vmul.f32 %v1782, 0.70710677
      %v1787 = verf.f32.pop %v1786
      %v1788 = vadd.f32 %v1787, 1.0
      %v1789 = vmul.f32 %v1785, %v1788
      %v1790 = vlaneseq
      %v1791 = vshrl.u32 %v1790, 7
      %v1792 = vsub.s32 0, %v1791
      %v1793 = vrot.slane %v608, %v1792
      %1794 = vmatprep.subr.mxu0 0.0
      %1795 = vmatpush1.msra.mxu0 %v592
      %1796 = vmatprep.subr.mxu0 0.0
      %1797 = vmatpush1.msra.mxu0 %v593
      %1798 = vmatprep.subr.mxu0 0.0
      %1799 = vmatpush1.msra.mxu0 %v594
      %1800 = vmatprep.subr.mxu0 0.0
      %1801 = vmatpush1.msra.mxu0 %v595
      %1802 = vmatprep.subr.mxu0 0.0
      %1803 = vmatpush1.msra.mxu0 %v596
      %1804 = vmatprep.subr.mxu0 0.0
      %1805 = vmatpush1.msra.mxu0 %v597
      %1806 = vmatprep.subr.mxu0 0.0
      %1807 = vmatpush1.msra.mxu0 %v598
      %1808 = vmatprep.subr.mxu0 0.0
      %1809 = vmatpush1.msra.mxu0 %v599
      %1810 = vmatprep.subr.mxu0 0.0
      %1811 = vmatpush1.msra.mxu0 %v600
      %1812 = vmatprep.subr.mxu0 0.0
      %1813 = vmatpush1.msra.mxu0 %v601
      %1814 = vmatprep.subr.mxu0 0.0
      %1815 = vmatpush1.msra.mxu0 %v602
      %1816 = vmatprep.subr.mxu0 0.0
      %1817 = vmatpush1.msra.mxu0 %v603
      %1818 = vmatprep.subr.mxu0 0.0
      %1819 = vmatpush1.msra.mxu0 %v604
      %1820 = vmatprep.subr.mxu0 0.0
      %1821 = vmatpush1.msra.mxu0 %v605
      %1822 = vmatprep.subr.mxu0 0.0
      %1823 = vmatpush1.msra.mxu0 %v606
      %1824 = vmatprep.subr.mxu0 0.0
      %1825 = vmatpush1.msra.mxu0 %v607
      %1826 = vmatprep.subr.mxu0 0.0
      %1827 = vmatpush1.msra.mxu0 0.0
      %1828 = vmatprep.subr.mxu0 0.0
      %1829 = vmatpush1.msra.mxu0 0.0
      %1830 = vmatprep.subr.mxu0 0.0
      %1831 = vmatpush1.msra.mxu0 0.0
      %1832 = vmatprep.subr.mxu0 0.0
      %1833 = vmatpush1.msra.mxu0 0.0
      %1834 = vmatprep.subr.mxu0 0.0
      %1835 = vmatpush1.msra.mxu0 0.0
      %1836 = vmatprep.subr.mxu0 0.0
      %1837 = vmatpush1.msra.mxu0 0.0
      %1838 = vmatprep.subr.mxu0 0.0
      %1839 = vmatpush1.msra.mxu0 0.0
      %1840 = vmatprep.subr.mxu0 0.0
      %1841 = vmatpush1.msra.mxu0 0.0
      %1842 = vmatprep.subr.mxu0 0.0
      %1843 = vmatpush1.msra.mxu0 0.0
      %1844 = vmatprep.subr.mxu0 0.0
      %1845 = vmatpush1.msra.mxu0 0.0
      %1846 = vmatprep.subr.mxu0 0.0
      %1847 = vmatpush1.msra.mxu0 0.0
      %1848 = vmatprep.subr.mxu0 0.0
      %1849 = vmatpush1.msra.mxu0 0.0
      %1850 = vmatprep.subr.mxu0 0.0
      %1851 = vmatpush1.msra.mxu0 0.0
      %1852 = vmatprep.subr.mxu0 0.0
      %1853 = vmatpush1.msra.mxu0 0.0
      %1854 = vmatprep.subr.mxu0 0.0
      %1855 = vmatpush1.msra.mxu0 0.0
      %1856 = vmatprep.subr.mxu0 0.0
      %1857 = vmatpush1.msra.mxu0 0.0
      %1858 = vmatprep.mubr.f32.mxu0 0.0
      %1859 = vmatmul.mubr.f32.gmra.mrb[0].mxu0 %v1789
      %v1860 = vpop.f32.mrb[0].mxu0
      %v1861 = vadd.f32 %v1793, %v1860
      %v1862 = vpop.f32.mrb[0].mxu0
      %1863 = vdwg.mxu0
      %v1864 = vadd.f32 %v1684, %v1861
      %v1865 = vld [vmem:[%s2 + $0x1] sm:$0x1]
      %v1866 = vld [vmem:[%s3 + $0x1] sm:$0x1]
      %s1867 = scalar_lea.vmem %s4, 32
      %v1868 = vld [vmem:[%s1867] sm:$0xff]
      %v1869 = vld [vmem:[%s1867 + $0x8] sm:$0xff]
      %v1870 = vld [vmem:[%s1867 + $0x10] sm:$0xff]
      %v1871 = vld [vmem:[%s1867 + $0x18] sm:$0xff]
      %v1872 = vld [vmem:[%s5 + $0x1] sm:$0x1]
      %s1873 = scalar_lea.vmem %s6, 32
      %v1874 = vld [vmem:[%s1873] sm:$0xff]
      %v1875 = vld [vmem:[%s1873 + $0x8] sm:$0xff]
      %v1876 = vld [vmem:[%s1873 + $0x10] sm:$0xff]
      %v1877 = vld [vmem:[%s1873 + $0x18] sm:$0xff]
      %v1878 = vld [vmem:[%s7 + $0x1] sm:$0x1]
      %v1879 = vld [vmem:[%s8 + $0x1] sm:$0x1]
      %v1880 = vld [vmem:[%s9 + $0x1] sm:$0x1]
      %s1881 = scalar_lea.vmem %s10, 32
      %v1882 = vld [vmem:[%s1881] sm:$0xff]
      %v1883 = vld [vmem:[%s1881 + $0x8] sm:$0xff]
      %v1884 = vld [vmem:[%s1881 + $0x10] sm:$0xff]
      %v1885 = vld [vmem:[%s1881 + $0x18] sm:$0xff]
      %v1886 = vld [vmem:[%s11 + $0x1] sm:$0x1]
      %s1887 = scalar_lea.vmem %s12, 128
      %v1888 = vld [vmem:[%s1887] sm:$0xff]
      %v1889 = vld [vmem:[%s1887 + $0x8] sm:$0xff]
      %v1890 = vld [vmem:[%s1887 + $0x10] sm:$0xff]
      %v1891 = vld [vmem:[%s1887 + $0x18] sm:$0xff]
      %v1892 = vld [vmem:[%s1887 + $0x20] sm:$0xff]
      %v1893 = vld [vmem:[%s1887 + $0x28] sm:$0xff]
      %v1894 = vld [vmem:[%s1887 + $0x30] sm:$0xff]
      %v1895 = vld [vmem:[%s1887 + $0x38] sm:$0xff]
      %v1896 = vld [vmem:[%s1887 + $0x40] sm:$0xff]
      %v1897 = vld [vmem:[%s1887 + $0x48] sm:$0xff]
      %v1898 = vld [vmem:[%s1887 + $0x50] sm:$0xff]
      %v1899 = vld [vmem:[%s1887 + $0x58] sm:$0xff]
      %v1900 = vld [vmem:[%s1887 + $0x60] sm:$0xff]
      %v1901 = vld [vmem:[%s1887 + $0x68] sm:$0xff]
      %v1902 = vld [vmem:[%s1887 + $0x70] sm:$0xff]
      %v1903 = vld [vmem:[%s1887 + $0x78] sm:$0xff]
      %v1904 = vld [vmem:[%s13 + $0x1] sm:$0x1]
      %v1905 = vsel %vm609, %v1864, 0.0
      %1906 = vadd.xlane.f32.xlu0 %v1905
      %v1907 = vpop.xlane.xlu0 %1906
      %v1908 = vmul.f32 %v1907, %v613
      %v1909 = vsub.f32 %v1864, %v1908
      %v1910 = vmul.f32 %v1909, %v1909
      %v1911 = vsel %vm609, %v1910, 0.0
      %1912 = vadd.xlane.f32.xlu0 %v1911
      %v1913 = vpop.xlane.xlu0 %1912
      %v1914 = vmul.f32 %v1913, %v613
      %v1915 = vadd.f32 %v1914, 1e-12
      %v1916 = vrsqrt.pop %v1915
      %v1917 = vmul.f32 %v1909, %v1916
      %v1918 = vlaneseq
      %v1919 = vshrl.u32 %v1918, 7
      %v1920 = vsub.s32 0, %v1919
      %v1921 = vrot.slane %v1865, %v1920
      %v1922 = vmul.f32 %v1917, %v1921
      %v1923 = vlaneseq
      %v1924 = vshrl.u32 %v1923, 7
      %v1925 = vsub.s32 0, %v1924
      %v1926 = vrot.slane %v1866, %v1925
      %v1927 = vadd.f32 %v1922, %v1926
      %v1928 = vlaneseq
      %v1929 = vshrl.u32 %v1928, 7
      %v1930 = vsub.s32 0, %v1929
      %v1931 = vrot.slane %v1872, %v1930
      %v1933 = vsel %vm609, %v1927, 0
      %1935 = vmatprep.subr.mxu0 0.0
      %1936 = vmatpush1.msra.mxu0 %v1868
      %1937 = vmatprep.subr.mxu0 0.0
      %1938 = vmatpush1.msra.mxu0 %v1869
      %1939 = vmatprep.subr.mxu0 0.0
      %1940 = vmatpush1.msra.mxu0 %v1870
      %1941 = vmatprep.subr.mxu0 0.0
      %1942 = vmatpush1.msra.mxu0 %v1871
      %1943 = vmatprep.subr.mxu0 0.0
      %1944 = vmatpush1.msra.mxu0 0.0
      %1945 = vmatprep.subr.mxu0 0.0
      %1946 = vmatpush1.msra.mxu0 0.0
      %1947 = vmatprep.subr.mxu0 0.0
      %1948 = vmatpush1.msra.mxu0 0.0
      %1949 = vmatprep.subr.mxu0 0.0
      %1950 = vmatpush1.msra.mxu0 0.0
      %1951 = vmatprep.subr.mxu0 0.0
      %1952 = vmatpush1.msra.mxu0 0.0
      %1953 = vmatprep.subr.mxu0 0.0
      %1954 = vmatpush1.msra.mxu0 0.0
      %1955 = vmatprep.subr.mxu0 0.0
      %1956 = vmatpush1.msra.mxu0 0.0
      %1957 = vmatprep.subr.mxu0 0.0
      %1958 = vmatpush1.msra.mxu0 0.0
      %1959 = vmatprep.subr.mxu0 0.0
      %1960 = vmatpush1.msra.mxu0 0.0
      %1961 = vmatprep.subr.mxu0 0.0
      %1962 = vmatpush1.msra.mxu0 0.0
      %1963 = vmatprep.subr.mxu0 0.0
      %1964 = vmatpush1.msra.mxu0 0.0
      %1965 = vmatprep.subr.mxu0 0.0
      %1966 = vmatpush1.msra.mxu0 0.0
      %1967 = vmatprep.subr.mxu0 0.0
      %1968 = vmatpush1.msra.mxu0 0.0
      %1969 = vmatprep.subr.mxu0 0.0
      %1970 = vmatpush1.msra.mxu0 0.0
      %1971 = vmatprep.subr.mxu0 0.0
      %1972 = vmatpush1.msra.mxu0 0.0
      %1973 = vmatprep.subr.mxu0 0.0
      %1974 = vmatpush1.msra.mxu0 0.0
      %1975 = vmatprep.subr.mxu0 0.0
      %1976 = vmatpush1.msra.mxu0 0.0
      %1977 = vmatprep.subr.mxu0 0.0
      %1978 = vmatpush1.msra.mxu0 0.0
      %1979 = vmatprep.subr.mxu0 0.0
      %1980 = vmatpush1.msra.mxu0 0.0
      %1981 = vmatprep.subr.mxu0 0.0
      %1982 = vmatpush1.msra.mxu0 0.0
      %1983 = vmatprep.subr.mxu0 0.0
      %1984 = vmatpush1.msra.mxu0 0.0
      %1985 = vmatprep.subr.mxu0 0.0
      %1986 = vmatpush1.msra.mxu0 0.0
      %1987 = vmatprep.subr.mxu0 0.0
      %1988 = vmatpush1.msra.mxu0 0.0
      %1989 = vmatprep.subr.mxu0 0.0
      %1990 = vmatpush1.msra.mxu0 0.0
      %1991 = vmatprep.subr.mxu0 0.0
      %1992 = vmatpush1.msra.mxu0 0.0
      %1993 = vmatprep.subr.mxu0 0.0
      %1994 = vmatpush1.msra.mxu0 0.0
      %1995 = vmatprep.subr.mxu0 0.0
      %1996 = vmatpush1.msra.mxu0 0.0
      %1997 = vmatprep.subr.mxu0 0.0
      %1998 = vmatpush1.msra.mxu0 0.0
      %1999 = vmatprep.mubr.f32.mxu0 0.0
      %2000 = vmatmul.mubr.f32.gmra.mrb[0].mxu0 %v1933
      %v2001 = vpop.f32.mrb[0].mxu0
      %v2002 = vadd.f32 %v1931, %v2001
      %v2003 = vpop.f32.mrb[0].mxu0
      %2004 = vdwg.mxu0
      %2006 = vrot.lane.b32.xlu0 %v2002, 96
      %v2007 = vpop.permute.xlu0 %2006
      %v2008 = vsel %vm714, %v2002, 0
      %v2010 = vsel %vm714, %v2007, 0
      %2012 = vmatprep.subr.mxu0 0.0
      %2013 = vmatpush1.xpose.msra.mxu0 %v2010
      %2014 = vmatprep.subr.mxu0 0.0
      %2015 = vmatpush1.xpose.msra.mxu0 0.0
      %2016 = vmatprep.subr.mxu0 0.0
      %2017 = vmatpush1.xpose.msra.mxu0 0.0
      %2018 = vmatprep.subr.mxu0 0.0
      %2019 = vmatpush1.xpose.msra.mxu0 0.0
      %2020 = vmatprep.subr.mxu0 0.0
      %2021 = vmatpush1.xpose.msra.mxu0 0.0
      %2022 = vmatprep.subr.mxu0 0.0
      %2023 = vmatpush1.xpose.msra.mxu0 0.0
      %2024 = vmatprep.subr.mxu0 0.0
      %2025 = vmatpush1.xpose.msra.mxu0 0.0
      %2026 = vmatprep.subr.mxu0 0.0
      %2027 = vmatpush1.xpose.msra.mxu0 0.0
      %2028 = vmatprep.subr.mxu0 0.0
      %2029 = vmatpush1.xpose.msra.mxu0 0.0
      %2030 = vmatprep.subr.mxu0 0.0
      %2031 = vmatpush1.xpose.msra.mxu0 0.0
      %2032 = vmatprep.subr.mxu0 0.0
      %2033 = vmatpush1.xpose.msra.mxu0 0.0
      %2034 = vmatprep.subr.mxu0 0.0
      %2035 = vmatpush1.xpose.msra.mxu0 0.0
      %2036 = vmatprep.subr.mxu0 0.0
      %2037 = vmatpush1.xpose.msra.mxu0 0.0
      %2038 = vmatprep.subr.mxu0 0.0
      %2039 = vmatpush1.xpose.msra.mxu0 0.0
      %2040 = vmatprep.subr.mxu0 0.0
      %2041 = vmatpush1.xpose.msra.mxu0 0.0
      %2042 = vmatprep.subr.mxu0 0.0
      %2043 = vmatpush1.xpose.msra.mxu0 0.0
      %2044 = vmatprep.subr.mxu0 0.0
      %2045 = vmatpush1.xpose.msra.mxu0 0.0
      %2046 = vmatprep.subr.mxu0 0.0
      %2047 = vmatpush1.xpose.msra.mxu0 0.0
      %2048 = vmatprep.subr.mxu0 0.0
      %2049 = vmatpush1.xpose.msra.mxu0 0.0
      %2050 = vmatprep.subr.mxu0 0.0
      %2051 = vmatpush1.xpose.msra.mxu0 0.0
      %2052 = vmatprep.subr.mxu0 0.0
      %2053 = vmatpush1.xpose.msra.mxu0 0.0
      %2054 = vmatprep.subr.mxu0 0.0
      %2055 = vmatpush1.xpose.msra.mxu0 0.0
      %2056 = vmatprep.subr.mxu0 0.0
      %2057 = vmatpush1.xpose.msra.mxu0 0.0
      %2058 = vmatprep.subr.mxu0 0.0
      %2059 = vmatpush1.xpose.msra.mxu0 0.0
      %2060 = vmatprep.subr.mxu0 0.0
      %2061 = vmatpush1.xpose.msra.mxu0 0.0
      %2062 = vmatprep.subr.mxu0 0.0
      %2063 = vmatpush1.xpose.msra.mxu0 0.0
      %2064 = vmatprep.subr.mxu0 0.0
      %2065 = vmatpush1.xpose.msra.mxu0 0.0
      %2066 = vmatprep.subr.mxu0 0.0
      %2067 = vmatpush1.xpose.msra.mxu0 0.0
      %2068 = vmatprep.subr.mxu0 0.0
      %2069 = vmatpush1.xpose.msra.mxu0 0.0
      %2070 = vmatprep.subr.mxu0 0.0
      %2071 = vmatpush1.xpose.msra.mxu0 0.0
      %2072 = vmatprep.subr.mxu0 0.0
      %2073 = vmatpush1.xpose.msra.mxu0 0.0
      %2074 = vmatprep.subr.mxu0 0.0
      %2075 = vmatpush1.xpose.msra.mxu0 0.0
      %2076 = vmatprep.mubr.f32.mxu0 0.0
      %2077 = vmatmul.mubr.f32.gmra.mrb[0].mxu0 %v2008
      %v2078 = vpop.f32.mrb[0].mxu0
      %v2079 = vadd.f32 0.0, %v2078
      %v2080 = vpop.f32.mrb[0].mxu0
      %2081 = vdwg.mxu0
      %v2082 = vmul.f32 %v2079, 0.35355338
      %v2083 = vadd.f32 %v2082, %v794
      %v2084 = vsel %vm714, %v2083, -inf
      %2085 = vmax.xlane.f32.xlu0 %v2084
      %v2086 = vpop.xlane.xlu0 %2085
      %v2087 = vsub.f32 %v2083, %v2086
      %v2088 = vmul.f32 %v2087, 1.442695
      %v2089 = vpow.pop %v2088
      %v2090 = vsel %vm714, %v2089, 0.0
      %2091 = vadd.xlane.f32.xlu0 %v2090
      %v2092 = vpop.xlane.xlu0 %2091
      %v2093 = vrcp.pop %v2092
      %v2094 = vmul.f32 %v2089, %v2093
      %2095 = vrot.lane.b32.xlu0 %v2002, 64
      %v2096 = vpop.permute.xlu0 %2095
      %v2099 = vsel %vm714, %v2094, 0
      %2101 = vmatprep.subr.mxu0 0.0
      %2102 = vmatpush1.msra.mxu0 %v2096
      %2103 = vmatprep.subr.mxu0 0.0
      %2104 = vmatpush1.msra.mxu0 0.0
      %2105 = vmatprep.subr.mxu0 0.0
      %2106 = vmatpush1.msra.mxu0 0.0
      %2107 = vmatprep.subr.mxu0 0.0
      %2108 = vmatpush1.msra.mxu0 0.0
      %2109 = vmatprep.subr.mxu0 0.0
      %2110 = vmatpush1.msra.mxu0 0.0
      %2111 = vmatprep.subr.mxu0 0.0
      %2112 = vmatpush1.msra.mxu0 0.0
      %2113 = vmatprep.subr.mxu0 0.0
      %2114 = vmatpush1.msra.mxu0 0.0
      %2115 = vmatprep.subr.mxu0 0.0
      %2116 = vmatpush1.msra.mxu0 0.0
      %2117 = vmatprep.subr.mxu0 0.0
      %2118 = vmatpush1.msra.mxu0 0.0
      %2119 = vmatprep.subr.mxu0 0.0
      %2120 = vmatpush1.msra.mxu0 0.0
      %2121 = vmatprep.subr.mxu0 0.0
      %2122 = vmatpush1.msra.mxu0 0.0
      %2123 = vmatprep.subr.mxu0 0.0
      %2124 = vmatpush1.msra.mxu0 0.0
      %2125 = vmatprep.subr.mxu0 0.0
      %2126 = vmatpush1.msra.mxu0 0.0
      %2127 = vmatprep.subr.mxu0 0.0
      %2128 = vmatpush1.msra.mxu0 0.0
      %2129 = vmatprep.subr.mxu0 0.0
      %2130 = vmatpush1.msra.mxu0 0.0
      %2131 = vmatprep.subr.mxu0 0.0
      %2132 = vmatpush1.msra.mxu0 0.0
      %2133 = vmatprep.subr.mxu0 0.0
      %2134 = vmatpush1.msra.mxu0 0.0
      %2135 = vmatprep.subr.mxu0 0.0
      %2136 = vmatpush1.msra.mxu0 0.0
      %2137 = vmatprep.subr.mxu0 0.0
      %2138 = vmatpush1.msra.mxu0 0.0
      %2139 = vmatprep.subr.mxu0 0.0
      %2140 = vmatpush1.msra.mxu0 0.0
      %2141 = vmatprep.subr.mxu0 0.0
      %2142 = vmatpush1.msra.mxu0 0.0
      %2143 = vmatprep.subr.mxu0 0.0
      %2144 = vmatpush1.msra.mxu0 0.0
      %2145 = vmatprep.subr.mxu0 0.0
      %2146 = vmatpush1.msra.mxu0 0.0
      %2147 = vmatprep.subr.mxu0 0.0
      %2148 = vmatpush1.msra.mxu0 0.0
      %2149 = vmatprep.subr.mxu0 0.0
      %2150 = vmatpush1.msra.mxu0 0.0
      %2151 = vmatprep.subr.mxu0 0.0
      %2152 = vmatpush1.msra.mxu0 0.0
      %2153 = vmatprep.subr.mxu0 0.0
      %2154 = vmatpush1.msra.mxu0 0.0
      %2155 = vmatprep.subr.mxu0 0.0
      %2156 = vmatpush1.msra.mxu0 0.0
      %2157 = vmatprep.subr.mxu0 0.0
      %2158 = vmatpush1.msra.mxu0 0.0
      %2159 = vmatprep.subr.mxu0 0.0
      %2160 = vmatpush1.msra.mxu0 0.0
      %2161 = vmatprep.subr.mxu0 0.0
      %2162 = vmatpush1.msra.mxu0 0.0
      %2163 = vmatprep.subr.mxu0 0.0
      %2164 = vmatpush1.msra.mxu0 0.0
      %2165 = vmatprep.mubr.f32.mxu0 0.0
      %2166 = vmatmul.mubr.f32.gmra.mrb[0].mxu0 %v2099
      %v2167 = vpop.f32.mrb[0].mxu0
      %v2168 = vadd.f32 0.0, %v2167
      %v2169 = vpop.f32.mrb[0].mxu0
      %2170 = vdwg.mxu0
      %2171 = vrot.lane.b32.xlu0 %v2002, 120
      %v2172 = vpop.permute.xlu0 %2171
      %2173 = vrot.lane.b32.xlu0 %v2002, 88
      %v2174 = vpop.permute.xlu0 %2173
      %v2175 = vsel %vm714, %v2172, 0
      %v2177 = vsel %vm714, %v2174, 0
      %2179 = vmatprep.subr.mxu0 0.0
      %2180 = vmatpush1.xpose.msra.mxu0 %v2177
      %2181 = vmatprep.subr.mxu0 0.0
      %2182 = vmatpush1.xpose.msra.mxu0 0.0
      %2183 = vmatprep.subr.mxu0 0.0
      %2184 = vmatpush1.xpose.msra.mxu0 0.0
      %2185 = vmatprep.subr.mxu0 0.0
      %2186 = vmatpush1.xpose.msra.mxu0 0.0
      %2187 = vmatprep.subr.mxu0 0.0
      %2188 = vmatpush1.xpose.msra.mxu0 0.0
      %2189 = vmatprep.subr.mxu0 0.0
      %2190 = vmatpush1.xpose.msra.mxu0 0.0
      %2191 = vmatprep.subr.mxu0 0.0
      %2192 = vmatpush1.xpose.msra.mxu0 0.0
      %2193 = vmatprep.subr.mxu0 0.0
      %2194 = vmatpush1.xpose.msra.mxu0 0.0
      %2195 = vmatprep.subr.mxu0 0.0
      %2196 = vmatpush1.xpose.msra.mxu0 0.0
      %2197 = vmatprep.subr.mxu0 0.0
      %2198 = vmatpush1.xpose.msra.mxu0 0.0
      %2199 = vmatprep.subr.mxu0 0.0
      %2200 = vmatpush1.xpose.msra.mxu0 0.0
      %2201 = vmatprep.subr.mxu0 0.0
      %2202 = vmatpush1.xpose.msra.mxu0 0.0
      %2203 = vmatprep.subr.mxu0 0.0
      %2204 = vmatpush1.xpose.msra.mxu0 0.0
      %2205 = vmatprep.subr.mxu0 0.0
      %2206 = vmatpush1.xpose.msra.mxu0 0.0
      %2207 = vmatprep.subr.mxu0 0.0
      %2208 = vmatpush1.xpose.msra.mxu0 0.0
      %2209 = vmatprep.subr.mxu0 0.0
      %2210 = vmatpush1.xpose.msra.mxu0 0.0
      %2211 = vmatprep.subr.mxu0 0.0
      %2212 = vmatpush1.xpose.msra.mxu0 0.0
      %2213 = vmatprep.subr.mxu0 0.0
      %2214 = vmatpush1.xpose.msra.mxu0 0.0
      %2215 = vmatprep.subr.mxu0 0.0
      %2216 = vmatpush1.xpose.msra.mxu0 0.0
      %2217 = vmatprep.subr.mxu0 0.0
      %2218 = vmatpush1.xpose.msra.mxu0 0.0
      %2219 = vmatprep.subr.mxu0 0.0
      %2220 = vmatpush1.xpose.msra.mxu0 0.0
      %2221 = vmatprep.subr.mxu0 0.0
      %2222 = vmatpush1.xpose.msra.mxu0 0.0
      %2223 = vmatprep.subr.mxu0 0.0
      %2224 = vmatpush1.xpose.msra.mxu0 0.0
      %2225 = vmatprep.subr.mxu0 0.0
      %2226 = vmatpush1.xpose.msra.mxu0 0.0
      %2227 = vmatprep.subr.mxu0 0.0
      %2228 = vmatpush1.xpose.msra.mxu0 0.0
      %2229 = vmatprep.subr.mxu0 0.0
      %2230 = vmatpush1.xpose.msra.mxu0 0.0
      %2231 = vmatprep.subr.mxu0 0.0
      %2232 = vmatpush1.xpose.msra.mxu0 0.0
      %2233 = vmatprep.subr.mxu0 0.0
      %2234 = vmatpush1.xpose.msra.mxu0 0.0
      %2235 = vmatprep.subr.mxu0 0.0
      %2236 = vmatpush1.xpose.msra.mxu0 0.0
      %2237 = vmatprep.subr.mxu0 0.0
      %2238 = vmatpush1.xpose.msra.mxu0 0.0
      %2239 = vmatprep.subr.mxu0 0.0
      %2240 = vmatpush1.xpose.msra.mxu0 0.0
      %2241 = vmatprep.subr.mxu0 0.0
      %2242 = vmatpush1.xpose.msra.mxu0 0.0
      %2243 = vmatprep.mubr.f32.mxu0 0.0
      %2244 = vmatmul.mubr.f32.gmra.mrb[0].mxu0 %v2175
      %v2245 = vpop.f32.mrb[0].mxu0
      %v2246 = vadd.f32 0.0, %v2245
      %v2247 = vpop.f32.mrb[0].mxu0
      %2248 = vdwg.mxu0
      %v2249 = vmul.f32 %v2246, 0.35355338
      %v2250 = vadd.f32 %v2249, %v794
      %v2251 = vsel %vm714, %v2250, -inf
      %2252 = vmax.xlane.f32.xlu0 %v2251
      %v2253 = vpop.xlane.xlu0 %2252
      %v2254 = vsub.f32 %v2250, %v2253
      %v2255 = vmul.f32 %v2254, 1.442695
      %v2256 = vpow.pop %v2255
      %v2257 = vsel %vm714, %v2256, 0.0
      %2258 = vadd.xlane.f32.xlu0 %v2257
      %v2259 = vpop.xlane.xlu0 %2258
      %v2260 = vrcp.pop %v2259
      %v2261 = vmul.f32 %v2256, %v2260
      %2262 = vrot.lane.b32.xlu0 %v2002, 56
      %v2263 = vpop.permute.xlu0 %2262
      %v2266 = vsel %vm714, %v2261, 0
      %2268 = vmatprep.subr.mxu0 0.0
      %2269 = vmatpush1.msra.mxu0 %v2263
      %2270 = vmatprep.subr.mxu0 0.0
      %2271 = vmatpush1.msra.mxu0 0.0
      %2272 = vmatprep.subr.mxu0 0.0
      %2273 = vmatpush1.msra.mxu0 0.0
      %2274 = vmatprep.subr.mxu0 0.0
      %2275 = vmatpush1.msra.mxu0 0.0
      %2276 = vmatprep.subr.mxu0 0.0
      %2277 = vmatpush1.msra.mxu0 0.0
      %2278 = vmatprep.subr.mxu0 0.0
      %2279 = vmatpush1.msra.mxu0 0.0
      %2280 = vmatprep.subr.mxu0 0.0
      %2281 = vmatpush1.msra.mxu0 0.0
      %2282 = vmatprep.subr.mxu0 0.0
      %2283 = vmatpush1.msra.mxu0 0.0
      %2284 = vmatprep.subr.mxu0 0.0
      %2285 = vmatpush1.msra.mxu0 0.0
      %2286 = vmatprep.subr.mxu0 0.0
      %2287 = vmatpush1.msra.mxu0 0.0
      %2288 = vmatprep.subr.mxu0 0.0
      %2289 = vmatpush1.msra.mxu0 0.0
      %2290 = vmatprep.subr.mxu0 0.0
      %2291 = vmatpush1.msra.mxu0 0.0
      %2292 = vmatprep.subr.mxu0 0.0
      %2293 = vmatpush1.msra.mxu0 0.0
      %2294 = vmatprep.subr.mxu0 0.0
      %2295 = vmatpush1.msra.mxu0 0.0
      %2296 = vmatprep.subr.mxu0 0.0
      %2297 = vmatpush1.msra.mxu0 0.0
      %2298 = vmatprep.subr.mxu0 0.0
      %2299 = vmatpush1.msra.mxu0 0.0
      %2300 = vmatprep.subr.mxu0 0.0
      %2301 = vmatpush1.msra.mxu0 0.0
      %2302 = vmatprep.subr.mxu0 0.0
      %2303 = vmatpush1.msra.mxu0 0.0
      %2304 = vmatprep.subr.mxu0 0.0
      %2305 = vmatpush1.msra.mxu0 0.0
      %2306 = vmatprep.subr.mxu0 0.0
      %2307 = vmatpush1.msra.mxu0 0.0
      %2308 = vmatprep.subr.mxu0 0.0
      %2309 = vmatpush1.msra.mxu0 0.0
      %2310 = vmatprep.subr.mxu0 0.0
      %2311 = vmatpush1.msra.mxu0 0.0
      %2312 = vmatprep.subr.mxu0 0.0
      %2313 = vmatpush1.msra.mxu0 0.0
      %2314 = vmatprep.subr.mxu0 0.0
      %2315 = vmatpush1.msra.mxu0 0.0
      %2316 = vmatprep.subr.mxu0 0.0
      %2317 = vmatpush1.msra.mxu0 0.0
      %2318 = vmatprep.subr.mxu0 0.0
      %2319 = vmatpush1.msra.mxu0 0.0
      %2320 = vmatprep.subr.mxu0 0.0
      %2321 = vmatpush1.msra.mxu0 0.0
      %2322 = vmatprep.subr.mxu0 0.0
      %2323 = vmatpush1.msra.mxu0 0.0
      %2324 = vmatprep.subr.mxu0 0.0
      %2325 = vmatpush1.msra.mxu0 0.0
      %2326 = vmatprep.subr.mxu0 0.0
      %2327 = vmatpush1.msra.mxu0 0.0
      %2328 = vmatprep.subr.mxu0 0.0
      %2329 = vmatpush1.msra.mxu0 0.0
      %2330 = vmatprep.subr.mxu0 0.0
      %2331 = vmatpush1.msra.mxu0 0.0
      %2332 = vmatprep.mubr.f32.mxu0 0.0
      %2333 = vmatmul.mubr.f32.gmra.mrb[0].mxu0 %v2266
      %v2334 = vpop.f32.mrb[0].mxu0
      %v2335 = vadd.f32 0.0, %v2334
      %v2336 = vpop.f32.mrb[0].mxu0
      %2337 = vdwg.mxu0
      %v2339 = vsel %vm714, %v2335, 0
      %2341 = vmatprep.subr.mxu0 0.0
      %2342 = vmatpush1.msra.mxu0 %v1875
      %2343 = vmatprep.subr.mxu0 0.0
      %2344 = vmatpush1.msra.mxu0 0.0
      %2345 = vmatprep.subr.mxu0 0.0
      %2346 = vmatpush1.msra.mxu0 0.0
      %2347 = vmatprep.subr.mxu0 0.0
      %2348 = vmatpush1.msra.mxu0 0.0
      %2349 = vmatprep.subr.mxu0 0.0
      %2350 = vmatpush1.msra.mxu0 0.0
      %2351 = vmatprep.subr.mxu0 0.0
      %2352 = vmatpush1.msra.mxu0 0.0
      %2353 = vmatprep.subr.mxu0 0.0
      %2354 = vmatpush1.msra.mxu0 0.0
      %2355 = vmatprep.subr.mxu0 0.0
      %2356 = vmatpush1.msra.mxu0 0.0
      %2357 = vmatprep.subr.mxu0 0.0
      %2358 = vmatpush1.msra.mxu0 0.0
      %2359 = vmatprep.subr.mxu0 0.0
      %2360 = vmatpush1.msra.mxu0 0.0
      %2361 = vmatprep.subr.mxu0 0.0
      %2362 = vmatpush1.msra.mxu0 0.0
      %2363 = vmatprep.subr.mxu0 0.0
      %2364 = vmatpush1.msra.mxu0 0.0
      %2365 = vmatprep.subr.mxu0 0.0
      %2366 = vmatpush1.msra.mxu0 0.0
      %2367 = vmatprep.subr.mxu0 0.0
      %2368 = vmatpush1.msra.mxu0 0.0
      %2369 = vmatprep.subr.mxu0 0.0
      %2370 = vmatpush1.msra.mxu0 0.0
      %2371 = vmatprep.subr.mxu0 0.0
      %2372 = vmatpush1.msra.mxu0 0.0
      %2373 = vmatprep.subr.mxu0 0.0
      %2374 = vmatpush1.msra.mxu0 0.0
      %2375 = vmatprep.subr.mxu0 0.0
      %2376 = vmatpush1.msra.mxu0 0.0
      %2377 = vmatprep.subr.mxu0 0.0
      %2378 = vmatpush1.msra.mxu0 0.0
      %2379 = vmatprep.subr.mxu0 0.0
      %2380 = vmatpush1.msra.mxu0 0.0
      %2381 = vmatprep.subr.mxu0 0.0
      %2382 = vmatpush1.msra.mxu0 0.0
      %2383 = vmatprep.subr.mxu0 0.0
      %2384 = vmatpush1.msra.mxu0 0.0
      %2385 = vmatprep.subr.mxu0 0.0
      %2386 = vmatpush1.msra.mxu0 0.0
      %2387 = vmatprep.subr.mxu0 0.0
      %2388 = vmatpush1.msra.mxu0 0.0
      %2389 = vmatprep.subr.mxu0 0.0
      %2390 = vmatpush1.msra.mxu0 0.0
      %2391 = vmatprep.subr.mxu0 0.0
      %2392 = vmatpush1.msra.mxu0 0.0
      %2393 = vmatprep.subr.mxu0 0.0
      %2394 = vmatpush1.msra.mxu0 0.0
      %2395 = vmatprep.subr.mxu0 0.0
      %2396 = vmatpush1.msra.mxu0 0.0
      %2397 = vmatprep.subr.mxu0 0.0
      %2398 = vmatpush1.msra.mxu0 0.0
      %2399 = vmatprep.subr.mxu0 0.0
      %2400 = vmatpush1.msra.mxu0 0.0
      %2401 = vmatprep.subr.mxu0 0.0
      %2402 = vmatpush1.msra.mxu0 0.0
      %2403 = vmatprep.subr.mxu0 0.0
      %2404 = vmatpush1.msra.mxu0 0.0
      %2405 = vmatprep.mubr.f32.mxu0 0.0
      %2406 = vmatmul.mubr.f32.gmra.mrb[0].mxu0 %v2339
      %v2407 = vpop.f32.mrb[0].mxu0
      %v2408 = vadd.f32 0.0, %v2407
      %v2409 = vpop.f32.mrb[0].mxu0
      %2410 = vdwg.mxu0
      %v2412 = vsel %vm714, %v2168, 0
      %2414 = vmatprep.subr.mxu0 0.0
      %2415 = vmatpush1.msra.mxu0 %v1874
      %2416 = vmatprep.subr.mxu0 0.0
      %2417 = vmatpush1.msra.mxu0 0.0
      %2418 = vmatprep.subr.mxu0 0.0
      %2419 = vmatpush1.msra.mxu0 0.0
      %2420 = vmatprep.subr.mxu0 0.0
      %2421 = vmatpush1.msra.mxu0 0.0
      %2422 = vmatprep.subr.mxu0 0.0
      %2423 = vmatpush1.msra.mxu0 0.0
      %2424 = vmatprep.subr.mxu0 0.0
      %2425 = vmatpush1.msra.mxu0 0.0
      %2426 = vmatprep.subr.mxu0 0.0
      %2427 = vmatpush1.msra.mxu0 0.0
      %2428 = vmatprep.subr.mxu0 0.0
      %2429 = vmatpush1.msra.mxu0 0.0
      %2430 = vmatprep.subr.mxu0 0.0
      %2431 = vmatpush1.msra.mxu0 0.0
      %2432 = vmatprep.subr.mxu0 0.0
      %2433 = vmatpush1.msra.mxu0 0.0
      %2434 = vmatprep.subr.mxu0 0.0
      %2435 = vmatpush1.msra.mxu0 0.0
      %2436 = vmatprep.subr.mxu0 0.0
      %2437 = vmatpush1.msra.mxu0 0.0
      %2438 = vmatprep.subr.mxu0 0.0
      %2439 = vmatpush1.msra.mxu0 0.0
      %2440 = vmatprep.subr.mxu0 0.0
      %2441 = vmatpush1.msra.mxu0 0.0
      %2442 = vmatprep.subr.mxu0 0.0
      %2443 = vmatpush1.msra.mxu0 0.0
      %2444 = vmatprep.subr.mxu0 0.0
      %2445 = vmatpush1.msra.mxu0 0.0
      %2446 = vmatprep.subr.mxu0 0.0
      %2447 = vmatpush1.msra.mxu0 0.0
      %2448 = vmatprep.subr.mxu0 0.0
      %2449 = vmatpush1.msra.mxu0 0.0
      %2450 = vmatprep.subr.mxu0 0.0
      %2451 = vmatpush1.msra.mxu0 0.0
      %2452 = vmatprep.subr.mxu0 0.0
      %2453 = vmatpush1.msra.mxu0 0.0
      %2454 = vmatprep.subr.mxu0 0.0
      %2455 = vmatpush1.msra.mxu0 0.0
      %2456 = vmatprep.subr.mxu0 0.0
      %2457 = vmatpush1.msra.mxu0 0.0
      %2458 = vmatprep.subr.mxu0 0.0
      %2459 = vmatpush1.msra.mxu0 0.0
      %2460 = vmatprep.subr.mxu0 0.0
      %2461 = vmatpush1.msra.mxu0 0.0
      %2462 = vmatprep.subr.mxu0 0.0
      %2463 = vmatpush1.msra.mxu0 0.0
      %2464 = vmatprep.subr.mxu0 0.0
      %2465 = vmatpush1.msra.mxu0 0.0
      %2466 = vmatprep.subr.mxu0 0.0
      %2467 = vmatpush1.msra.mxu0 0.0
      %2468 = vmatprep.subr.mxu0 0.0
      %2469 = vmatpush1.msra.mxu0 0.0
      %2470 = vmatprep.subr.mxu0 0.0
      %2471 = vmatpush1.msra.mxu0 0.0
      %2472 = vmatprep.subr.mxu0 0.0
      %2473 = vmatpush1.msra.mxu0 0.0
      %2474 = vmatprep.subr.mxu0 0.0
      %2475 = vmatpush1.msra.mxu0 0.0
      %2476 = vmatprep.subr.mxu0 0.0
      %2477 = vmatpush1.msra.mxu0 0.0
      %2478 = vmatprep.mubr.f32.mxu0 0.0
      %2479 = vmatmul.mubr.f32.gmra.mrb[0].mxu0 %v2412
      %v2480 = vpop.f32.mrb[0].mxu0
      %v2481 = vadd.f32 %v2408, %v2480
      %v2482 = vpop.f32.mrb[0].mxu0
      %2483 = vdwg.mxu0
      %2484 = vrot.lane.b32.xlu0 %v2002, 112
      %v2485 = vpop.permute.xlu0 %2484
      %2486 = vrot.lane.b32.xlu0 %v2002, 80
      %v2487 = vpop.permute.xlu0 %2486
      %v2488 = vsel %vm714, %v2485, 0
      %v2490 = vsel %vm714, %v2487, 0
      %2492 = vmatprep.subr.mxu0 0.0
      %2493 = vmatpush1.xpose.msra.mxu0 %v2490
      %2494 = vmatprep.subr.mxu0 0.0
      %2495 = vmatpush1.xpose.msra.mxu0 0.0
      %2496 = vmatprep.subr.mxu0 0.0
      %2497 = vmatpush1.xpose.msra.mxu0 0.0
      %2498 = vmatprep.subr.mxu0 0.0
      %2499 = vmatpush1.xpose.msra.mxu0 0.0
      %2500 = vmatprep.subr.mxu0 0.0
      %2501 = vmatpush1.xpose.msra.mxu0 0.0
      %2502 = vmatprep.subr.mxu0 0.0
      %2503 = vmatpush1.xpose.msra.mxu0 0.0
      %2504 = vmatprep.subr.mxu0 0.0
      %2505 = vmatpush1.xpose.msra.mxu0 0.0
      %2506 = vmatprep.subr.mxu0 0.0
      %2507 = vmatpush1.xpose.msra.mxu0 0.0
      %2508 = vmatprep.subr.mxu0 0.0
      %2509 = vmatpush1.xpose.msra.mxu0 0.0
      %2510 = vmatprep.subr.mxu0 0.0
      %2511 = vmatpush1.xpose.msra.mxu0 0.0
      %2512 = vmatprep.subr.mxu0 0.0
      %2513 = vmatpush1.xpose.msra.mxu0 0.0
      %2514 = vmatprep.subr.mxu0 0.0
      %2515 = vmatpush1.xpose.msra.mxu0 0.0
      %2516 = vmatprep.subr.mxu0 0.0
      %2517 = vmatpush1.xpose.msra.mxu0 0.0
      %2518 = vmatprep.subr.mxu0 0.0
      %2519 = vmatpush1.xpose.msra.mxu0 0.0
      %2520 = vmatprep.subr.mxu0 0.0
      %2521 = vmatpush1.xpose.msra.mxu0 0.0
      %2522 = vmatprep.subr.mxu0 0.0
      %2523 = vmatpush1.xpose.msra.mxu0 0.0
      %2524 = vmatprep.subr.mxu0 0.0
      %2525 = vmatpush1.xpose.msra.mxu0 0.0
      %2526 = vmatprep.subr.mxu0 0.0
      %2527 = vmatpush1.xpose.msra.mxu0 0.0
      %2528 = vmatprep.subr.mxu0 0.0
      %2529 = vmatpush1.xpose.msra.mxu0 0.0
      %2530 = vmatprep.subr.mxu0 0.0
      %2531 = vmatpush1.xpose.msra.mxu0 0.0
      %2532 = vmatprep.subr.mxu0 0.0
      %2533 = vmatpush1.xpose.msra.mxu0 0.0
      %2534 = vmatprep.subr.mxu0 0.0
      %2535 = vmatpush1.xpose.msra.mxu0 0.0
      %2536 = vmatprep.subr.mxu0 0.0
      %2537 = vmatpush1.xpose.msra.mxu0 0.0
      %2538 = vmatprep.subr.mxu0 0.0
      %2539 = vmatpush1.xpose.msra.mxu0 0.0
      %2540 = vmatprep.subr.mxu0 0.0
      %2541 = vmatpush1.xpose.msra.mxu0 0.0
      %2542 = vmatprep.subr.mxu0 0.0
      %2543 = vmatpush1.xpose.msra.mxu0 0.0
      %2544 = vmatprep.subr.mxu0 0.0
      %2545 = vmatpush1.xpose.msra.mxu0 0.0
      %2546 = vmatprep.subr.mxu0 0.0
      %2547 = vmatpush1.xpose.msra.mxu0 0.0
      %2548 = vmatprep.subr.mxu0 0.0
      %2549 = vmatpush1.xpose.msra.mxu0 0.0
      %2550 = vmatprep.subr.mxu0 0.0
      %2551 = vmatpush1.xpose.msra.mxu0 0.0
      %2552 = vmatprep.subr.mxu0 0.0
      %2553 = vmatpush1.xpose.msra.mxu0 0.0
      %2554 = vmatprep.subr.mxu0 0.0
      %2555 = vmatpush1.xpose.msra.mxu0 0.0
      %2556 = vmatprep.mubr.f32.mxu0 0.0
      %2557 = vmatmul.mubr.f32.gmra.mrb[0].mxu0 %v2488
      %v2558 = vpop.f32.mrb[0].mxu0
      %v2559 = vadd.f32 0.0, %v2558
      %v2560 = vpop.f32.mrb[0].mxu0
      %2561 = vdwg.mxu0
      %v2562 = vmul.f32 %v2559, 0.35355338
      %v2563 = vadd.f32 %v2562, %v794
      %v2564 = vsel %vm714, %v2563, -inf
      %2565 = vmax.xlane.f32.xlu0 %v2564
      %v2566 = vpop.xlane.xlu0 %2565
      %v2567 = vsub.f32 %v2563, %v2566
      %v2568 = vmul.f32 %v2567, 1.442695
      %v2569 = vpow.pop %v2568
      %v2570 = vsel %vm714, %v2569, 0.0
      %2571 = vadd.xlane.f32.xlu0 %v2570
      %v2572 = vpop.xlane.xlu0 %2571
      %v2573 = vrcp.pop %v2572
      %v2574 = vmul.f32 %v2569, %v2573
      %2575 = vrot.lane.b32.xlu0 %v2002, 48
      %v2576 = vpop.permute.xlu0 %2575
      %v2579 = vsel %vm714, %v2574, 0
      %2581 = vmatprep.subr.mxu0 0.0
      %2582 = vmatpush1.msra.mxu0 %v2576
      %2583 = vmatprep.subr.mxu0 0.0
      %2584 = vmatpush1.msra.mxu0 0.0
      %2585 = vmatprep.subr.mxu0 0.0
      %2586 = vmatpush1.msra.mxu0 0.0
      %2587 = vmatprep.subr.mxu0 0.0
      %2588 = vmatpush1.msra.mxu0 0.0
      %2589 = vmatprep.subr.mxu0 0.0
      %2590 = vmatpush1.msra.mxu0 0.0
      %2591 = vmatprep.subr.mxu0 0.0
      %2592 = vmatpush1.msra.mxu0 0.0
      %2593 = vmatprep.subr.mxu0 0.0
      %2594 = vmatpush1.msra.mxu0 0.0
      %2595 = vmatprep.subr.mxu0 0.0
      %2596 = vmatpush1.msra.mxu0 0.0
      %2597 = vmatprep.subr.mxu0 0.0
      %2598 = vmatpush1.msra.mxu0 0.0
      %2599 = vmatprep.subr.mxu0 0.0
      %2600 = vmatpush1.msra.mxu0 0.0
      %2601 = vmatprep.subr.mxu0 0.0
      %2602 = vmatpush1.msra.mxu0 0.0
      %2603 = vmatprep.subr.mxu0 0.0
      %2604 = vmatpush1.msra.mxu0 0.0
      %2605 = vmatprep.subr.mxu0 0.0
      %2606 = vmatpush1.msra.mxu0 0.0
      %2607 = vmatprep.subr.mxu0 0.0
      %2608 = vmatpush1.msra.mxu0 0.0
      %2609 = vmatprep.subr.mxu0 0.0
      %2610 = vmatpush1.msra.mxu0 0.0
      %2611 = vmatprep.subr.mxu0 0.0
      %2612 = vmatpush1.msra.mxu0 0.0
      %2613 = vmatprep.subr.mxu0 0.0
      %2614 = vmatpush1.msra.mxu0 0.0
      %2615 = vmatprep.subr.mxu0 0.0
      %2616 = vmatpush1.msra.mxu0 0.0
      %2617 = vmatprep.subr.mxu0 0.0
      %2618 = vmatpush1.msra.mxu0 0.0
      %2619 = vmatprep.subr.mxu0 0.0
      %2620 = vmatpush1.msra.mxu0 0.0
      %2621 = vmatprep.subr.mxu0 0.0
      %2622 = vmatpush1.msra.mxu0 0.0
      %2623 = vmatprep.subr.mxu0 0.0
      %2624 = vmatpush1.msra.mxu0 0.0
      %2625 = vmatprep.subr.mxu0 0.0
      %2626 = vmatpush1.msra.mxu0 0.0
      %2627 = vmatprep.subr.mxu0 0.0
      %2628 = vmatpush1.msra.mxu0 0.0
      %2629 = vmatprep.subr.mxu0 0.0
      %2630 = vmatpush1.msra.mxu0 0.0
      %2631 = vmatprep.subr.mxu0 0.0
      %2632 = vmatpush1.msra.mxu0 0.0
      %2633 = vmatprep.subr.mxu0 0.0
      %2634 = vmatpush1.msra.mxu0 0.0
      %2635 = vmatprep.subr.mxu0 0.0
      %2636 = vmatpush1.msra.mxu0 0.0
      %2637 = vmatprep.subr.mxu0 0.0
      %2638 = vmatpush1.msra.mxu0 0.0
      %2639 = vmatprep.subr.mxu0 0.0
      %2640 = vmatpush1.msra.mxu0 0.0
      %2641 = vmatprep.subr.mxu0 0.0
      %2642 = vmatpush1.msra.mxu0 0.0
      %2643 = vmatprep.subr.mxu0 0.0
      %2644 = vmatpush1.msra.mxu0 0.0
      %2645 = vmatprep.mubr.f32.mxu0 0.0
      %2646 = vmatmul.mubr.f32.gmra.mrb[0].mxu0 %v2579
      %v2647 = vpop.f32.mrb[0].mxu0
      %v2648 = vadd.f32 0.0, %v2647
      %v2649 = vpop.f32.mrb[0].mxu0
      %2650 = vdwg.mxu0
      %v2652 = vsel %vm714, %v2648, 0
      %2654 = vmatprep.subr.mxu0 0.0
      %2655 = vmatpush1.msra.mxu0 %v1876
      %2656 = vmatprep.subr.mxu0 0.0
      %2657 = vmatpush1.msra.mxu0 0.0
      %2658 = vmatprep.subr.mxu0 0.0
      %2659 = vmatpush1.msra.mxu0 0.0
      %2660 = vmatprep.subr.mxu0 0.0
      %2661 = vmatpush1.msra.mxu0 0.0
      %2662 = vmatprep.subr.mxu0 0.0
      %2663 = vmatpush1.msra.mxu0 0.0
      %2664 = vmatprep.subr.mxu0 0.0
      %2665 = vmatpush1.msra.mxu0 0.0
      %2666 = vmatprep.subr.mxu0 0.0
      %2667 = vmatpush1.msra.mxu0 0.0
      %2668 = vmatprep.subr.mxu0 0.0
      %2669 = vmatpush1.msra.mxu0 0.0
      %2670 = vmatprep.subr.mxu0 0.0
      %2671 = vmatpush1.msra.mxu0 0.0
      %2672 = vmatprep.subr.mxu0 0.0
      %2673 = vmatpush1.msra.mxu0 0.0
      %2674 = vmatprep.subr.mxu0 0.0
      %2675 = vmatpush1.msra.mxu0 0.0
      %2676 = vmatprep.subr.mxu0 0.0
      %2677 = vmatpush1.msra.mxu0 0.0
      %2678 = vmatprep.subr.mxu0 0.0
      %2679 = vmatpush1.msra.mxu0 0.0
      %2680 = vmatprep.subr.mxu0 0.0
      %2681 = vmatpush1.msra.mxu0 0.0
      %2682 = vmatprep.subr.mxu0 0.0
      %2683 = vmatpush1.msra.mxu0 0.0
      %2684 = vmatprep.subr.mxu0 0.0
      %2685 = vmatpush1.msra.mxu0 0.0
      %2686 = vmatprep.subr.mxu0 0.0
      %2687 = vmatpush1.msra.mxu0 0.0
      %2688 = vmatprep.subr.mxu0 0.0
      %2689 = vmatpush1.msra.mxu0 0.0
      %2690 = vmatprep.subr.mxu0 0.0
      %2691 = vmatpush1.msra.mxu0 0.0
      %2692 = vmatprep.subr.mxu0 0.0
      %2693 = vmatpush1.msra.mxu0 0.0
      %2694 = vmatprep.subr.mxu0 0.0
      %2695 = vmatpush1.msra.mxu0 0.0
      %2696 = vmatprep.subr.mxu0 0.0
      %2697 = vmatpush1.msra.mxu0 0.0
      %2698 = vmatprep.subr.mxu0 0.0
      %2699 = vmatpush1.msra.mxu0 0.0
      %2700 = vmatprep.subr.mxu0 0.0
      %2701 = vmatpush1.msra.mxu0 0.0
      %2702 = vmatprep.subr.mxu0 0.0
      %2703 = vmatpush1.msra.mxu0 0.0
      %2704 = vmatprep.subr.mxu0 0.0
      %2705 = vmatpush1.msra.mxu0 0.0
      %2706 = vmatprep.subr.mxu0 0.0
      %2707 = vmatpush1.msra.mxu0 0.0
      %2708 = vmatprep.subr.mxu0 0.0
      %2709 = vmatpush1.msra.mxu0 0.0
      %2710 = vmatprep.subr.mxu0 0.0
      %2711 = vmatpush1.msra.mxu0 0.0
      %2712 = vmatprep.subr.mxu0 0.0
      %2713 = vmatpush1.msra.mxu0 0.0
      %2714 = vmatprep.subr.mxu0 0.0
      %2715 = vmatpush1.msra.mxu0 0.0
      %2716 = vmatprep.subr.mxu0 0.0
      %2717 = vmatpush1.msra.mxu0 0.0
      %2718 = vmatprep.mubr.f32.mxu0 0.0
      %2719 = vmatmul.mubr.f32.gmra.mrb[0].mxu0 %v2652
      %v2720 = vpop.f32.mrb[0].mxu0
      %v2721 = vadd.f32 0.0, %v2720
      %v2722 = vpop.f32.mrb[0].mxu0
      %2723 = vdwg.mxu0
      %v2724 = vadd.f32 %v2481, %v2721
      %2725 = vrot.lane.b32.xlu0 %v2002, 104
      %v2726 = vpop.permute.xlu0 %2725
      %2727 = vrot.lane.b32.xlu0 %v2002, 72
      %v2728 = vpop.permute.xlu0 %2727
      %v2729 = vsel %vm714, %v2726, 0
      %v2731 = vsel %vm714, %v2728, 0
      %2733 = vmatprep.subr.mxu0 0.0
      %2734 = vmatpush1.xpose.msra.mxu0 %v2731
      %2735 = vmatprep.subr.mxu0 0.0
      %2736 = vmatpush1.xpose.msra.mxu0 0.0
      %2737 = vmatprep.subr.mxu0 0.0
      %2738 = vmatpush1.xpose.msra.mxu0 0.0
      %2739 = vmatprep.subr.mxu0 0.0
      %2740 = vmatpush1.xpose.msra.mxu0 0.0
      %2741 = vmatprep.subr.mxu0 0.0
      %2742 = vmatpush1.xpose.msra.mxu0 0.0
      %2743 = vmatprep.subr.mxu0 0.0
      %2744 = vmatpush1.xpose.msra.mxu0 0.0
      %2745 = vmatprep.subr.mxu0 0.0
      %2746 = vmatpush1.xpose.msra.mxu0 0.0
      %2747 = vmatprep.subr.mxu0 0.0
      %2748 = vmatpush1.xpose.msra.mxu0 0.0
      %2749 = vmatprep.subr.mxu0 0.0
      %2750 = vmatpush1.xpose.msra.mxu0 0.0
      %2751 = vmatprep.subr.mxu0 0.0
      %2752 = vmatpush1.xpose.msra.mxu0 0.0
      %2753 = vmatprep.subr.mxu0 0.0
      %2754 = vmatpush1.xpose.msra.mxu0 0.0
      %2755 = vmatprep.subr.mxu0 0.0
      %2756 = vmatpush1.xpose.msra.mxu0 0.0
      %2757 = vmatprep.subr.mxu0 0.0
      %2758 = vmatpush1.xpose.msra.mxu0 0.0
      %2759 = vmatprep.subr.mxu0 0.0
      %2760 = vmatpush1.xpose.msra.mxu0 0.0
      %2761 = vmatprep.subr.mxu0 0.0
      %2762 = vmatpush1.xpose.msra.mxu0 0.0
      %2763 = vmatprep.subr.mxu0 0.0
      %2764 = vmatpush1.xpose.msra.mxu0 0.0
      %2765 = vmatprep.subr.mxu0 0.0
      %2766 = vmatpush1.xpose.msra.mxu0 0.0
      %2767 = vmatprep.subr.mxu0 0.0
      %2768 = vmatpush1.xpose.msra.mxu0 0.0
      %2769 = vmatprep.subr.mxu0 0.0
      %2770 = vmatpush1.xpose.msra.mxu0 0.0
      %2771 = vmatprep.subr.mxu0 0.0
      %2772 = vmatpush1.xpose.msra.mxu0 0.0
      %2773 = vmatprep.subr.mxu0 0.0
      %2774 = vmatpush1.xpose.msra.mxu0 0.0
      %2775 = vmatprep.subr.mxu0 0.0
      %2776 = vmatpush1.xpose.msra.mxu0 0.0
      %2777 = vmatprep.subr.mxu0 0.0
      %2778 = vmatpush1.xpose.msra.mxu0 0.0
      %2779 = vmatprep.subr.mxu0 0.0
      %2780 = vmatpush1.xpose.msra.mxu0 0.0
      %2781 = vmatprep.subr.mxu0 0.0
      %2782 = vmatpush1.xpose.msra.mxu0 0.0
      %2783 = vmatprep.subr.mxu0 0.0
      %2784 = vmatpush1.xpose.msra.mxu0 0.0
      %2785 = vmatprep.subr.mxu0 0.0
      %2786 = vmatpush1.xpose.msra.mxu0 0.0
      %2787 = vmatprep.subr.mxu0 0.0
      %2788 = vmatpush1.xpose.msra.mxu0 0.0
      %2789 = vmatprep.subr.mxu0 0.0
      %2790 = vmatpush1.xpose.msra.mxu0 0.0
      %2791 = vmatprep.subr.mxu0 0.0
      %2792 = vmatpush1.xpose.msra.mxu0 0.0
      %2793 = vmatprep.subr.mxu0 0.0
      %2794 = vmatpush1.xpose.msra.mxu0 0.0
      %2795 = vmatprep.subr.mxu0 0.0
      %2796 = vmatpush1.xpose.msra.mxu0 0.0
      %2797 = vmatprep.mubr.f32.mxu0 0.0
      %2798 = vmatmul.mubr.f32.gmra.mrb[0].mxu0 %v2729
      %v2799 = vpop.f32.mrb[0].mxu0
      %v2800 = vadd.f32 0.0, %v2799
      %v2801 = vpop.f32.mrb[0].mxu0
      %2802 = vdwg.mxu0
      %v2803 = vmul.f32 %v2800, 0.35355338
      %v2804 = vadd.f32 %v2803, %v794
      %v2805 = vsel %vm714, %v2804, -inf
      %2806 = vmax.xlane.f32.xlu0 %v2805
      %v2807 = vpop.xlane.xlu0 %2806
      %v2808 = vsub.f32 %v2804, %v2807
      %v2809 = vmul.f32 %v2808, 1.442695
      %v2810 = vpow.pop %v2809
      %v2811 = vsel %vm714, %v2810, 0.0
      %2812 = vadd.xlane.f32.xlu0 %v2811
      %v2813 = vpop.xlane.xlu0 %2812
      %v2814 = vrcp.pop %v2813
      %v2815 = vmul.f32 %v2810, %v2814
      %2816 = vrot.lane.b32.xlu0 %v2002, 40
      %v2817 = vpop.permute.xlu0 %2816
      %v2820 = vsel %vm714, %v2815, 0
      %2822 = vmatprep.subr.mxu0 0.0
      %2823 = vmatpush1.msra.mxu0 %v2817
      %2824 = vmatprep.subr.mxu0 0.0
      %2825 = vmatpush1.msra.mxu0 0.0
      %2826 = vmatprep.subr.mxu0 0.0
      %2827 = vmatpush1.msra.mxu0 0.0
      %2828 = vmatprep.subr.mxu0 0.0
      %2829 = vmatpush1.msra.mxu0 0.0
      %2830 = vmatprep.subr.mxu0 0.0
      %2831 = vmatpush1.msra.mxu0 0.0
      %2832 = vmatprep.subr.mxu0 0.0
      %2833 = vmatpush1.msra.mxu0 0.0
      %2834 = vmatprep.subr.mxu0 0.0
      %2835 = vmatpush1.msra.mxu0 0.0
      %2836 = vmatprep.subr.mxu0 0.0
      %2837 = vmatpush1.msra.mxu0 0.0
      %2838 = vmatprep.subr.mxu0 0.0
      %2839 = vmatpush1.msra.mxu0 0.0
      %2840 = vmatprep.subr.mxu0 0.0
      %2841 = vmatpush1.msra.mxu0 0.0
      %2842 = vmatprep.subr.mxu0 0.0
      %2843 = vmatpush1.msra.mxu0 0.0
      %2844 = vmatprep.subr.mxu0 0.0
      %2845 = vmatpush1.msra.mxu0 0.0
      %2846 = vmatprep.subr.mxu0 0.0
      %2847 = vmatpush1.msra.mxu0 0.0
      %2848 = vmatprep.subr.mxu0 0.0
      %2849 = vmatpush1.msra.mxu0 0.0
      %2850 = vmatprep.subr.mxu0 0.0
      %2851 = vmatpush1.msra.mxu0 0.0
      %2852 = vmatprep.subr.mxu0 0.0
      %2853 = vmatpush1.msra.mxu0 0.0
      %2854 = vmatprep.subr.mxu0 0.0
      %2855 = vmatpush1.msra.mxu0 0.0
      %2856 = vmatprep.subr.mxu0 0.0
      %2857 = vmatpush1.msra.mxu0 0.0
      %2858 = vmatprep.subr.mxu0 0.0
      %2859 = vmatpush1.msra.mxu0 0.0
      %2860 = vmatprep.subr.mxu0 0.0
      %2861 = vmatpush1.msra.mxu0 0.0
      %2862 = vmatprep.subr.mxu0 0.0
      %2863 = vmatpush1.msra.mxu0 0.0
      %2864 = vmatprep.subr.mxu0 0.0
      %2865 = vmatpush1.msra.mxu0 0.0
      %2866 = vmatprep.subr.mxu0 0.0
      %2867 = vmatpush1.msra.mxu0 0.0
      %2868 = vmatprep.subr.mxu0 0.0
      %2869 = vmatpush1.msra.mxu0 0.0
      %2870 = vmatprep.subr.mxu0 0.0
      %2871 = vmatpush1.msra.mxu0 0.0
      %2872 = vmatprep.subr.mxu0 0.0
      %2873 = vmatpush1.msra.mxu0 0.0
      %2874 = vmatprep.subr.mxu0 0.0
      %2875 = vmatpush1.msra.mxu0 0.0
      %2876 = vmatprep.subr.mxu0 0.0
      %2877 = vmatpush1.msra.mxu0 0.0
      %2878 = vmatprep.subr.mxu0 0.0
      %2879 = vmatpush1.msra.mxu0 0.0
      %2880 = vmatprep.subr.mxu0 0.0
      %2881 = vmatpush1.msra.mxu0 0.0
      %2882 = vmatprep.subr.mxu0 0.0
      %2883 = vmatpush1.msra.mxu0 0.0
      %2884 = vmatprep.subr.mxu0 0.0
      %2885 = vmatpush1.msra.mxu0 0.0
      %2886 = vmatprep.mubr.f32.mxu0 0.0
      %2887 = vmatmul.mubr.f32.gmra.mrb[0].mxu0 %v2820
      %v2888 = vpop.f32.mrb[0].mxu0
      %v2889 = vadd.f32 0.0, %v2888
      %v2890 = vpop.f32.mrb[0].mxu0
      %2891 = vdwg.mxu0
      %v2893 = vsel %vm714, %v2889, 0
      %2895 = vmatprep.subr.mxu0 0.0
      %2896 = vmatpush1.msra.mxu0 %v1877
      %2897 = vmatprep.subr.mxu0 0.0
      %2898 = vmatpush1.msra.mxu0 0.0
      %2899 = vmatprep.subr.mxu0 0.0
      %2900 = vmatpush1.msra.mxu0 0.0
      %2901 = vmatprep.subr.mxu0 0.0
      %2902 = vmatpush1.msra.mxu0 0.0
      %2903 = vmatprep.subr.mxu0 0.0
      %2904 = vmatpush1.msra.mxu0 0.0
      %2905 = vmatprep.subr.mxu0 0.0
      %2906 = vmatpush1.msra.mxu0 0.0
      %2907 = vmatprep.subr.mxu0 0.0
      %2908 = vmatpush1.msra.mxu0 0.0
      %2909 = vmatprep.subr.mxu0 0.0
      %2910 = vmatpush1.msra.mxu0 0.0
      %2911 = vmatprep.subr.mxu0 0.0
      %2912 = vmatpush1.msra.mxu0 0.0
      %2913 = vmatprep.subr.mxu0 0.0
      %2914 = vmatpush1.msra.mxu0 0.0
      %2915 = vmatprep.subr.mxu0 0.0
      %2916 = vmatpush1.msra.mxu0 0.0
      %2917 = vmatprep.subr.mxu0 0.0
      %2918 = vmatpush1.msra.mxu0 0.0
      %2919 = vmatprep.subr.mxu0 0.0
      %2920 = vmatpush1.msra.mxu0 0.0
      %2921 = vmatprep.subr.mxu0 0.0
      %2922 = vmatpush1.msra.mxu0 0.0
      %2923 = vmatprep.subr.mxu0 0.0
      %2924 = vmatpush1.msra.mxu0 0.0
      %2925 = vmatprep.subr.mxu0 0.0
      %2926 = vmatpush1.msra.mxu0 0.0
      %2927 = vmatprep.subr.mxu0 0.0
      %2928 = vmatpush1.msra.mxu0 0.0
      %2929 = vmatprep.subr.mxu0 0.0
      %2930 = vmatpush1.msra.mxu0 0.0
      %2931 = vmatprep.subr.mxu0 0.0
      %2932 = vmatpush1.msra.mxu0 0.0
      %2933 = vmatprep.subr.mxu0 0.0
      %2934 = vmatpush1.msra.mxu0 0.0
      %2935 = vmatprep.subr.mxu0 0.0
      %2936 = vmatpush1.msra.mxu0 0.0
      %2937 = vmatprep.subr.mxu0 0.0
      %2938 = vmatpush1.msra.mxu0 0.0
      %2939 = vmatprep.subr.mxu0 0.0
      %2940 = vmatpush1.msra.mxu0 0.0
      %2941 = vmatprep.subr.mxu0 0.0
      %2942 = vmatpush1.msra.mxu0 0.0
      %2943 = vmatprep.subr.mxu0 0.0
      %2944 = vmatpush1.msra.mxu0 0.0
      %2945 = vmatprep.subr.mxu0 0.0
      %2946 = vmatpush1.msra.mxu0 0.0
      %2947 = vmatprep.subr.mxu0 0.0
      %2948 = vmatpush1.msra.mxu0 0.0
      %2949 = vmatprep.subr.mxu0 0.0
      %2950 = vmatpush1.msra.mxu0 0.0
      %2951 = vmatprep.subr.mxu0 0.0
      %2952 = vmatpush1.msra.mxu0 0.0
      %2953 = vmatprep.subr.mxu0 0.0
      %2954 = vmatpush1.msra.mxu0 0.0
      %2955 = vmatprep.subr.mxu0 0.0
      %2956 = vmatpush1.msra.mxu0 0.0
      %2957 = vmatprep.subr.mxu0 0.0
      %2958 = vmatpush1.msra.mxu0 0.0
      %2959 = vmatprep.mubr.f32.mxu0 0.0
      %2960 = vmatmul.mubr.f32.gmra.mrb[0].mxu0 %v2893
      %v2961 = vpop.f32.mrb[0].mxu0
      %v2962 = vadd.f32 0.0, %v2961
      %v2963 = vpop.f32.mrb[0].mxu0
      %2964 = vdwg.mxu0
      %v2965 = vadd.f32 %v2724, %v2962
      %v2966 = vadd.f32 %v1864, %v2965
      %v2967 = vlaneseq
      %v2968 = vshrl.u32 %v2967, 7
      %v2969 = vsub.s32 0, %v2968
      %v2970 = vrot.slane %v1878, %v2969
      %v2971 = vadd.f32 %v2966, %v2970
      %v2972 = vsel %vm609, %v2971, 0.0
      %2973 = vadd.xlane.f32.xlu0 %v2972
      %v2974 = vpop.xlane.xlu0 %2973
      %v2975 = vmul.f32 %v2974, %v613
      %v2976 = vsub.f32 %v2971, %v2975
      %v2977 = vmul.f32 %v2976, %v2976
      %v2978 = vsel %vm609, %v2977, 0.0
      %2979 = vadd.xlane.f32.xlu0 %v2978
      %v2980 = vpop.xlane.xlu0 %2979
      %v2981 = vmul.f32 %v2980, %v613
      %v2982 = vadd.f32 %v2981, 1e-12
      %v2983 = vrsqrt.pop %v2982
      %v2984 = vmul.f32 %v2976, %v2983
      %v2985 = vlaneseq
      %v2986 = vshrl.u32 %v2985, 7
      %v2987 = vsub.s32 0, %v2986
      %v2988 = vrot.slane %v1879, %v2987
      %v2989 = vmul.f32 %v2984, %v2988
      %v2990 = vlaneseq
      %v2991 = vshrl.u32 %v2990, 7
      %v2992 = vsub.s32 0, %v2991
      %v2993 = vrot.slane %v1880, %v2992
      %v2994 = vadd.f32 %v2989, %v2993
      %v2995 = vlaneseq
      %v2996 = vshrl.u32 %v2995, 7
      %v2997 = vsub.s32 0, %v2996
      %v2998 = vrot.slane %v1886, %v2997
      %v3000 = vsel %vm609, %v2994, 0
      %3002 = vmatprep.subr.mxu0 0.0
      %3003 = vmatpush1.msra.mxu0 %v1882
      %3004 = vmatprep.subr.mxu0 0.0
      %3005 = vmatpush1.msra.mxu0 %v1883
      %3006 = vmatprep.subr.mxu0 0.0
      %3007 = vmatpush1.msra.mxu0 %v1884
      %3008 = vmatprep.subr.mxu0 0.0
      %3009 = vmatpush1.msra.mxu0 %v1885
      %3010 = vmatprep.subr.mxu0 0.0
      %3011 = vmatpush1.msra.mxu0 0.0
      %3012 = vmatprep.subr.mxu0 0.0
      %3013 = vmatpush1.msra.mxu0 0.0
      %3014 = vmatprep.subr.mxu0 0.0
      %3015 = vmatpush1.msra.mxu0 0.0
      %3016 = vmatprep.subr.mxu0 0.0
      %3017 = vmatpush1.msra.mxu0 0.0
      %3018 = vmatprep.subr.mxu0 0.0
      %3019 = vmatpush1.msra.mxu0 0.0
      %3020 = vmatprep.subr.mxu0 0.0
      %3021 = vmatpush1.msra.mxu0 0.0
      %3022 = vmatprep.subr.mxu0 0.0
      %3023 = vmatpush1.msra.mxu0 0.0
      %3024 = vmatprep.subr.mxu0 0.0
      %3025 = vmatpush1.msra.mxu0 0.0
      %3026 = vmatprep.subr.mxu0 0.0
      %3027 = vmatpush1.msra.mxu0 0.0
      %3028 = vmatprep.subr.mxu0 0.0
      %3029 = vmatpush1.msra.mxu0 0.0
      %3030 = vmatprep.subr.mxu0 0.0
      %3031 = vmatpush1.msra.mxu0 0.0
      %3032 = vmatprep.subr.mxu0 0.0
      %3033 = vmatpush1.msra.mxu0 0.0
      %3034 = vmatprep.subr.mxu0 0.0
      %3035 = vmatpush1.msra.mxu0 0.0
      %3036 = vmatprep.subr.mxu0 0.0
      %3037 = vmatpush1.msra.mxu0 0.0
      %3038 = vmatprep.subr.mxu0 0.0
      %3039 = vmatpush1.msra.mxu0 0.0
      %3040 = vmatprep.subr.mxu0 0.0
      %3041 = vmatpush1.msra.mxu0 0.0
      %3042 = vmatprep.subr.mxu0 0.0
      %3043 = vmatpush1.msra.mxu0 0.0
      %3044 = vmatprep.subr.mxu0 0.0
      %3045 = vmatpush1.msra.mxu0 0.0
      %3046 = vmatprep.subr.mxu0 0.0
      %3047 = vmatpush1.msra.mxu0 0.0
      %3048 = vmatprep.subr.mxu0 0.0
      %3049 = vmatpush1.msra.mxu0 0.0
      %3050 = vmatprep.subr.mxu0 0.0
      %3051 = vmatpush1.msra.mxu0 0.0
      %3052 = vmatprep.subr.mxu0 0.0
      %3053 = vmatpush1.msra.mxu0 0.0
      %3054 = vmatprep.subr.mxu0 0.0
      %3055 = vmatpush1.msra.mxu0 0.0
      %3056 = vmatprep.subr.mxu0 0.0
      %3057 = vmatpush1.msra.mxu0 0.0
      %3058 = vmatprep.subr.mxu0 0.0
      %3059 = vmatpush1.msra.mxu0 0.0
      %3060 = vmatprep.subr.mxu0 0.0
      %3061 = vmatpush1.msra.mxu0 0.0
      %3062 = vmatprep.subr.mxu0 0.0
      %3063 = vmatpush1.msra.mxu0 0.0
      %3064 = vmatprep.subr.mxu0 0.0
      %3065 = vmatpush1.msra.mxu0 0.0
      %3066 = vmatprep.mubr.f32.mxu0 0.0
      %3067 = vmatmul.mubr.f32.gmra.mrb[0].mxu0 %v3000
      %v3068 = vpop.f32.mrb[0].mxu0
      %v3069 = vadd.f32 %v2998, %v3068
      %v3070 = vpop.f32.mrb[0].mxu0
      %3071 = vdwg.mxu0
      %v3072 = vmul.f32 %v3069, 0.5
      %v3073 = vmul.f32 %v3069, 0.70710677
      %v3074 = verf.f32.pop %v3073
      %v3075 = vadd.f32 %v3074, 1.0
      %v3076 = vmul.f32 %v3072, %v3075
      %v3077 = vlaneseq
      %v3078 = vshrl.u32 %v3077, 7
      %v3079 = vsub.s32 0, %v3078
      %v3080 = vrot.slane %v1904, %v3079
      %3081 = vmatprep.subr.mxu0 0.0
      %3082 = vmatpush1.msra.mxu0 %v1888
      %3083 = vmatprep.subr.mxu0 0.0
      %3084 = vmatpush1.msra.mxu0 %v1889
      %3085 = vmatprep.subr.mxu0 0.0
      %3086 = vmatpush1.msra.mxu0 %v1890
      %3087 = vmatprep.subr.mxu0 0.0
      %3088 = vmatpush1.msra.mxu0 %v1891
      %3089 = vmatprep.subr.mxu0 0.0
      %3090 = vmatpush1.msra.mxu0 %v1892
      %3091 = vmatprep.subr.mxu0 0.0
      %3092 = vmatpush1.msra.mxu0 %v1893
      %3093 = vmatprep.subr.mxu0 0.0
      %3094 = vmatpush1.msra.mxu0 %v1894
      %3095 = vmatprep.subr.mxu0 0.0
      %3096 = vmatpush1.msra.mxu0 %v1895
      %3097 = vmatprep.subr.mxu0 0.0
      %3098 = vmatpush1.msra.mxu0 %v1896
      %3099 = vmatprep.subr.mxu0 0.0
      %3100 = vmatpush1.msra.mxu0 %v1897
      %3101 = vmatprep.subr.mxu0 0.0
      %3102 = vmatpush1.msra.mxu0 %v1898
      %3103 = vmatprep.subr.mxu0 0.0
      %3104 = vmatpush1.msra.mxu0 %v1899
      %3105 = vmatprep.subr.mxu0 0.0
      %3106 = vmatpush1.msra.mxu0 %v1900
      %3107 = vmatprep.subr.mxu0 0.0
      %3108 = vmatpush1.msra.mxu0 %v1901
      %3109 = vmatprep.subr.mxu0 0.0
      %3110 = vmatpush1.msra.mxu0 %v1902
      %3111 = vmatprep.subr.mxu0 0.0
      %3112 = vmatpush1.msra.mxu0 %v1903
      %3113 = vmatprep.subr.mxu0 0.0
      %3114 = vmatpush1.msra.mxu0 0.0
      %3115 = vmatprep.subr.mxu0 0.0
      %3116 = vmatpush1.msra.mxu0 0.0
      %3117 = vmatprep.subr.mxu0 0.0
      %3118 = vmatpush1.msra.mxu0 0.0
      %3119 = vmatprep.subr.mxu0 0.0
      %3120 = vmatpush1.msra.mxu0 0.0
      %3121 = vmatprep.subr.mxu0 0.0
      %3122 = vmatpush1.msra.mxu0 0.0
      %3123 = vmatprep.subr.mxu0 0.0
      %3124 = vmatpush1.msra.mxu0 0.0
      %3125 = vmatprep.subr.mxu0 0.0
      %3126 = vmatpush1.msra.mxu0 0.0
      %3127 = vmatprep.subr.mxu0 0.0
      %3128 = vmatpush1.msra.mxu0 0.0
      %3129 = vmatprep.subr.mxu0 0.0
      %3130 = vmatpush1.msra.mxu0 0.0
      %3131 = vmatprep.subr.mxu0 0.0
      %3132 = vmatpush1.msra.mxu0 0.0
      %3133 = vmatprep.subr.mxu0 0.0
      %3134 = vmatpush1.msra.mxu0 0.0
      %3135 = vmatprep.subr.mxu0 0.0
      %3136 = vmatpush1.msra.mxu0 0.0
      %3137 = vmatprep.subr.mxu0 0.0
      %3138 = vmatpush1.msra.mxu0 0.0
      %3139 = vmatprep.subr.mxu0 0.0
      %3140 = vmatpush1.msra.mxu0 0.0
      %3141 = vmatprep.subr.mxu0 0.0
      %3142 = vmatpush1.msra.mxu0 0.0
      %3143 = vmatprep.subr.mxu0 0.0
      %3144 = vmatpush1.msra.mxu0 0.0
      %3145 = vmatprep.mubr.f32.mxu0 0.0
      %3146 = vmatmul.mubr.f32.gmra.mrb[0].mxu0 %v3076
      %v3147 = vpop.f32.mrb[0].mxu0
      %v3148 = vadd.f32 %v3080, %v3147
      %v3149 = vpop.f32.mrb[0].mxu0
      %3150 = vdwg.mxu0
      %v3151 = vadd.f32 %v2971, %v3148
      %v3152 = vld [vmem:[%s14] sm:$0x1]
      %v3153 = vld [vmem:[%s15] sm:$0x1]
      %vm3154 = vcmask 253952
      %v3155 = vsel %vm3154, %v3151, 0.0
      %3156 = vadd.xlane.f32.xlu0 %v3155
      %v3157 = vpop.xlane.xlu0 %3156
      %v3158 = vmul.f32 %v3157, %v613
      %v3159 = vsub.f32 %v3151, %v3158
      %v3160 = vmul.f32 %v3159, %v3159
      %v3161 = vsel %vm3154, %v3160, 0.0
      %3162 = vadd.xlane.f32.xlu0 %v3161
      %v3163 = vpop.xlane.xlu0 %3162
      %v3164 = vmul.f32 %v3163, %v613
      %v3165 = vadd.f32 %v3164, 1e-12
      %v3166 = vrsqrt.pop %v3165
      %v3167 = vmul.f32 %v3159, %v3166
      %v3168 = vmul.f32 %v3167, %v3152
      %v3169 = vadd.f32 %v3168, %v3153
      %v3170 = vld [vmem:[%s16] sm:$0xff]
      %v3171 = vld [vmem:[%s16 + $0x8] sm:$0xff]
      %v3172 = vld [vmem:[%s16 + $0x10] sm:$0xff]
      %v3173 = vld [vmem:[%s16 + $0x18] sm:$0xff]
      %v3174 = vld [vmem:[%s17] sm:$0x1]
      %v3176 = vsel %vm609, %v3169, 0
      %3178 = vmatprep.subr.mxu0 0.0
      %3179 = vmatpush1.msra.mxu0 %v3170
      %3180 = vmatprep.subr.mxu0 0.0
      %3181 = vmatpush1.msra.mxu0 %v3171
      %3182 = vmatprep.subr.mxu0 0.0
      %3183 = vmatpush1.msra.mxu0 %v3172
      %3184 = vmatprep.subr.mxu0 0.0
      %3185 = vmatpush1.msra.mxu0 %v3173
      %3186 = vmatprep.subr.mxu0 0.0
      %3187 = vmatpush1.msra.mxu0 0.0
      %3188 = vmatprep.subr.mxu0 0.0
      %3189 = vmatpush1.msra.mxu0 0.0
      %3190 = vmatprep.subr.mxu0 0.0
      %3191 = vmatpush1.msra.mxu0 0.0
      %3192 = vmatprep.subr.mxu0 0.0
      %3193 = vmatpush1.msra.mxu0 0.0
      %3194 = vmatprep.subr.mxu0 0.0
      %3195 = vmatpush1.msra.mxu0 0.0
      %3196 = vmatprep.subr.mxu0 0.0
      %3197 = vmatpush1.msra.mxu0 0.0
      %3198 = vmatprep.subr.mxu0 0.0
      %3199 = vmatpush1.msra.mxu0 0.0
      %3200 = vmatprep.subr.mxu0 0.0
      %3201 = vmatpush1.msra.mxu0 0.0
      %3202 = vmatprep.subr.mxu0 0.0
      %3203 = vmatpush1.msra.mxu0 0.0
      %3204 = vmatprep.subr.mxu0 0.0
      %3205 = vmatpush1.msra.mxu0 0.0
      %3206 = vmatprep.subr.mxu0 0.0
      %3207 = vmatpush1.msra.mxu0 0.0
      %3208 = vmatprep.subr.mxu0 0.0
      %3209 = vmatpush1.msra.mxu0 0.0
      %3210 = vmatprep.subr.mxu0 0.0
      %3211 = vmatpush1.msra.mxu0 0.0
      %3212 = vmatprep.subr.mxu0 0.0
      %3213 = vmatpush1.msra.mxu0 0.0
      %3214 = vmatprep.subr.mxu0 0.0
      %3215 = vmatpush1.msra.mxu0 0.0
      %3216 = vmatprep.subr.mxu0 0.0
      %3217 = vmatpush1.msra.mxu0 0.0
      %3218 = vmatprep.subr.mxu0 0.0
      %3219 = vmatpush1.msra.mxu0 0.0
      %3220 = vmatprep.subr.mxu0 0.0
      %3221 = vmatpush1.msra.mxu0 0.0
      %3222 = vmatprep.subr.mxu0 0.0
      %3223 = vmatpush1.msra.mxu0 0.0
      %3224 = vmatprep.subr.mxu0 0.0
      %3225 = vmatpush1.msra.mxu0 0.0
      %3226 = vmatprep.subr.mxu0 0.0
      %3227 = vmatpush1.msra.mxu0 0.0
      %3228 = vmatprep.subr.mxu0 0.0
      %3229 = vmatpush1.msra.mxu0 0.0
      %3230 = vmatprep.subr.mxu0 0.0
      %3231 = vmatpush1.msra.mxu0 0.0
      %3232 = vmatprep.subr.mxu0 0.0
      %3233 = vmatpush1.msra.mxu0 0.0
      %3234 = vmatprep.subr.mxu0 0.0
      %3235 = vmatpush1.msra.mxu0 0.0
      %3236 = vmatprep.subr.mxu0 0.0
      %3237 = vmatpush1.msra.mxu0 0.0
      %3238 = vmatprep.subr.mxu0 0.0
      %3239 = vmatpush1.msra.mxu0 0.0
      %3240 = vmatprep.subr.mxu0 0.0
      %3241 = vmatpush1.msra.mxu0 0.0
      %3242 = vmatprep.mubr.f32.mxu0 0.0
      %3243 = vmatmul.mubr.f32.gmra.mrb[0].mxu0 %v3176
      %v3244 = vpop.f32.mrb[0].mxu0
      %v3245 = vadd.f32 %v3174, %v3244
      %v3246 = vpop.f32.mrb[0].mxu0
      %3247 = vdwg.mxu0
      %v3248 = vlaneseq
      %v3249 = vshrl.u32 %v3248, 7
      %v3250 = vsub.s32 0, %v3249
      %v3251 = vrot.slane %v3245, %v3250
      %3252 = vst [vmem:[%s570] sm:$0xff] %v3251
      %p3253 = scmp.lt.s32.totalorder %s29, 1
      %s3254 = scalar_select %p3253, %s29, 1
      %s3255 = smul.addr %s3254, 8
      %s3256 = scalar_lea.vmem %s18, %s3255
      // Predicated region
      $region93: #{transformer_forward.1} parent=91 // pred_check
        %p3257 = pneg %p430
      $region94: #{transformer_forward.1} parent=91 // pred_check_branch
        %3259 = sbr.rel (%p3257) target = $region96
      $region95: #{transformer_forward.1} parent=91 // pred_region
        _
      $region96: #{transformer_forward.1} parent=91 // pred_fallthru
        _
    $region92: #{transformer_forward.1} parent=5 // pred_fallthru
      _
    %p3260 = scmp.le.s32.totalorder 2, %s24
    // Predicated region
    $region97: #{transformer_forward.1} parent=5 // pred_check
      %p3261 = pneg %p3260
    $region98: #{transformer_forward.1} parent=5 // pred_check_branch
      %3263 = sbr.rel (%p3261) target = $region100
    $region99: #{transformer_forward.1} parent=5 // pred_region
      %s3264 = ssub.s32 %s24, 2
      // Predicated region
      $region101: #{transformer_forward.1} parent=99 // pred_check
        %p3265 = pneg %p436
      $region102: #{transformer_forward.1} parent=99 // pred_check_branch
        %3267 = sbr.rel (%p3265) target = $region104
      $region103: #{transformer_forward.1} parent=99 // pred_region
        %p3268 = scmp.lt.s32.totalorder %s30, 1
        %s3269 = scalar_select %p3268, %s30, 1
        %s3270 = smul.addr %s3269, 8
        %s3271 = scalar_lea.vmem %s18, %s3270
      $region104: #{transformer_forward.1} parent=99 // pred_fallthru
        _
    $region100: #{transformer_forward.1} parent=5 // pred_fallthru
      _
  $region6: #{transformer_forward.1} parent=0 // loop_footer
    %s28 = sadd.s32 1, %s24
  $region7: #{transformer_forward.1} parent=0 // loop_footer_branch
    %23 = sbr.rel target = $region3
  $region8: #{transformer_forward.1} parent=0 // loop_exit
    _

</llo_original>
